<compile_context>
chip_gen: v7x
topology: tpu7x:2x2x1
jax: 0.10.0
libtpu: 0.0.40
codegen_flags: <defaults>
</compile_context>

<pallas_src>
import math

import jax
import jax.numpy as jnp
from jax import lax
from jax.experimental import pallas as pl
from jax.experimental.pallas import tpu as pltpu


# ------------------------------ in-kernel ops -------------------------------

def _layernorm(x, g, b, eps=1e-5):
    mean = jnp.mean(x, axis=-1, keepdims=True)
    var = jnp.mean((x - mean) ** 2, axis=-1, keepdims=True)
    return (x - mean) * lax.rsqrt(var + eps) * g + b


def make_fused_forward_kernel(N, B, S, D, H, F, V, L):
    """Whole-model kernel over all N = B*S rows in one invocation."""
    Dh = D // H
    bf16 = jnp.bfloat16

    def kernel(ids_ref, emb_ref,
               qkv_w_ref, out_w_ref, ff1_w_ref, ff2_w_ref,
               lvec_ref, head_w_ref, fvec_ref,
               o_ref):
        # ---- embedding lookup as one-hot @ table (MXU, stays in VMEM) ----
        ids = ids_ref[...]                                       # (N, 1) int32
        lane = lax.broadcasted_iota(jnp.int32, (N, V), 1)        # (N, V)
        onehot = jnp.where(lane == ids, 1.0, 0.0).astype(bf16)
        x = jnp.dot(onehot, emb_ref[...],
                    preferred_element_type=jnp.float32)          # (N, D) f32

        # ---- transformer encoder layers (post-LN, ReLU FFN) ----
        for l in range(L):
            lv = lvec_ref[l]                                     # (8, 128) f32
            qkv_b = lv[0:1, :3 * D]
            out_b = lv[1:2, :D]
            ln1_g = lv[2:3, :D]
            ln1_b = lv[3:4, :D]
            ff1_b = lv[4:5, :F]
            ff2_b = lv[5:6, :D]
            ln2_g = lv[6:7, :D]
            ln2_b = lv[7:8, :D]

            # fused QKV projection over ALL rows at once
            # (1/sqrt(Dh) scale is already folded into the Q columns).
            qkv = (jnp.dot(x.astype(bf16), qkv_w_ref[l],
                           preferred_element_type=jnp.float32)
                   + qkv_b)                                      # (N, 3D) f32

            # per-head attention, batched over B with 3-D einsums; per-head
            # contexts are assembled into one (N, D) slab so the output
            # projection is a single (N,D)@(D,D) matmul.
            ctx_heads = []
            for h in range(H):
                q = qkv[:, h * Dh:(h + 1) * Dh]
                k = qkv[:, D + h * Dh:D + (h + 1) * Dh]
                v = qkv[:, 2 * D + h * Dh:2 * D + (h + 1) * Dh]
                q = q.reshape(B, S, Dh).astype(bf16)
                k = k.reshape(B, S, Dh).astype(bf16)
                v = v.reshape(B, S, Dh).astype(bf16)

                s = jnp.einsum("bqd,bkd->bqk", q, k,
                               preferred_element_type=jnp.float32)  # (B, S, S)
                m = jnp.max(s, axis=-1, keepdims=True)
                p = jnp.exp(s - m)
                p = p / jnp.sum(p, axis=-1, keepdims=True)           # exact softmax
                o_h = jnp.einsum("bqk,bkd->bqd", p.astype(bf16), v,
                                 preferred_element_type=jnp.float32)  # (B, S, Dh)
                ctx_heads.append(o_h.reshape(N, Dh))

            ctx = jnp.concatenate(ctx_heads, axis=1)             # (N, D)
            attn = (jnp.dot(ctx.astype(bf16), out_w_ref[l],
                            preferred_element_type=jnp.float32)
                    + out_b)                                     # (N, D)
            x = _layernorm(x + attn, ln1_g, ln1_b)

            # feed-forward block
            ff = jnp.maximum(
                jnp.dot(x.astype(bf16), ff1_w_ref[l],
                        preferred_element_type=jnp.float32) + ff1_b, 0.0)  # (N, F)
            y = (jnp.dot(ff.astype(bf16), ff2_w_ref[l],
                         preferred_element_type=jnp.float32)
                 + ff2_b)                                        # (N, D)
            x = _layernorm(x + y, ln2_g, ln2_b)

        # ---- final LayerNorm + vocab head (lane-dense V=128 output) ----
        fv = fvec_ref[...]                                       # (8, 128) f32
        x = _layernorm(x, fv[0:1, :D], fv[1:2, :D])
        o_ref[...] = (jnp.dot(x.astype(bf16), head_w_ref[...],
                              preferred_element_type=jnp.float32)
                      + fv[2:3, :V])

    return kernel


# ------------------------------ model wrapper --------------------------------

def init_params(key, vocab, emb_dim, n_layers, ff_dim):
    def normal(k, shape, scl=0.02):
        return (scl * jax.random.normal(k, shape)).astype(jnp.float32)

    ks = jax.random.split(key, 6)
    return {
        "emb": normal(ks[0], (vocab, emb_dim)),
        # per-layer weights stacked along a leading L axis
        "qkv_w": normal(ks[1], (n_layers, emb_dim, 3 * emb_dim)),
        "qkv_b": jnp.zeros((n_layers, 3 * emb_dim), jnp.float32),
        "out_w": normal(ks[2], (n_layers, emb_dim, emb_dim)),
        "out_b": jnp.zeros((n_layers, emb_dim), jnp.float32),
        "ln1_g": jnp.ones((n_layers, emb_dim), jnp.float32),
        "ln1_b": jnp.zeros((n_layers, emb_dim), jnp.float32),
        "ff1_w": normal(ks[3], (n_layers, emb_dim, ff_dim)),
        "ff1_b": jnp.zeros((n_layers, ff_dim), jnp.float32),
        "ff2_w": normal(ks[4], (n_layers, ff_dim, emb_dim)),
        "ff2_b": jnp.zeros((n_layers, emb_dim), jnp.float32),
        "ln2_g": jnp.ones((n_layers, emb_dim), jnp.float32),
        "ln2_b": jnp.zeros((n_layers, emb_dim), jnp.float32),
        # final norm + head
        "ln_g": jnp.ones((emb_dim,), jnp.float32),
        "ln_b": jnp.zeros((emb_dim,), jnp.float32),
        "head_w": normal(ks[5], (emb_dim, vocab)),
        "head_b": jnp.zeros((vocab,), jnp.float32),
    }


def student_forward(params, input_ids, n_heads):
    B, S = input_ids.shape
    V, D = params["emb"].shape
    L = params["qkv_w"].shape[0]
    F = params["ff1_w"].shape[-1]
    N = B * S
    Dh = D // n_heads
    scale = 1.0 / math.sqrt(Dh)

    # packing scheme below assumes every small vector fits in one 128-lane row
    # TODO(synk): at realistic sizes (3D, F, V > 128) switch to per-128 tiling.
    assert 3 * D <= 128 and F <= 128 and V <= 128 and D <= 128

    ids = input_ids.reshape(N, 1).astype(jnp.int32)

    # ---- trace-time weight prep (constant-folded under jit) -----------------
    # Fold the 1/sqrt(Dh) attention scale into the Q columns of W_qkv / b_qkv,
    # cast all matmul weights to bf16 (MXU-native), keep biases/LN in f32.
    scale_vec = jnp.concatenate([jnp.full((D,), scale, jnp.float32),
                                 jnp.ones((2 * D,), jnp.float32)])
    qkv_w = (params["qkv_w"] * scale_vec).astype(jnp.bfloat16)     # (L, D, 3D)
    qkv_b = params["qkv_b"] * scale_vec                            # (L, 3D)
    out_w = params["out_w"].astype(jnp.bfloat16)                   # (L, D, D)
    ff1_w = params["ff1_w"].astype(jnp.bfloat16)                   # (L, D, F)
    ff2_w = params["ff2_w"].astype(jnp.bfloat16)                   # (L, F, D)
    emb_w = params["emb"].astype(jnp.bfloat16)                     # (V, D)
    head_w = params["head_w"].astype(jnp.bfloat16)                 # (D, V)

    # Pack the 8 small per-layer vectors into one (L, 8, 128) slab.
    def pad128(v):                       # (L, w) -> (L, 128)
        return jnp.pad(v, ((0, 0), (0, 128 - v.shape[-1])))

    lvec = jnp.stack([pad128(qkv_b),
                      pad128(params["out_b"]),
                      pad128(params["ln1_g"]), pad128(params["ln1_b"]),
                      pad128(params["ff1_b"]), pad128(params["ff2_b"]),
                      pad128(params["ln2_g"]), pad128(params["ln2_b"])],
                     axis=1).astype(jnp.float32)                   # (L, 8, 128)

    # Final LN gamma/beta + head bias packed into one (8, 128) slab.
    fvec = jnp.zeros((8, 128), jnp.float32)
    fvec = fvec.at[0, :D].set(params["ln_g"])
    fvec = fvec.at[1, :D].set(params["ln_b"])
    fvec = fvec.at[2, :V].set(params["head_b"])

    kernel = make_fused_forward_kernel(N, B, S, D, n_heads, F, V, L)

    # Single grid step over all rows: everything lives in VMEM for the whole
    # call, one kernel launch, no per-step pipelining overhead.
    # TODO(synk): on v7x at realistic sizes, add a >=2-step "parallel" row axis
    # so both TensorCores are used; not worth the ~0.35us/step at toy size.
    logits = pl.pallas_call(
        kernel,
        out_shape=jax.ShapeDtypeStruct((N, V), jnp.float32),
        compiler_params=pltpu.CompilerParams(
            vmem_limit_bytes=32 * 1024 * 1024),
    )(ids, emb_w, qkv_w, out_w, ff1_w, ff2_w, lvec, head_w, fvec)

    return logits.reshape(B, S, V)


# -------------------------- plain-JAX reference ------------------------------
# Mirrors PyTorch semantics; matmul operands are cast to bf16 (f32 accumulate)
# to match the kernel's MXU precision so the comparison checks kernel logic.

def _ln_ref(x, g, b, eps=1e-5):
    mean = jnp.mean(x, axis=-1, keepdims=True)
    var = jnp.mean((x - mean) ** 2, axis=-1, keepdims=True)
    return (x - mean) * lax.rsqrt(var + eps) * g + b


def _bmm(a, b):
    return jnp.dot(a.astype(jnp.bfloat16), b.astype(jnp.bfloat16),
                   preferred_element_type=jnp.float32)


def reference_forward(params, input_ids, n_heads):
    B, S = input_ids.shape
    V, D = params["emb"].shape
    L = params["qkv_w"].shape[0]
    Dh = D // n_heads
    bf16 = jnp.bfloat16

    emb = params["emb"].astype(bf16).astype(jnp.float32)
    x = jnp.take(emb, input_ids.reshape(-1), axis=0).reshape(B, S, D)
    for l in range(L):
        qkv = _bmm(x, params["qkv_w"][l]) + params["qkv_b"][l]
        q, k, v = jnp.split(qkv, 3, axis=-1)

        def heads(t):
            return t.reshape(B, S, n_heads, Dh).transpose(0, 2, 1, 3)

        q, k, v = heads(q), heads(k), heads(v)
        s = jnp.einsum("bhqd,bhkd->bhqk", q.astype(bf16), k.astype(bf16),
                       preferred_element_type=jnp.float32) / math.sqrt(Dh)
        p = jax.nn.softmax(s, axis=-1)
        o = jnp.einsum("bhqk,bhkd->bhqd", p.astype(bf16), v.astype(bf16),
                       preferred_element_type=jnp.float32)
        o = o.transpose(0, 2, 1, 3).reshape(B, S, D)
        o = _bmm(o, params["out_w"][l]) + params["out_b"][l]
        x = _ln_ref(x + o, params["ln1_g"][l], params["ln1_b"][l])
        ff = jax.nn.relu(_bmm(x, params["ff1_w"][l]) + params["ff1_b"][l])
        ff = _bmm(ff, params["ff2_w"][l]) + params["ff2_b"][l]
        x = _ln_ref(x + ff, params["ln2_g"][l], params["ln2_b"][l])
    x = _ln_ref(x, params["ln_g"], params["ln_b"])
    return _bmm(x, params["head_w"]) + params["head_b"]


# --------------------------------- driver ------------------------------------

if __name__ == "__main__":
    # Small shapes consistent with the module (scaled-down transformer encoder).
    VOCAB, EMB, HEADS, LAYERS, FF = 128, 32, 4, 2, 64
    B, S = 2, 8

    key = jax.random.PRNGKey(0)
    pkey, dkey = jax.random.split(key)
    params = init_params(pkey, VOCAB, EMB, LAYERS, FF)
    input_ids = jax.random.randint(dkey, (B, S), 0, VOCAB, dtype=jnp.int32)

    fwd = jax.jit(lambda ids: student_forward(params, ids, HEADS))
    logits = fwd(input_ids)
    jax.block_until_ready(logits)

    assert logits.shape == (B, S, VOCAB)
    assert bool(jnp.all(jnp.isfinite(logits)))

    # sanity vs. plain-JAX reference (same bf16 matmul precision)
    ref = reference_forward(params, input_ids, HEADS)
    max_err = float(jnp.max(jnp.abs(logits - ref)))
    assert max_err < 2e-2, f"mismatch vs reference: {max_err}"

    print("KERNEL_OK")
</pallas_src>

<mosaic_0001>
module attributes {stable_mosaic.version = 11 : i64} {
  func.func @kernel(%arg0: memref<16x1xi32, #tpu.memory_space<vmem>>, %arg1: memref<128x32xbf16, #tpu.memory_space<vmem>>, %arg2: memref<2x32x96xbf16, #tpu.memory_space<vmem>>, %arg3: memref<2x32x32xbf16, #tpu.memory_space<vmem>>, %arg4: memref<2x32x64xbf16, #tpu.memory_space<vmem>>, %arg5: memref<2x64x32xbf16, #tpu.memory_space<vmem>>, %arg6: memref<2x8x128xf32, #tpu.memory_space<vmem>>, %arg7: memref<32x128xbf16, #tpu.memory_space<vmem>>, %arg8: memref<8x128xf32, #tpu.memory_space<vmem>>, %arg9: memref<16x128xf32, #tpu.memory_space<vmem>>) attributes {dimension_semantics = [], scalar_prefetch = 0 : i64, scratch_operands = 0 : i64, tpu.core_type = #tpu.core_type<tc>} {
    %c0 = arith.constant 0 : index
    %c0_0 = arith.constant 0 : index
    %0 = vector.load %arg0[%c0, %c0_0] : memref<16x1xi32, #tpu.memory_space<vmem>>, vector<16x1xi32>
    %1 = tpu.iota {dimensions = array<i32: 1>} : vector<16x128xi32>
    %2 = vector.broadcast %0 : vector<16x1xi32> to vector<16x128xi32>
    %3 = arith.cmpi eq, %1, %2 : vector<16x128xi32>
    %cst = arith.constant 1.000000e+00 : f32
    %cst_1 = arith.constant 0.000000e+00 : f32
    %4 = vector.broadcast %cst : f32 to vector<16x128xf32>
    %5 = vector.broadcast %cst_1 : f32 to vector<16x128xf32>
    %6 = arith.select %3, %4, %5 : vector<16x128xi1>, vector<16x128xf32>
    %7 = arith.truncf %6 : vector<16x128xf32> to vector<16x128xbf16>
    %c0_2 = arith.constant 0 : index
    %c0_3 = arith.constant 0 : index
    %8 = vector.load %arg1[%c0_2, %c0_3] : memref<128x32xbf16, #tpu.memory_space<vmem>>, vector<128x32xbf16>
    %cst_4 = arith.constant dense<0.000000e+00> : vector<16x32xf32>
    %9 = tpu.matmul %7, %8, %cst_4 {dimension_numbers = #tpu.dot_dimension_numbers<[1], [0], [0], [1], [0, 0, 1, 1], [], []>} : vector<16x128xbf16>, vector<128x32xbf16>, vector<16x32xf32> -> vector<16x32xf32>
    %c0_5 = arith.constant 0 : index
    %c0_6 = arith.constant 0 : index
    %c0_7 = arith.constant 0 : index
    %10 = vector.load %arg6[%c0_5, %c0_6, %c0_7] : memref<2x8x128xf32, #tpu.memory_space<vmem>>, vector<1x8x128xf32>
    %11 = vector.shape_cast %10 : vector<1x8x128xf32> to vector<8x128xf32>
    %12 = vector.extract_strided_slice %11 {offsets = [0, 0], sizes = [1, 96], strides = [1, 1]} : vector<8x128xf32> to vector<1x96xf32>
    %13 = vector.extract_strided_slice %11 {offsets = [1, 0], sizes = [1, 32], strides = [1, 1]} : vector<8x128xf32> to vector<1x32xf32>
    %14 = vector.extract_strided_slice %11 {offsets = [2, 0], sizes = [1, 32], strides = [1, 1]} : vector<8x128xf32> to vector<1x32xf32>
    %15 = vector.extract_strided_slice %11 {offsets = [3, 0], sizes = [1, 32], strides = [1, 1]} : vector<8x128xf32> to vector<1x32xf32>
    %16 = vector.extract_strided_slice %11 {offsets = [4, 0], sizes = [1, 64], strides = [1, 1]} : vector<8x128xf32> to vector<1x64xf32>
    %17 = vector.extract_strided_slice %11 {offsets = [5, 0], sizes = [1, 32], strides = [1, 1]} : vector<8x128xf32> to vector<1x32xf32>
    %18 = vector.extract_strided_slice %11 {offsets = [6, 0], sizes = [1, 32], strides = [1, 1]} : vector<8x128xf32> to vector<1x32xf32>
    %19 = vector.extract_strided_slice %11 {offsets = [7, 0], sizes = [1, 32], strides = [1, 1]} : vector<8x128xf32> to vector<1x32xf32>
    %20 = arith.truncf %9 : vector<16x32xf32> to vector<16x32xbf16>
    %c0_8 = arith.constant 0 : index
    %c0_9 = arith.constant 0 : index
    %c0_10 = arith.constant 0 : index
    %21 = vector.load %arg2[%c0_8, %c0_9, %c0_10] : memref<2x32x96xbf16, #tpu.memory_space<vmem>>, vector<1x32x96xbf16>
    %22 = vector.shape_cast %21 : vector<1x32x96xbf16> to vector<32x96xbf16>
    %cst_11 = arith.constant dense<0.000000e+00> : vector<16x96xf32>
    %23 = tpu.matmul %20, %22, %cst_11 {dimension_numbers = #tpu.dot_dimension_numbers<[1], [0], [0], [1], [0, 0, 1, 1], [], []>} : vector<16x32xbf16>, vector<32x96xbf16>, vector<16x96xf32> -> vector<16x96xf32>
    %24 = vector.broadcast %12 : vector<1x96xf32> to vector<16x96xf32>
    %25 = arith.addf %23, %24 : vector<16x96xf32>
    %26 = vector.extract_strided_slice %25 {offsets = [0, 0], sizes = [16, 8], strides = [1, 1]} : vector<16x96xf32> to vector<16x8xf32>
    %27 = vector.extract_strided_slice %25 {offsets = [0, 32], sizes = [16, 8], strides = [1, 1]} : vector<16x96xf32> to vector<16x8xf32>
    %28 = vector.extract_strided_slice %25 {offsets = [0, 64], sizes = [16, 8], strides = [1, 1]} : vector<16x96xf32> to vector<16x8xf32>
    %29 = vector.shape_cast %26 : vector<16x8xf32> to vector<2x8x8xf32>
    %30 = arith.truncf %29 : vector<2x8x8xf32> to vector<2x8x8xbf16>
    %31 = vector.shape_cast %27 : vector<16x8xf32> to vector<2x8x8xf32>
    %32 = arith.truncf %31 : vector<2x8x8xf32> to vector<2x8x8xbf16>
    %33 = vector.shape_cast %28 : vector<16x8xf32> to vector<2x8x8xf32>
    %34 = arith.truncf %33 : vector<2x8x8xf32> to vector<2x8x8xbf16>
    "tpu.trace_start"() <{level = 10 : i32, message = "bqd,bkd->bqk"}> : () -> ()
    %cst_12 = arith.constant dense<0.000000e+00> : vector<2x8x8xf32>
    %35 = tpu.matmul %30, %32, %cst_12 {dimension_numbers = #tpu.dot_dimension_numbers<[2], [2], [1], [1], [0, 0, 0, 1, 1, 1], [0], [0]>} : vector<2x8x8xbf16>, vector<2x8x8xbf16>, vector<2x8x8xf32> -> vector<2x8x8xf32>
    "tpu.trace_stop"() : () -> ()
    %cst_13 = arith.constant dense<0xFF800000> : vector<2x8xf32>
    %36 = vector.multi_reduction <maximumf>, %35, %cst_13 [2] : vector<2x8x8xf32> to vector<2x8xf32>
    %37 = vector.shape_cast %36 : vector<2x8xf32> to vector<2x8x1xf32>
    %38 = vector.broadcast %37 : vector<2x8x1xf32> to vector<2x8x8xf32>
    %39 = arith.subf %35, %38 : vector<2x8x8xf32>
    %40 = math.exp %39 : vector<2x8x8xf32>
    %cst_14 = arith.constant dense<0.000000e+00> : vector<2x8xf32>
    %41 = vector.multi_reduction <add>, %40, %cst_14 [2] : vector<2x8x8xf32> to vector<2x8xf32>
    %42 = vector.shape_cast %41 : vector<2x8xf32> to vector<2x8x1xf32>
    %43 = vector.broadcast %42 : vector<2x8x1xf32> to vector<2x8x8xf32>
    %44 = arith.divf %40, %43 : vector<2x8x8xf32>
    %45 = arith.truncf %44 : vector<2x8x8xf32> to vector<2x8x8xbf16>
    "tpu.trace_start"() <{level = 10 : i32, message = "bqk,bkd->bqd"}> : () -> ()
    %cst_15 = arith.constant dense<0.000000e+00> : vector<2x8x8xf32>
    %46 = tpu.matmul %45, %34, %cst_15 {dimension_numbers = #tpu.dot_dimension_numbers<[2], [1], [1], [2], [0, 0, 0, 1, 1, 2], [0], [0]>} : vector<2x8x8xbf16>, vector<2x8x8xbf16>, vector<2x8x8xf32> -> vector<2x8x8xf32>
    "tpu.trace_stop"() : () -> ()
    %47 = vector.shape_cast %46 : vector<2x8x8xf32> to vector<16x8xf32>
    %48 = vector.extract_strided_slice %25 {offsets = [0, 8], sizes = [16, 8], strides = [1, 1]} : vector<16x96xf32> to vector<16x8xf32>
    %49 = vector.extract_strided_slice %25 {offsets = [0, 40], sizes = [16, 8], strides = [1, 1]} : vector<16x96xf32> to vector<16x8xf32>
    %50 = vector.extract_strided_slice %25 {offsets = [0, 72], sizes = [16, 8], strides = [1, 1]} : vector<16x96xf32> to vector<16x8xf32>
    %51 = vector.shape_cast %48 : vector<16x8xf32> to vector<2x8x8xf32>
    %52 = arith.truncf %51 : vector<2x8x8xf32> to vector<2x8x8xbf16>
    %53 = vector.shape_cast %49 : vector<16x8xf32> to vector<2x8x8xf32>
    %54 = arith.truncf %53 : vector<2x8x8xf32> to vector<2x8x8xbf16>
    %55 = vector.shape_cast %50 : vector<16x8xf32> to vector<2x8x8xf32>
    %56 = arith.truncf %55 : vector<2x8x8xf32> to vector<2x8x8xbf16>
    "tpu.trace_start"() <{level = 10 : i32, message = "bqd,bkd->bqk"}> : () -> ()
    %cst_16 = arith.constant dense<0.000000e+00> : vector<2x8x8xf32>
    %57 = tpu.matmul %52, %54, %cst_16 {dimension_numbers = #tpu.dot_dimension_numbers<[2], [2], [1], [1], [0, 0, 0, 1, 1, 1], [0], [0]>} : vector<2x8x8xbf16>, vector<2x8x8xbf16>, vector<2x8x8xf32> -> vector<2x8x8xf32>
    "tpu.trace_stop"() : () -> ()
    %cst_17 = arith.constant dense<0xFF800000> : vector<2x8xf32>
    %58 = vector.multi_reduction <maximumf>, %57, %cst_17 [2] : vector<2x8x8xf32> to vector<2x8xf32>
    %59 = vector.shape_cast %58 : vector<2x8xf32> to vector<2x8x1xf32>
    %60 = vector.broadcast %59 : vector<2x8x1xf32> to vector<2x8x8xf32>
    %61 = arith.subf %57, %60 : vector<2x8x8xf32>
    %62 = math.exp %61 : vector<2x8x8xf32>
    %cst_18 = arith.constant dense<0.000000e+00> : vector<2x8xf32>
    %63 = vector.multi_reduction <add>, %62, %cst_18 [2] : vector<2x8x8xf32> to vector<2x8xf32>
    %64 = vector.shape_cast %63 : vector<2x8xf32> to vector<2x8x1xf32>
    %65 = vector.broadcast %64 : vector<2x8x1xf32> to vector<2x8x8xf32>
    %66 = arith.divf %62, %65 : vector<2x8x8xf32>
    %67 = arith.truncf %66 : vector<2x8x8xf32> to vector<2x8x8xbf16>
    "tpu.trace_start"() <{level = 10 : i32, message = "bqk,bkd->bqd"}> : () -> ()
    %cst_19 = arith.constant dense<0.000000e+00> : vector<2x8x8xf32>
    %68 = tpu.matmul %67, %56, %cst_19 {dimension_numbers = #tpu.dot_dimension_numbers<[2], [1], [1], [2], [0, 0, 0, 1, 1, 2], [0], [0]>} : vector<2x8x8xbf16>, vector<2x8x8xbf16>, vector<2x8x8xf32> -> vector<2x8x8xf32>
    "tpu.trace_stop"() : () -> ()
    %69 = vector.shape_cast %68 : vector<2x8x8xf32> to vector<16x8xf32>
    %70 = vector.extract_strided_slice %25 {offsets = [0, 16], sizes = [16, 8], strides = [1, 1]} : vector<16x96xf32> to vector<16x8xf32>
    %71 = vector.extract_strided_slice %25 {offsets = [0, 48], sizes = [16, 8], strides = [1, 1]} : vector<16x96xf32> to vector<16x8xf32>
    %72 = vector.extract_strided_slice %25 {offsets = [0, 80], sizes = [16, 8], strides = [1, 1]} : vector<16x96xf32> to vector<16x8xf32>
    %73 = vector.shape_cast %70 : vector<16x8xf32> to vector<2x8x8xf32>
    %74 = arith.truncf %73 : vector<2x8x8xf32> to vector<2x8x8xbf16>
    %75 = vector.shape_cast %71 : vector<16x8xf32> to vector<2x8x8xf32>
    %76 = arith.truncf %75 : vector<2x8x8xf32> to vector<2x8x8xbf16>
    %77 = vector.shape_cast %72 : vector<16x8xf32> to vector<2x8x8xf32>
    %78 = arith.truncf %77 : vector<2x8x8xf32> to vector<2x8x8xbf16>
    "tpu.trace_start"() <{level = 10 : i32, message = "bqd,bkd->bqk"}> : () -> ()
    %cst_20 = arith.constant dense<0.000000e+00> : vector<2x8x8xf32>
    %79 = tpu.matmul %74, %76, %cst_20 {dimension_numbers = #tpu.dot_dimension_numbers<[2], [2], [1], [1], [0, 0, 0, 1, 1, 1], [0], [0]>} : vector<2x8x8xbf16>, vector<2x8x8xbf16>, vector<2x8x8xf32> -> vector<2x8x8xf32>
    "tpu.trace_stop"() : () -> ()
    %cst_21 = arith.constant dense<0xFF800000> : vector<2x8xf32>
    %80 = vector.multi_reduction <maximumf>, %79, %cst_21 [2] : vector<2x8x8xf32> to vector<2x8xf32>
    %81 = vector.shape_cast %80 : vector<2x8xf32> to vector<2x8x1xf32>
    %82 = vector.broadcast %81 : vector<2x8x1xf32> to vector<2x8x8xf32>
    %83 = arith.subf %79, %82 : vector<2x8x8xf32>
    %84 = math.exp %83 : vector<2x8x8xf32>
    %cst_22 = arith.constant dense<0.000000e+00> : vector<2x8xf32>
    %85 = vector.multi_reduction <add>, %84, %cst_22 [2] : vector<2x8x8xf32> to vector<2x8xf32>
    %86 = vector.shape_cast %85 : vector<2x8xf32> to vector<2x8x1xf32>
    %87 = vector.broadcast %86 : vector<2x8x1xf32> to vector<2x8x8xf32>
    %88 = arith.divf %84, %87 : vector<2x8x8xf32>
    %89 = arith.truncf %88 : vector<2x8x8xf32> to vector<2x8x8xbf16>
    "tpu.trace_start"() <{level = 10 : i32, message = "bqk,bkd->bqd"}> : () -> ()
    %cst_23 = arith.constant dense<0.000000e+00> : vector<2x8x8xf32>
    %90 = tpu.matmul %89, %78, %cst_23 {dimension_numbers = #tpu.dot_dimension_numbers<[2], [1], [1], [2], [0, 0, 0, 1, 1, 2], [0], [0]>} : vector<2x8x8xbf16>, vector<2x8x8xbf16>, vector<2x8x8xf32> -> vector<2x8x8xf32>
    "tpu.trace_stop"() : () -> ()
    %91 = vector.shape_cast %90 : vector<2x8x8xf32> to vector<16x8xf32>
    %92 = vector.extract_strided_slice %25 {offsets = [0, 24], sizes = [16, 8], strides = [1, 1]} : vector<16x96xf32> to vector<16x8xf32>
    %93 = vector.extract_strided_slice %25 {offsets = [0, 56], sizes = [16, 8], strides = [1, 1]} : vector<16x96xf32> to vector<16x8xf32>
    %94 = vector.extract_strided_slice %25 {offsets = [0, 88], sizes = [16, 8], strides = [1, 1]} : vector<16x96xf32> to vector<16x8xf32>
    %95 = vector.shape_cast %92 : vector<16x8xf32> to vector<2x8x8xf32>
    %96 = arith.truncf %95 : vector<2x8x8xf32> to vector<2x8x8xbf16>
    %97 = vector.shape_cast %93 : vector<16x8xf32> to vector<2x8x8xf32>
    %98 = arith.truncf %97 : vector<2x8x8xf32> to vector<2x8x8xbf16>
    %99 = vector.shape_cast %94 : vector<16x8xf32> to vector<2x8x8xf32>
    %100 = arith.truncf %99 : vector<2x8x8xf32> to vector<2x8x8xbf16>
    "tpu.trace_start"() <{level = 10 : i32, message = "bqd,bkd->bqk"}> : () -> ()
    %cst_24 = arith.constant dense<0.000000e+00> : vector<2x8x8xf32>
    %101 = tpu.matmul %96, %98, %cst_24 {dimension_numbers = #tpu.dot_dimension_numbers<[2], [2], [1], [1], [0, 0, 0, 1, 1, 1], [0], [0]>} : vector<2x8x8xbf16>, vector<2x8x8xbf16>, vector<2x8x8xf32> -> vector<2x8x8xf32>
    "tpu.trace_stop"() : () -> ()
    %cst_25 = arith.constant dense<0xFF800000> : vector<2x8xf32>
    %102 = vector.multi_reduction <maximumf>, %101, %cst_25 [2] : vector<2x8x8xf32> to vector<2x8xf32>
    %103 = vector.shape_cast %102 : vector<2x8xf32> to vector<2x8x1xf32>
    %104 = vector.broadcast %103 : vector<2x8x1xf32> to vector<2x8x8xf32>
    %105 = arith.subf %101, %104 : vector<2x8x8xf32>
    %106 = math.exp %105 : vector<2x8x8xf32>
    %cst_26 = arith.constant dense<0.000000e+00> : vector<2x8xf32>
    %107 = vector.multi_reduction <add>, %106, %cst_26 [2] : vector<2x8x8xf32> to vector<2x8xf32>
    %108 = vector.shape_cast %107 : vector<2x8xf32> to vector<2x8x1xf32>
    %109 = vector.broadcast %108 : vector<2x8x1xf32> to vector<2x8x8xf32>
    %110 = arith.divf %106, %109 : vector<2x8x8xf32>
    %111 = arith.truncf %110 : vector<2x8x8xf32> to vector<2x8x8xbf16>
    "tpu.trace_start"() <{level = 10 : i32, message = "bqk,bkd->bqd"}> : () -> ()
    %cst_27 = arith.constant dense<0.000000e+00> : vector<2x8x8xf32>
    %112 = tpu.matmul %111, %100, %cst_27 {dimension_numbers = #tpu.dot_dimension_numbers<[2], [1], [1], [2], [0, 0, 0, 1, 1, 2], [0], [0]>} : vector<2x8x8xbf16>, vector<2x8x8xbf16>, vector<2x8x8xf32> -> vector<2x8x8xf32>
    "tpu.trace_stop"() : () -> ()
    %113 = vector.shape_cast %112 : vector<2x8x8xf32> to vector<16x8xf32>
    %114 = tpu.concatenate %47, %69, %91, %113 in 1 : vector<16x8xf32>, vector<16x8xf32>, vector<16x8xf32>, vector<16x8xf32> -> vector<16x32xf32>
    %115 = arith.truncf %114 : vector<16x32xf32> to vector<16x32xbf16>
    %c0_28 = arith.constant 0 : index
    %c0_29 = arith.constant 0 : index
    %c0_30 = arith.constant 0 : index
    %116 = vector.load %arg3[%c0_28, %c0_29, %c0_30] : memref<2x32x32xbf16, #tpu.memory_space<vmem>>, vector<1x32x32xbf16>
    %117 = vector.shape_cast %116 : vector<1x32x32xbf16> to vector<32x32xbf16>
    %cst_31 = arith.constant dense<0.000000e+00> : vector<16x32xf32>
    %118 = tpu.matmul %115, %117, %cst_31 {dimension_numbers = #tpu.dot_dimension_numbers<[1], [0], [0], [1], [0, 0, 1, 1], [], []>} : vector<16x32xbf16>, vector<32x32xbf16>, vector<16x32xf32> -> vector<16x32xf32>
    %119 = vector.broadcast %13 : vector<1x32xf32> to vector<16x32xf32>
    %120 = arith.addf %118, %119 : vector<16x32xf32>
    %121 = arith.addf %9, %120 : vector<16x32xf32>
    %cst_32 = arith.constant dense<0.000000e+00> : vector<16xf32>
    %122 = vector.multi_reduction <add>, %121, %cst_32 [1] : vector<16x32xf32> to vector<16xf32>
    %123 = vector.shape_cast %122 : vector<16xf32> to vector<16x1xf32>
    %cst_33 = arith.constant 3.200000e+01 : f32
    %124 = vector.broadcast %cst_33 : f32 to vector<16x1xf32>
    %125 = arith.divf %123, %124 : vector<16x1xf32>
    %126 = vector.broadcast %125 : vector<16x1xf32> to vector<16x32xf32>
    %127 = arith.subf %121, %126 : vector<16x32xf32>
    %128 = arith.mulf %127, %127 : vector<16x32xf32>
    %cst_34 = arith.constant dense<0.000000e+00> : vector<16xf32>
    %129 = vector.multi_reduction <add>, %128, %cst_34 [1] : vector<16x32xf32> to vector<16xf32>
    %130 = vector.shape_cast %129 : vector<16xf32> to vector<16x1xf32>
    %cst_35 = arith.constant 3.200000e+01 : f32
    %131 = vector.broadcast %cst_35 : f32 to vector<16x1xf32>
    %132 = arith.divf %130, %131 : vector<16x1xf32>
    %133 = vector.broadcast %125 : vector<16x1xf32> to vector<16x32xf32>
    %134 = arith.subf %121, %133 : vector<16x32xf32>
    %cst_36 = arith.constant 9.99999974E-6 : f32
    %135 = vector.broadcast %cst_36 : f32 to vector<16x1xf32>
    %136 = arith.addf %132, %135 : vector<16x1xf32>
    %137 = math.rsqrt %136 : vector<16x1xf32>
    %138 = vector.broadcast %137 : vector<16x1xf32> to vector<16x32xf32>
    %139 = arith.mulf %134, %138 : vector<16x32xf32>
    %140 = vector.broadcast %14 : vector<1x32xf32> to vector<16x32xf32>
    %141 = arith.mulf %139, %140 : vector<16x32xf32>
    %142 = vector.broadcast %15 : vector<1x32xf32> to vector<16x32xf32>
    %143 = arith.addf %141, %142 : vector<16x32xf32>
    %144 = arith.truncf %143 : vector<16x32xf32> to vector<16x32xbf16>
    %c0_37 = arith.constant 0 : index
    %c0_38 = arith.constant 0 : index
    %c0_39 = arith.constant 0 : index
    %145 = vector.load %arg4[%c0_37, %c0_38, %c0_39] : memref<2x32x64xbf16, #tpu.memory_space<vmem>>, vector<1x32x64xbf16>
    %146 = vector.shape_cast %145 : vector<1x32x64xbf16> to vector<32x64xbf16>
    %cst_40 = arith.constant dense<0.000000e+00> : vector<16x64xf32>
    %147 = tpu.matmul %144, %146, %cst_40 {dimension_numbers = #tpu.dot_dimension_numbers<[1], [0], [0], [1], [0, 0, 1, 1], [], []>} : vector<16x32xbf16>, vector<32x64xbf16>, vector<16x64xf32> -> vector<16x64xf32>
    %148 = vector.broadcast %16 : vector<1x64xf32> to vector<16x64xf32>
    %149 = arith.addf %147, %148 : vector<16x64xf32>
    %cst_41 = arith.constant 0.000000e+00 : f32
    %150 = vector.broadcast %cst_41 : f32 to vector<16x64xf32>
    %151 = arith.maximumf %149, %150 : vector<16x64xf32>
    %152 = arith.truncf %151 : vector<16x64xf32> to vector<16x64xbf16>
    %c0_42 = arith.constant 0 : index
    %c0_43 = arith.constant 0 : index
    %c0_44 = arith.constant 0 : index
    %153 = vector.load %arg5[%c0_42, %c0_43, %c0_44] : memref<2x64x32xbf16, #tpu.memory_space<vmem>>, vector<1x64x32xbf16>
    %154 = vector.shape_cast %153 : vector<1x64x32xbf16> to vector<64x32xbf16>
    %cst_45 = arith.constant dense<0.000000e+00> : vector<16x32xf32>
    %155 = tpu.matmul %152, %154, %cst_45 {dimension_numbers = #tpu.dot_dimension_numbers<[1], [0], [0], [1], [0, 0, 1, 1], [], []>} : vector<16x64xbf16>, vector<64x32xbf16>, vector<16x32xf32> -> vector<16x32xf32>
    %156 = vector.broadcast %17 : vector<1x32xf32> to vector<16x32xf32>
    %157 = arith.addf %155, %156 : vector<16x32xf32>
    %158 = arith.addf %143, %157 : vector<16x32xf32>
    %cst_46 = arith.constant dense<0.000000e+00> : vector<16xf32>
    %159 = vector.multi_reduction <add>, %158, %cst_46 [1] : vector<16x32xf32> to vector<16xf32>
    %160 = vector.shape_cast %159 : vector<16xf32> to vector<16x1xf32>
    %cst_47 = arith.constant 3.200000e+01 : f32
    %161 = vector.broadcast %cst_47 : f32 to vector<16x1xf32>
    %162 = arith.divf %160, %161 : vector<16x1xf32>
    %163 = vector.broadcast %162 : vector<16x1xf32> to vector<16x32xf32>
    %164 = arith.subf %158, %163 : vector<16x32xf32>
    %165 = arith.mulf %164, %164 : vector<16x32xf32>
    %cst_48 = arith.constant dense<0.000000e+00> : vector<16xf32>
    %166 = vector.multi_reduction <add>, %165, %cst_48 [1] : vector<16x32xf32> to vector<16xf32>
    %167 = vector.shape_cast %166 : vector<16xf32> to vector<16x1xf32>
    %cst_49 = arith.constant 3.200000e+01 : f32
    %168 = vector.broadcast %cst_49 : f32 to vector<16x1xf32>
    %169 = arith.divf %167, %168 : vector<16x1xf32>
    %170 = vector.broadcast %162 : vector<16x1xf32> to vector<16x32xf32>
    %171 = arith.subf %158, %170 : vector<16x32xf32>
    %cst_50 = arith.constant 9.99999974E-6 : f32
    %172 = vector.broadcast %cst_50 : f32 to vector<16x1xf32>
    %173 = arith.addf %169, %172 : vector<16x1xf32>
    %174 = math.rsqrt %173 : vector<16x1xf32>
    %175 = vector.broadcast %174 : vector<16x1xf32> to vector<16x32xf32>
    %176 = arith.mulf %171, %175 : vector<16x32xf32>
    %177 = vector.broadcast %18 : vector<1x32xf32> to vector<16x32xf32>
    %178 = arith.mulf %176, %177 : vector<16x32xf32>
    %179 = vector.broadcast %19 : vector<1x32xf32> to vector<16x32xf32>
    %180 = arith.addf %178, %179 : vector<16x32xf32>
    %c1 = arith.constant 1 : index
    %c0_51 = arith.constant 0 : index
    %c0_52 = arith.constant 0 : index
    %181 = vector.load %arg6[%c1, %c0_51, %c0_52] : memref<2x8x128xf32, #tpu.memory_space<vmem>>, vector<1x8x128xf32>
    %182 = vector.shape_cast %181 : vector<1x8x128xf32> to vector<8x128xf32>
    %183 = vector.extract_strided_slice %182 {offsets = [0, 0], sizes = [1, 96], strides = [1, 1]} : vector<8x128xf32> to vector<1x96xf32>
    %184 = vector.extract_strided_slice %182 {offsets = [1, 0], sizes = [1, 32], strides = [1, 1]} : vector<8x128xf32> to vector<1x32xf32>
    %185 = vector.extract_strided_slice %182 {offsets = [2, 0], sizes = [1, 32], strides = [1, 1]} : vector<8x128xf32> to vector<1x32xf32>
    %186 = vector.extract_strided_slice %182 {offsets = [3, 0], sizes = [1, 32], strides = [1, 1]} : vector<8x128xf32> to vector<1x32xf32>
    %187 = vector.extract_strided_slice %182 {offsets = [4, 0], sizes = [1, 64], strides = [1, 1]} : vector<8x128xf32> to vector<1x64xf32>
    %188 = vector.extract_strided_slice %182 {offsets = [5, 0], sizes = [1, 32], strides = [1, 1]} : vector<8x128xf32> to vector<1x32xf32>
    %189 = vector.extract_strided_slice %182 {offsets = [6, 0], sizes = [1, 32], strides = [1, 1]} : vector<8x128xf32> to vector<1x32xf32>
    %190 = vector.extract_strided_slice %182 {offsets = [7, 0], sizes = [1, 32], strides = [1, 1]} : vector<8x128xf32> to vector<1x32xf32>
    %191 = arith.truncf %180 : vector<16x32xf32> to vector<16x32xbf16>
    %c1_53 = arith.constant 1 : index
    %c0_54 = arith.constant 0 : index
    %c0_55 = arith.constant 0 : index
    %192 = vector.load %arg2[%c1_53, %c0_54, %c0_55] : memref<2x32x96xbf16, #tpu.memory_space<vmem>>, vector<1x32x96xbf16>
    %193 = vector.shape_cast %192 : vector<1x32x96xbf16> to vector<32x96xbf16>
    %cst_56 = arith.constant dense<0.000000e+00> : vector<16x96xf32>
    %194 = tpu.matmul %191, %193, %cst_56 {dimension_numbers = #tpu.dot_dimension_numbers<[1], [0], [0], [1], [0, 0, 1, 1], [], []>} : vector<16x32xbf16>, vector<32x96xbf16>, vector<16x96xf32> -> vector<16x96xf32>
    %195 = vector.broadcast %183 : vector<1x96xf32> to vector<16x96xf32>
    %196 = arith.addf %194, %195 : vector<16x96xf32>
    %197 = vector.extract_strided_slice %196 {offsets = [0, 0], sizes = [16, 8], strides = [1, 1]} : vector<16x96xf32> to vector<16x8xf32>
    %198 = vector.extract_strided_slice %196 {offsets = [0, 32], sizes = [16, 8], strides = [1, 1]} : vector<16x96xf32> to vector<16x8xf32>
    %199 = vector.extract_strided_slice %196 {offsets = [0, 64], sizes = [16, 8], strides = [1, 1]} : vector<16x96xf32> to vector<16x8xf32>
    %200 = vector.shape_cast %197 : vector<16x8xf32> to vector<2x8x8xf32>
    %201 = arith.truncf %200 : vector<2x8x8xf32> to vector<2x8x8xbf16>
    %202 = vector.shape_cast %198 : vector<16x8xf32> to vector<2x8x8xf32>
    %203 = arith.truncf %202 : vector<2x8x8xf32> to vector<2x8x8xbf16>
    %204 = vector.shape_cast %199 : vector<16x8xf32> to vector<2x8x8xf32>
    %205 = arith.truncf %204 : vector<2x8x8xf32> to vector<2x8x8xbf16>
    "tpu.trace_start"() <{level = 10 : i32, message = "bqd,bkd->bqk"}> : () -> ()
    %cst_57 = arith.constant dense<0.000000e+00> : vector<2x8x8xf32>
    %206 = tpu.matmul %201, %203, %cst_57 {dimension_numbers = #tpu.dot_dimension_numbers<[2], [2], [1], [1], [0, 0, 0, 1, 1, 1], [0], [0]>} : vector<2x8x8xbf16>, vector<2x8x8xbf16>, vector<2x8x8xf32> -> vector<2x8x8xf32>
    "tpu.trace_stop"() : () -> ()
    %cst_58 = arith.constant dense<0xFF800000> : vector<2x8xf32>
    %207 = vector.multi_reduction <maximumf>, %206, %cst_58 [2] : vector<2x8x8xf32> to vector<2x8xf32>
    %208 = vector.shape_cast %207 : vector<2x8xf32> to vector<2x8x1xf32>
    %209 = vector.broadcast %208 : vector<2x8x1xf32> to vector<2x8x8xf32>
    %210 = arith.subf %206, %209 : vector<2x8x8xf32>
    %211 = math.exp %210 : vector<2x8x8xf32>
    %cst_59 = arith.constant dense<0.000000e+00> : vector<2x8xf32>
    %212 = vector.multi_reduction <add>, %211, %cst_59 [2] : vector<2x8x8xf32> to vector<2x8xf32>
    %213 = vector.shape_cast %212 : vector<2x8xf32> to vector<2x8x1xf32>
    %214 = vector.broadcast %213 : vector<2x8x1xf32> to vector<2x8x8xf32>
    %215 = arith.divf %211, %214 : vector<2x8x8xf32>
    %216 = arith.truncf %215 : vector<2x8x8xf32> to vector<2x8x8xbf16>
    "tpu.trace_start"() <{level = 10 : i32, message = "bqk,bkd->bqd"}> : () -> ()
    %cst_60 = arith.constant dense<0.000000e+00> : vector<2x8x8xf32>
    %217 = tpu.matmul %216, %205, %cst_60 {dimension_numbers = #tpu.dot_dimension_numbers<[2], [1], [1], [2], [0, 0, 0, 1, 1, 2], [0], [0]>} : vector<2x8x8xbf16>, vector<2x8x8xbf16>, vector<2x8x8xf32> -> vector<2x8x8xf32>
    "tpu.trace_stop"() : () -> ()
    %218 = vector.shape_cast %217 : vector<2x8x8xf32> to vector<16x8xf32>
    %219 = vector.extract_strided_slice %196 {offsets = [0, 8], sizes = [16, 8], strides = [1, 1]} : vector<16x96xf32> to vector<16x8xf32>
    %220 = vector.extract_strided_slice %196 {offsets = [0, 40], sizes = [16, 8], strides = [1, 1]} : vector<16x96xf32> to vector<16x8xf32>
    %221 = vector.extract_strided_slice %196 {offsets = [0, 72], sizes = [16, 8], strides = [1, 1]} : vector<16x96xf32> to vector<16x8xf32>
    %222 = vector.shape_cast %219 : vector<16x8xf32> to vector<2x8x8xf32>
    %223 = arith.truncf %222 : vector<2x8x8xf32> to vector<2x8x8xbf16>
    %224 = vector.shape_cast %220 : vector<16x8xf32> to vector<2x8x8xf32>
    %225 = arith.truncf %224 : vector<2x8x8xf32> to vector<2x8x8xbf16>
    %226 = vector.shape_cast %221 : vector<16x8xf32> to vector<2x8x8xf32>
    %227 = arith.truncf %226 : vector<2x8x8xf32> to vector<2x8x8xbf16>
    "tpu.trace_start"() <{level = 10 : i32, message = "bqd,bkd->bqk"}> : () -> ()
    %cst_61 = arith.constant dense<0.000000e+00> : vector<2x8x8xf32>
    %228 = tpu.matmul %223, %225, %cst_61 {dimension_numbers = #tpu.dot_dimension_numbers<[2], [2], [1], [1], [0, 0, 0, 1, 1, 1], [0], [0]>} : vector<2x8x8xbf16>, vector<2x8x8xbf16>, vector<2x8x8xf32> -> vector<2x8x8xf32>
    "tpu.trace_stop"() : () -> ()
    %cst_62 = arith.constant dense<0xFF800000> : vector<2x8xf32>
    %229 = vector.multi_reduction <maximumf>, %228, %cst_62 [2] : vector<2x8x8xf32> to vector<2x8xf32>
    %230 = vector.shape_cast %229 : vector<2x8xf32> to vector<2x8x1xf32>
    %231 = vector.broadcast %230 : vector<2x8x1xf32> to vector<2x8x8xf32>
    %232 = arith.subf %228, %231 : vector<2x8x8xf32>
    %233 = math.exp %232 : vector<2x8x8xf32>
    %cst_63 = arith.constant dense<0.000000e+00> : vector<2x8xf32>
    %234 = vector.multi_reduction <add>, %233, %cst_63 [2] : vector<2x8x8xf32> to vector<2x8xf32>
    %235 = vector.shape_cast %234 : vector<2x8xf32> to vector<2x8x1xf32>
    %236 = vector.broadcast %235 : vector<2x8x1xf32> to vector<2x8x8xf32>
    %237 = arith.divf %233, %236 : vector<2x8x8xf32>
    %238 = arith.truncf %237 : vector<2x8x8xf32> to vector<2x8x8xbf16>
    "tpu.trace_start"() <{level = 10 : i32, message = "bqk,bkd->bqd"}> : () -> ()
    %cst_64 = arith.constant dense<0.000000e+00> : vector<2x8x8xf32>
    %239 = tpu.matmul %238, %227, %cst_64 {dimension_numbers = #tpu.dot_dimension_numbers<[2], [1], [1], [2], [0, 0, 0, 1, 1, 2], [0], [0]>} : vector<2x8x8xbf16>, vector<2x8x8xbf16>, vector<2x8x8xf32> -> vector<2x8x8xf32>
    "tpu.trace_stop"() : () -> ()
    %240 = vector.shape_cast %239 : vector<2x8x8xf32> to vector<16x8xf32>
    %241 = vector.extract_strided_slice %196 {offsets = [0, 16], sizes = [16, 8], strides = [1, 1]} : vector<16x96xf32> to vector<16x8xf32>
    %242 = vector.extract_strided_slice %196 {offsets = [0, 48], sizes = [16, 8], strides = [1, 1]} : vector<16x96xf32> to vector<16x8xf32>
    %243 = vector.extract_strided_slice %196 {offsets = [0, 80], sizes = [16, 8], strides = [1, 1]} : vector<16x96xf32> to vector<16x8xf32>
    %244 = vector.shape_cast %241 : vector<16x8xf32> to vector<2x8x8xf32>
    %245 = arith.truncf %244 : vector<2x8x8xf32> to vector<2x8x8xbf16>
    %246 = vector.shape_cast %242 : vector<16x8xf32> to vector<2x8x8xf32>
    %247 = arith.truncf %246 : vector<2x8x8xf32> to vector<2x8x8xbf16>
    %248 = vector.shape_cast %243 : vector<16x8xf32> to vector<2x8x8xf32>
    %249 = arith.truncf %248 : vector<2x8x8xf32> to vector<2x8x8xbf16>
    "tpu.trace_start"() <{level = 10 : i32, message = "bqd,bkd->bqk"}> : () -> ()
    %cst_65 = arith.constant dense<0.000000e+00> : vector<2x8x8xf32>
    %250 = tpu.matmul %245, %247, %cst_65 {dimension_numbers = #tpu.dot_dimension_numbers<[2], [2], [1], [1], [0, 0, 0, 1, 1, 1], [0], [0]>} : vector<2x8x8xbf16>, vector<2x8x8xbf16>, vector<2x8x8xf32> -> vector<2x8x8xf32>
    "tpu.trace_stop"() : () -> ()
    %cst_66 = arith.constant dense<0xFF800000> : vector<2x8xf32>
    %251 = vector.multi_reduction <maximumf>, %250, %cst_66 [2] : vector<2x8x8xf32> to vector<2x8xf32>
    %252 = vector.shape_cast %251 : vector<2x8xf32> to vector<2x8x1xf32>
    %253 = vector.broadcast %252 : vector<2x8x1xf32> to vector<2x8x8xf32>
    %254 = arith.subf %250, %253 : vector<2x8x8xf32>
    %255 = math.exp %254 : vector<2x8x8xf32>
    %cst_67 = arith.constant dense<0.000000e+00> : vector<2x8xf32>
    %256 = vector.multi_reduction <add>, %255, %cst_67 [2] : vector<2x8x8xf32> to vector<2x8xf32>
    %257 = vector.shape_cast %256 : vector<2x8xf32> to vector<2x8x1xf32>
    %258 = vector.broadcast %257 : vector<2x8x1xf32> to vector<2x8x8xf32>
    %259 = arith.divf %255, %258 : vector<2x8x8xf32>
    %260 = arith.truncf %259 : vector<2x8x8xf32> to vector<2x8x8xbf16>
    "tpu.trace_start"() <{level = 10 : i32, message = "bqk,bkd->bqd"}> : () -> ()
    %cst_68 = arith.constant dense<0.000000e+00> : vector<2x8x8xf32>
    %261 = tpu.matmul %260, %249, %cst_68 {dimension_numbers = #tpu.dot_dimension_numbers<[2], [1], [1], [2], [0, 0, 0, 1, 1, 2], [0], [0]>} : vector<2x8x8xbf16>, vector<2x8x8xbf16>, vector<2x8x8xf32> -> vector<2x8x8xf32>
    "tpu.trace_stop"() : () -> ()
    %262 = vector.shape_cast %261 : vector<2x8x8xf32> to vector<16x8xf32>
    %263 = vector.extract_strided_slice %196 {offsets = [0, 24], sizes = [16, 8], strides = [1, 1]} : vector<16x96xf32> to vector<16x8xf32>
    %264 = vector.extract_strided_slice %196 {offsets = [0, 56], sizes = [16, 8], strides = [1, 1]} : vector<16x96xf32> to vector<16x8xf32>
    %265 = vector.extract_strided_slice %196 {offsets = [0, 88], sizes = [16, 8], strides = [1, 1]} : vector<16x96xf32> to vector<16x8xf32>
    %266 = vector.shape_cast %263 : vector<16x8xf32> to vector<2x8x8xf32>
    %267 = arith.truncf %266 : vector<2x8x8xf32> to vector<2x8x8xbf16>
    %268 = vector.shape_cast %264 : vector<16x8xf32> to vector<2x8x8xf32>
    %269 = arith.truncf %268 : vector<2x8x8xf32> to vector<2x8x8xbf16>
    %270 = vector.shape_cast %265 : vector<16x8xf32> to vector<2x8x8xf32>
    %271 = arith.truncf %270 : vector<2x8x8xf32> to vector<2x8x8xbf16>
    "tpu.trace_start"() <{level = 10 : i32, message = "bqd,bkd->bqk"}> : () -> ()
    %cst_69 = arith.constant dense<0.000000e+00> : vector<2x8x8xf32>
    %272 = tpu.matmul %267, %269, %cst_69 {dimension_numbers = #tpu.dot_dimension_numbers<[2], [2], [1], [1], [0, 0, 0, 1, 1, 1], [0], [0]>} : vector<2x8x8xbf16>, vector<2x8x8xbf16>, vector<2x8x8xf32> -> vector<2x8x8xf32>
    "tpu.trace_stop"() : () -> ()
    %cst_70 = arith.constant dense<0xFF800000> : vector<2x8xf32>
    %273 = vector.multi_reduction <maximumf>, %272, %cst_70 [2] : vector<2x8x8xf32> to vector<2x8xf32>
    %274 = vector.shape_cast %273 : vector<2x8xf32> to vector<2x8x1xf32>
    %275 = vector.broadcast %274 : vector<2x8x1xf32> to vector<2x8x8xf32>
    %276 = arith.subf %272, %275 : vector<2x8x8xf32>
    %277 = math.exp %276 : vector<2x8x8xf32>
    %cst_71 = arith.constant dense<0.000000e+00> : vector<2x8xf32>
    %278 = vector.multi_reduction <add>, %277, %cst_71 [2] : vector<2x8x8xf32> to vector<2x8xf32>
    %279 = vector.shape_cast %278 : vector<2x8xf32> to vector<2x8x1xf32>
    %280 = vector.broadcast %279 : vector<2x8x1xf32> to vector<2x8x8xf32>
    %281 = arith.divf %277, %280 : vector<2x8x8xf32>
    %282 = arith.truncf %281 : vector<2x8x8xf32> to vector<2x8x8xbf16>
    "tpu.trace_start"() <{level = 10 : i32, message = "bqk,bkd->bqd"}> : () -> ()
    %cst_72 = arith.constant dense<0.000000e+00> : vector<2x8x8xf32>
    %283 = tpu.matmul %282, %271, %cst_72 {dimension_numbers = #tpu.dot_dimension_numbers<[2], [1], [1], [2], [0, 0, 0, 1, 1, 2], [0], [0]>} : vector<2x8x8xbf16>, vector<2x8x8xbf16>, vector<2x8x8xf32> -> vector<2x8x8xf32>
    "tpu.trace_stop"() : () -> ()
    %284 = vector.shape_cast %283 : vector<2x8x8xf32> to vector<16x8xf32>
    %285 = tpu.concatenate %218, %240, %262, %284 in 1 : vector<16x8xf32>, vector<16x8xf32>, vector<16x8xf32>, vector<16x8xf32> -> vector<16x32xf32>
    %286 = arith.truncf %285 : vector<16x32xf32> to vector<16x32xbf16>
    %c1_73 = arith.constant 1 : index
    %c0_74 = arith.constant 0 : index
    %c0_75 = arith.constant 0 : index
    %287 = vector.load %arg3[%c1_73, %c0_74, %c0_75] : memref<2x32x32xbf16, #tpu.memory_space<vmem>>, vector<1x32x32xbf16>
    %288 = vector.shape_cast %287 : vector<1x32x32xbf16> to vector<32x32xbf16>
    %cst_76 = arith.constant dense<0.000000e+00> : vector<16x32xf32>
    %289 = tpu.matmul %286, %288, %cst_76 {dimension_numbers = #tpu.dot_dimension_numbers<[1], [0], [0], [1], [0, 0, 1, 1], [], []>} : vector<16x32xbf16>, vector<32x32xbf16>, vector<16x32xf32> -> vector<16x32xf32>
    %290 = vector.broadcast %184 : vector<1x32xf32> to vector<16x32xf32>
    %291 = arith.addf %289, %290 : vector<16x32xf32>
    %292 = arith.addf %180, %291 : vector<16x32xf32>
    %cst_77 = arith.constant dense<0.000000e+00> : vector<16xf32>
    %293 = vector.multi_reduction <add>, %292, %cst_77 [1] : vector<16x32xf32> to vector<16xf32>
    %294 = vector.shape_cast %293 : vector<16xf32> to vector<16x1xf32>
    %cst_78 = arith.constant 3.200000e+01 : f32
    %295 = vector.broadcast %cst_78 : f32 to vector<16x1xf32>
    %296 = arith.divf %294, %295 : vector<16x1xf32>
    %297 = vector.broadcast %296 : vector<16x1xf32> to vector<16x32xf32>
    %298 = arith.subf %292, %297 : vector<16x32xf32>
    %299 = arith.mulf %298, %298 : vector<16x32xf32>
    %cst_79 = arith.constant dense<0.000000e+00> : vector<16xf32>
    %300 = vector.multi_reduction <add>, %299, %cst_79 [1] : vector<16x32xf32> to vector<16xf32>
    %301 = vector.shape_cast %300 : vector<16xf32> to vector<16x1xf32>
    %cst_80 = arith.constant 3.200000e+01 : f32
    %302 = vector.broadcast %cst_80 : f32 to vector<16x1xf32>
    %303 = arith.divf %301, %302 : vector<16x1xf32>
    %304 = vector.broadcast %296 : vector<16x1xf32> to vector<16x32xf32>
    %305 = arith.subf %292, %304 : vector<16x32xf32>
    %cst_81 = arith.constant 9.99999974E-6 : f32
    %306 = vector.broadcast %cst_81 : f32 to vector<16x1xf32>
    %307 = arith.addf %303, %306 : vector<16x1xf32>
    %308 = math.rsqrt %307 : vector<16x1xf32>
    %309 = vector.broadcast %308 : vector<16x1xf32> to vector<16x32xf32>
    %310 = arith.mulf %305, %309 : vector<16x32xf32>
    %311 = vector.broadcast %185 : vector<1x32xf32> to vector<16x32xf32>
    %312 = arith.mulf %310, %311 : vector<16x32xf32>
    %313 = vector.broadcast %186 : vector<1x32xf32> to vector<16x32xf32>
    %314 = arith.addf %312, %313 : vector<16x32xf32>
    %315 = arith.truncf %314 : vector<16x32xf32> to vector<16x32xbf16>
    %c1_82 = arith.constant 1 : index
    %c0_83 = arith.constant 0 : index
    %c0_84 = arith.constant 0 : index
    %316 = vector.load %arg4[%c1_82, %c0_83, %c0_84] : memref<2x32x64xbf16, #tpu.memory_space<vmem>>, vector<1x32x64xbf16>
    %317 = vector.shape_cast %316 : vector<1x32x64xbf16> to vector<32x64xbf16>
    %cst_85 = arith.constant dense<0.000000e+00> : vector<16x64xf32>
    %318 = tpu.matmul %315, %317, %cst_85 {dimension_numbers = #tpu.dot_dimension_numbers<[1], [0], [0], [1], [0, 0, 1, 1], [], []>} : vector<16x32xbf16>, vector<32x64xbf16>, vector<16x64xf32> -> vector<16x64xf32>
    %319 = vector.broadcast %187 : vector<1x64xf32> to vector<16x64xf32>
    %320 = arith.addf %318, %319 : vector<16x64xf32>
    %cst_86 = arith.constant 0.000000e+00 : f32
    %321 = vector.broadcast %cst_86 : f32 to vector<16x64xf32>
    %322 = arith.maximumf %320, %321 : vector<16x64xf32>
    %323 = arith.truncf %322 : vector<16x64xf32> to vector<16x64xbf16>
    %c1_87 = arith.constant 1 : index
    %c0_88 = arith.constant 0 : index
    %c0_89 = arith.constant 0 : index
    %324 = vector.load %arg5[%c1_87, %c0_88, %c0_89] : memref<2x64x32xbf16, #tpu.memory_space<vmem>>, vector<1x64x32xbf16>
    %325 = vector.shape_cast %324 : vector<1x64x32xbf16> to vector<64x32xbf16>
    %cst_90 = arith.constant dense<0.000000e+00> : vector<16x32xf32>
    %326 = tpu.matmul %323, %325, %cst_90 {dimension_numbers = #tpu.dot_dimension_numbers<[1], [0], [0], [1], [0, 0, 1, 1], [], []>} : vector<16x64xbf16>, vector<64x32xbf16>, vector<16x32xf32> -> vector<16x32xf32>
    %327 = vector.broadcast %188 : vector<1x32xf32> to vector<16x32xf32>
    %328 = arith.addf %326, %327 : vector<16x32xf32>
    %329 = arith.addf %314, %328 : vector<16x32xf32>
    %cst_91 = arith.constant dense<0.000000e+00> : vector<16xf32>
    %330 = vector.multi_reduction <add>, %329, %cst_91 [1] : vector<16x32xf32> to vector<16xf32>
    %331 = vector.shape_cast %330 : vector<16xf32> to vector<16x1xf32>
    %cst_92 = arith.constant 3.200000e+01 : f32
    %332 = vector.broadcast %cst_92 : f32 to vector<16x1xf32>
    %333 = arith.divf %331, %332 : vector<16x1xf32>
    %334 = vector.broadcast %333 : vector<16x1xf32> to vector<16x32xf32>
    %335 = arith.subf %329, %334 : vector<16x32xf32>
    %336 = arith.mulf %335, %335 : vector<16x32xf32>
    %cst_93 = arith.constant dense<0.000000e+00> : vector<16xf32>
    %337 = vector.multi_reduction <add>, %336, %cst_93 [1] : vector<16x32xf32> to vector<16xf32>
    %338 = vector.shape_cast %337 : vector<16xf32> to vector<16x1xf32>
    %cst_94 = arith.constant 3.200000e+01 : f32
    %339 = vector.broadcast %cst_94 : f32 to vector<16x1xf32>
    %340 = arith.divf %338, %339 : vector<16x1xf32>
    %341 = vector.broadcast %333 : vector<16x1xf32> to vector<16x32xf32>
    %342 = arith.subf %329, %341 : vector<16x32xf32>
    %cst_95 = arith.constant 9.99999974E-6 : f32
    %343 = vector.broadcast %cst_95 : f32 to vector<16x1xf32>
    %344 = arith.addf %340, %343 : vector<16x1xf32>
    %345 = math.rsqrt %344 : vector<16x1xf32>
    %346 = vector.broadcast %345 : vector<16x1xf32> to vector<16x32xf32>
    %347 = arith.mulf %342, %346 : vector<16x32xf32>
    %348 = vector.broadcast %189 : vector<1x32xf32> to vector<16x32xf32>
    %349 = arith.mulf %347, %348 : vector<16x32xf32>
    %350 = vector.broadcast %190 : vector<1x32xf32> to vector<16x32xf32>
    %351 = arith.addf %349, %350 : vector<16x32xf32>
    %c0_96 = arith.constant 0 : index
    %c0_97 = arith.constant 0 : index
    %352 = vector.load %arg8[%c0_96, %c0_97] : memref<8x128xf32, #tpu.memory_space<vmem>>, vector<8x128xf32>
    %353 = vector.extract_strided_slice %352 {offsets = [0, 0], sizes = [1, 32], strides = [1, 1]} : vector<8x128xf32> to vector<1x32xf32>
    %354 = vector.extract_strided_slice %352 {offsets = [1, 0], sizes = [1, 32], strides = [1, 1]} : vector<8x128xf32> to vector<1x32xf32>
    %cst_98 = arith.constant dense<0.000000e+00> : vector<16xf32>
    %355 = vector.multi_reduction <add>, %351, %cst_98 [1] : vector<16x32xf32> to vector<16xf32>
    %356 = vector.shape_cast %355 : vector<16xf32> to vector<16x1xf32>
    %cst_99 = arith.constant 3.200000e+01 : f32
    %357 = vector.broadcast %cst_99 : f32 to vector<16x1xf32>
    %358 = arith.divf %356, %357 : vector<16x1xf32>
    %359 = vector.broadcast %358 : vector<16x1xf32> to vector<16x32xf32>
    %360 = arith.subf %351, %359 : vector<16x32xf32>
    %361 = arith.mulf %360, %360 : vector<16x32xf32>
    %cst_100 = arith.constant dense<0.000000e+00> : vector<16xf32>
    %362 = vector.multi_reduction <add>, %361, %cst_100 [1] : vector<16x32xf32> to vector<16xf32>
    %363 = vector.shape_cast %362 : vector<16xf32> to vector<16x1xf32>
    %cst_101 = arith.constant 3.200000e+01 : f32
    %364 = vector.broadcast %cst_101 : f32 to vector<16x1xf32>
    %365 = arith.divf %363, %364 : vector<16x1xf32>
    %366 = vector.broadcast %358 : vector<16x1xf32> to vector<16x32xf32>
    %367 = arith.subf %351, %366 : vector<16x32xf32>
    %cst_102 = arith.constant 9.99999974E-6 : f32
    %368 = vector.broadcast %cst_102 : f32 to vector<16x1xf32>
    %369 = arith.addf %365, %368 : vector<16x1xf32>
    %370 = math.rsqrt %369 : vector<16x1xf32>
    %371 = vector.broadcast %370 : vector<16x1xf32> to vector<16x32xf32>
    %372 = arith.mulf %367, %371 : vector<16x32xf32>
    %373 = vector.broadcast %353 : vector<1x32xf32> to vector<16x32xf32>
    %374 = arith.mulf %372, %373 : vector<16x32xf32>
    %375 = vector.broadcast %354 : vector<1x32xf32> to vector<16x32xf32>
    %376 = arith.addf %374, %375 : vector<16x32xf32>
    %377 = arith.truncf %376 : vector<16x32xf32> to vector<16x32xbf16>
    %c0_103 = arith.constant 0 : index
    %c0_104 = arith.constant 0 : index
    %378 = vector.load %arg7[%c0_103, %c0_104] : memref<32x128xbf16, #tpu.memory_space<vmem>>, vector<32x128xbf16>
    %cst_105 = arith.constant dense<0.000000e+00> : vector<16x128xf32>
    %379 = tpu.matmul %377, %378, %cst_105 {dimension_numbers = #tpu.dot_dimension_numbers<[1], [0], [0], [1], [0, 0, 1, 1], [], []>} : vector<16x32xbf16>, vector<32x128xbf16>, vector<16x128xf32> -> vector<16x128xf32>
    %380 = vector.extract_strided_slice %352 {offsets = [2, 0], sizes = [1, 128], strides = [1, 1]} : vector<8x128xf32> to vector<1x128xf32>
    %381 = vector.broadcast %380 : vector<1x128xf32> to vector<16x128xf32>
    %382 = arith.addf %379, %381 : vector<16x128xf32>
    %c0_106 = arith.constant 0 : index
    %c0_107 = arith.constant 0 : index
    %383 = vector.load %arg9[%c0_106, %c0_107] : memref<16x128xf32, #tpu.memory_space<vmem>>, vector<16x128xf32>
    tpu.vector_store %arg9[%c0_106, %c0_107], %382 {strides = array<i32>} : memref<16x128xf32, #tpu.memory_space<vmem>>, vector<16x128xf32>,
    return
  }
}

</mosaic_0001>

<llo_original>
// kernel: _lambda_.1
$region0: #{_lambda_.1}
  #allocation0 [shape = 'u32[]', space=smem, size = 0x4, offset = 0x4, fixed_abs, tag = 'smem constant byte address 0x4 - core index']
  #allocation1 [shape = 'u32[144,128]{1,0:T(1,128)}', space=vmem, size = 0x12000, scoped, tag = 'internal scratch']
  %s0 = inlined_call_operand.vmem [shape: s32[16,1], index: 0, kind: input, shape index: {}]
  %s1 = inlined_call_operand.vmem [shape: bf16[128,32], index: 1, kind: input, shape index: {}]
  %s2 = inlined_call_operand.vmem [shape: bf16[2,32,96], index: 2, kind: input, shape index: {}]
  %s3 = inlined_call_operand.hbm [shape: bf16[2,32,32], index: 3, kind: input, shape index: {}]
  %s4 = inlined_call_operand.hbm [shape: bf16[2,32,64], index: 4, kind: input, shape index: {}]
  %s5 = inlined_call_operand.vmem [shape: bf16[2,64,32], index: 5, kind: input, shape index: {}]
  %s6 = inlined_call_operand.vmem [shape: f32[2,8,128], index: 6, kind: input, shape index: {}]
  %s7 = inlined_call_operand.hbm [shape: bf16[32,128], index: 7, kind: input, shape index: {}]
  %s8 = inlined_call_operand.vmem [shape: f32[8,128], index: 8, kind: input, shape index: {}]
  %s9 = inlined_call_operand.hbm [shape: f32[16,128], index: 9, kind: output, shape index: {}]
  %s10 = sld [smem:[#allocation0]]
  $region58: #{_lambda_.1} parent=0
    _
  %s12 = ssub.s32 1, %s10
  %s13 = scalar_select 0, %s12, %s10
  $region1: #{_lambda_.1} parent=0
    #allocation2 [shape = 'u8[16384]{0}', space=vmem, size = 0x4000, scoped, tag = 'input window, operand 3, single buffered']
    #allocation3 [shape = 's32[1]{0}', space=sflag, size = 0x4, scoped, tag = 'scoped memory for _lambda_.1']
    #allocation4 [shape = 's32[1]{0}', space=sflag, size = 0x4, scoped, tag = 'scoped memory for _lambda_.1']
    #allocation5 [shape = 'u8[16384]{0}', space=vmem, size = 0x4000, scoped, tag = 'input window, operand 4, single buffered']
    #allocation6 [shape = 's32[1]{0}', space=sflag, size = 0x4, scoped, tag = 'scoped memory for _lambda_.1']
    #allocation7 [shape = 'u8[8192]{0}', space=vmem, size = 0x2000, scoped, tag = 'input window, operand 7, single buffered']
    #allocation8 [shape = 'u8[8192]{0}', space=vmem, size = 0x2000, scoped, tag = 'output window, operand 0, single buffered']
    %14 = vsyncpa [#allocation3], 0
    %15 = vsyncpa [#allocation6], 0
    %16 = vsyncpa [#allocation4], 0
    // Predicated region
    $region2: #{_lambda_.1} parent=1 // pred_check
      _
    $region3: #{_lambda_.1} parent=1 // pred_check_branch
      %18 = sbr.rel (0) target = $region5
    $region4: #{_lambda_.1} parent=1 // pred_region
      _
    $region5: #{_lambda_.1} parent=1 // pred_fallthru
      _
    // Predicated region
    $region6: #{_lambda_.1} parent=1 // pred_check
      _
    $region7: #{_lambda_.1} parent=1 // pred_check_branch
      %20 = sbr.rel (0) target = $region9
    $region8: #{_lambda_.1} parent=1 // pred_region
      _
    $region9: #{_lambda_.1} parent=1 // pred_fallthru
      _
    // Predicated region
    $region10: #{_lambda_.1} parent=1 // pred_check
      _
    $region11: #{_lambda_.1} parent=1 // pred_check_branch
      %22 = sbr.rel (0) target = $region13
    $region12: #{_lambda_.1} parent=1 // pred_region
      _
    $region13: #{_lambda_.1} parent=1 // pred_fallthru
      _
    // Predicated region
    $region14: #{_lambda_.1} parent=1 // pred_check
      _
    $region15: #{_lambda_.1} parent=1 // pred_check_branch
      %24 = sbr.rel (0) target = $region17
    $region16: #{_lambda_.1} parent=1 // pred_region
      %s26 = ssub.s32 512, 512
      %27 = vsyncadd [#allocation3], %s26
      %s28 = sshll.u32 [#allocation2], 4
      %s29 = int_to_ptr.vmem [resolvable:$true] %s28
      %34 = dma.hbm_to_vmem [thread:$0]  %s3, 512, %s29, [#allocation3], 64, 64, 4
    $region17: #{_lambda_.1} parent=1 // pred_fallthru
      _
    // Predicated region
    $region18: #{_lambda_.1} parent=1 // pred_check
      _
    $region19: #{_lambda_.1} parent=1 // pred_check_branch
      %36 = sbr.rel (0) target = $region21
    $region20: #{_lambda_.1} parent=1 // pred_region
      %s38 = ssub.s32 512, 512
      %39 = vsyncadd [#allocation6], %s38
      %s40 = sshll.u32 [#allocation5], 4
      %s41 = int_to_ptr.vmem [resolvable:$true] %s40
      %46 = dma.hbm_to_vmem [thread:$0]  %s4, 512, %s41, [#allocation6], 64, 64, 4
    $region21: #{_lambda_.1} parent=1 // pred_fallthru
      _
    // Predicated region
    $region22: #{_lambda_.1} parent=1 // pred_check
      _
    $region23: #{_lambda_.1} parent=1 // pred_check_branch
      %48 = sbr.rel (0) target = $region25
    $region24: #{_lambda_.1} parent=1 // pred_region
      _
    $region25: #{_lambda_.1} parent=1 // pred_fallthru
      _
    // Predicated region
    $region26: #{_lambda_.1} parent=1 // pred_check
      _
    $region27: #{_lambda_.1} parent=1 // pred_check_branch
      %50 = sbr.rel (0) target = $region29
    $region28: #{_lambda_.1} parent=1 // pred_region
      _
    $region29: #{_lambda_.1} parent=1 // pred_fallthru
      _
    // Predicated region
    $region30: #{_lambda_.1} parent=1 // pred_check
      _
    $region31: #{_lambda_.1} parent=1 // pred_check_branch
      %52 = sbr.rel (0) target = $region33
    $region32: #{_lambda_.1} parent=1 // pred_region
      %s54 = ssub.s32 256, 256
      %55 = vsyncadd [#allocation6], %s54
      %s56 = sshll.u32 [#allocation7], 4
      %s57 = int_to_ptr.vmem [resolvable:$true] %s56
      %62 = dma.hbm_to_vmem [thread:$0]  %s7, 256, %s57, [#allocation6], 64, 64, 4
    $region33: #{_lambda_.1} parent=1 // pred_fallthru
      _
    // Predicated region
    $region34: #{_lambda_.1} parent=1 // pred_check
      _
    $region35: #{_lambda_.1} parent=1 // pred_check_branch
      %64 = sbr.rel (0) target = $region37
    $region36: #{_lambda_.1} parent=1 // pred_region
      _
    $region37: #{_lambda_.1} parent=1 // pred_fallthru
      _
    // Predicated region
    $region38: #{_lambda_.1} parent=1 // pred_check
      _
    $region39: #{_lambda_.1} parent=1 // pred_check_branch
      %66 = sbr.rel (0) target = $region41
    $region40: #{_lambda_.1} parent=1 // pred_region
      %67 = dma.done [#allocation3], 512
    $region41: #{_lambda_.1} parent=1 // pred_fallthru
      _
    // Predicated region
    $region42: #{_lambda_.1} parent=1 // pred_check
      _
    $region43: #{_lambda_.1} parent=1 // pred_check_branch
      %69 = sbr.rel (0) target = $region45
    $region44: #{_lambda_.1} parent=1 // pred_region
      %70 = dma.done [#allocation6], 512
    $region45: #{_lambda_.1} parent=1 // pred_fallthru
      _
    // Predicated region
    $region46: #{_lambda_.1} parent=1 // pred_check
      _
    $region47: #{_lambda_.1} parent=1 // pred_check_branch
      %72 = sbr.rel (0) target = $region49
    $region48: #{_lambda_.1} parent=1 // pred_region
      %73 = dma.done [#allocation6], 256
    $region49: #{_lambda_.1} parent=1 // pred_fallthru
      _
    %v75 = vld [vmem:[%s0] sm:$0xff]
    %v76 = vld [vmem:[%s0 + $0x8] sm:$0xff]
    %v77 = vlaneseq
    %v78 = vand.u32 %v77, 127
    %79 = vset.pattern.permute.xlu0 0
    %80 = vperm.xlu0 %79, %v75
    %v81 = vpop.permute.xlu0 %80
    %82 = vset.pattern.permute.xlu0 0
    %83 = vperm.xlu0 %82, %v76
    %v84 = vpop.permute.xlu0 %83
    %vm85 = vcmp.eq.s32.totalorder %v78, %v81
    %vm86 = vcmp.eq.s32.totalorder %v78, %v84
    %v87 = vsel %vm85, 1.0, 0.0
    %v88 = vsel %vm86, 1.0, 0.0
    %v89 = vpack.c.bf16 %v88, %v87
    %v90 = vld [vmem:[%s1] sm:$0xf]
    %v91 = vld [vmem:[%s1 + $0x4] sm:$0xf]
    %v92 = vld [vmem:[%s1 + $0x8] sm:$0xf]
    %v93 = vld [vmem:[%s1 + $0xc] sm:$0xf]
    %v94 = vld [vmem:[%s1 + $0x10] sm:$0xf]
    %v95 = vld [vmem:[%s1 + $0x14] sm:$0xf]
    %v96 = vld [vmem:[%s1 + $0x18] sm:$0xf]
    %v97 = vld [vmem:[%s1 + $0x1c] sm:$0xf]
    %v98 = vld [vmem:[%s1 + $0x20] sm:$0xf]
    %v99 = vld [vmem:[%s1 + $0x24] sm:$0xf]
    %v100 = vld [vmem:[%s1 + $0x28] sm:$0xf]
    %v101 = vld [vmem:[%s1 + $0x2c] sm:$0xf]
    %v102 = vld [vmem:[%s1 + $0x30] sm:$0xf]
    %v103 = vld [vmem:[%s1 + $0x34] sm:$0xf]
    %v104 = vld [vmem:[%s1 + $0x38] sm:$0xf]
    %v105 = vld [vmem:[%s1 + $0x3c] sm:$0xf]
    %v122 = vunpack.c.l.b16 %v90
    %v123 = vunpack.c.l.b16 %v91
    %v124 = vunpack.c.l.b16 %v92
    %v125 = vunpack.c.l.b16 %v93
    %v126 = vunpack.c.l.b16 %v94
    %v127 = vunpack.c.l.b16 %v95
    %v128 = vunpack.c.l.b16 %v96
    %v129 = vunpack.c.l.b16 %v97
    %v130 = vunpack.c.l.b16 %v98
    %v131 = vunpack.c.l.b16 %v99
    %v132 = vunpack.c.l.b16 %v100
    %v133 = vunpack.c.l.b16 %v101
    %v134 = vunpack.c.l.b16 %v102
    %v135 = vunpack.c.l.b16 %v103
    %v136 = vunpack.c.l.b16 %v104
    %v137 = vunpack.c.l.b16 %v105
    %v138 = vpack.c.b16 %v123, %v122
    %v139 = vpack.c.b16 %v125, %v124
    %v140 = vpack.c.b16 %v127, %v126
    %v141 = vpack.c.b16 %v129, %v128
    %v142 = vpack.c.b16 %v131, %v130
    %v143 = vpack.c.b16 %v133, %v132
    %v144 = vpack.c.b16 %v135, %v134
    %v145 = vpack.c.b16 %v137, %v136
    %154 = vmatprep.subr.bf16.mxu0 0
    %155 = vmatpush1.bf16.msra.mxu0 %v138
    %156 = vmatprep.subr.bf16.mxu0 0
    %157 = vmatpush1.bf16.msra.mxu0 %v139
    %158 = vmatprep.subr.bf16.mxu0 0
    %159 = vmatpush1.bf16.msra.mxu0 %v140
    %160 = vmatprep.subr.bf16.mxu0 0
    %161 = vmatpush1.bf16.msra.mxu0 %v141
    %162 = vmatprep.subr.bf16.mxu0 0
    %163 = vmatpush1.bf16.msra.mxu0 %v142
    %164 = vmatprep.subr.bf16.mxu0 0
    %165 = vmatpush1.bf16.msra.mxu0 %v143
    %166 = vmatprep.subr.bf16.mxu0 0
    %167 = vmatpush1.bf16.msra.mxu0 %v144
    %168 = vmatprep.subr.bf16.mxu0 0
    %169 = vmatpush1.bf16.msra.mxu0 %v145
    %170 = vmatprep.subr.bf16.mxu0 0
    %171 = vmatpush1.bf16.msra.mxu0 0
    %172 = vmatprep.subr.bf16.mxu0 0
    %173 = vmatpush1.bf16.msra.mxu0 0
    %174 = vmatprep.subr.bf16.mxu0 0
    %175 = vmatpush1.bf16.msra.mxu0 0
    %176 = vmatprep.subr.bf16.mxu0 0
    %177 = vmatpush1.bf16.msra.mxu0 0
    %178 = vmatprep.subr.bf16.mxu0 0
    %179 = vmatpush1.bf16.msra.mxu0 0
    %180 = vmatprep.subr.bf16.mxu0 0
    %181 = vmatpush1.bf16.msra.mxu0 0
    %182 = vmatprep.subr.bf16.mxu0 0
    %183 = vmatpush1.bf16.msra.mxu0 0
    %184 = vmatprep.subr.bf16.mxu0 0
    %185 = vmatpush1.bf16.msra.mxu0 0
    %186 = vmatprep.mubr.bf16.mxu0 0
    %187 = vmatmul.mubr.bf16.gmra.mrb[0].mxu0 %v89
    %v188 = vpop.f32.mrb[0].mxu0
    %v189 = vadd.f32 0.0, %v188
    %v190 = vpop.f32.mrb[0].mxu0
    %v191 = vpop.f32.mrb[0].mxu0
    %v192 = vadd.f32 0.0, %v191
    %v193 = vpop.f32.mrb[0].mxu0
    %194 = vdwg.mxu0
    %v195 = vld [vmem:[%s6] sm:$0xff]
    %v196 = vpack.c.bf16 %v192, %v189
    %v197 = vld [vmem:[%s2] sm:$0xf]
    %v198 = vld [vmem:[%s2 + $0x4] sm:$0xf]
    %v199 = vld [vmem:[%s2 + $0x8] sm:$0xf]
    %v200 = vld [vmem:[%s2 + $0xc] sm:$0xf]
    %v201 = vlaneseq
    %v202 = vshrl.u32 %v201, 7
    %v203 = vsub.s32 0, %v202
    %v204 = vrot.slane %v195, %v203
    %v209 = vunpack.c.l.b16 %v197
    %v210 = vunpack.c.l.b16 %v198
    %v211 = vunpack.c.l.b16 %v199
    %v212 = vunpack.c.l.b16 %v200
    %v213 = vpack.c.b16 %v210, %v209
    %v214 = vpack.c.b16 %v212, %v211
    %vm217 = vcmask 261120
    %v219 = vsel %vm217, %v196, 0
    %221 = vmatprep.subr.bf16.mxu0 0
    %222 = vmatpush1.bf16.msra.mxu0 %v213
    %223 = vmatprep.subr.bf16.mxu0 0
    %224 = vmatpush1.bf16.msra.mxu0 %v214
    %225 = vmatprep.subr.bf16.mxu0 0
    %226 = vmatpush1.bf16.msra.mxu0 0
    %227 = vmatprep.subr.bf16.mxu0 0
    %228 = vmatpush1.bf16.msra.mxu0 0
    %229 = vmatprep.subr.bf16.mxu0 0
    %230 = vmatpush1.bf16.msra.mxu0 0
    %231 = vmatprep.subr.bf16.mxu0 0
    %232 = vmatpush1.bf16.msra.mxu0 0
    %233 = vmatprep.subr.bf16.mxu0 0
    %234 = vmatpush1.bf16.msra.mxu0 0
    %235 = vmatprep.subr.bf16.mxu0 0
    %236 = vmatpush1.bf16.msra.mxu0 0
    %237 = vmatprep.subr.bf16.mxu0 0
    %238 = vmatpush1.bf16.msra.mxu0 0
    %239 = vmatprep.subr.bf16.mxu0 0
    %240 = vmatpush1.bf16.msra.mxu0 0
    %241 = vmatprep.subr.bf16.mxu0 0
    %242 = vmatpush1.bf16.msra.mxu0 0
    %243 = vmatprep.subr.bf16.mxu0 0
    %244 = vmatpush1.bf16.msra.mxu0 0
    %245 = vmatprep.subr.bf16.mxu0 0
    %246 = vmatpush1.bf16.msra.mxu0 0
    %247 = vmatprep.subr.bf16.mxu0 0
    %248 = vmatpush1.bf16.msra.mxu0 0
    %249 = vmatprep.subr.bf16.mxu0 0
    %250 = vmatpush1.bf16.msra.mxu0 0
    %251 = vmatprep.subr.bf16.mxu0 0
    %252 = vmatpush1.bf16.msra.mxu0 0
    %253 = vmatprep.mubr.bf16.mxu0 0
    %254 = vmatmul.mubr.bf16.gmra.mrb[0].mxu0 %v219
    %v255 = vpop.f32.mrb[0].mxu0
    %v256 = vadd.f32 %v204, %v255
    %v257 = vpop.f32.mrb[0].mxu0
    %v258 = vpop.f32.mrb[0].mxu0
    %v259 = vadd.f32 %v204, %v258
    %v260 = vpop.f32.mrb[0].mxu0
    %261 = vdwg.mxu0
    %v262 = vpack.c.bf16 %v256, %v256
    %v263 = vpack.c.bf16 %v259, %v259
    %265 = vrot.lane.b32.xlu0 %v262, 96
    %v266 = vpop.permute.xlu0 %265
    %vm267 = vcmask 64512
    %v269 = vsel %vm267, %v262, 0
    %v272 = vsel %vm267, %v266, 0
    %274 = vmatprep.subr.bf16.mxu0 0
    %275 = vmatpush1.bf16.xpose.msra.mxu0 %v272
    %276 = vmatprep.subr.bf16.mxu0 0
    %277 = vmatpush1.bf16.xpose.msra.mxu0 0
    %278 = vmatprep.subr.bf16.mxu0 0
    %279 = vmatpush1.bf16.xpose.msra.mxu0 0
    %280 = vmatprep.subr.bf16.mxu0 0
    %281 = vmatpush1.bf16.xpose.msra.mxu0 0
    %282 = vmatprep.subr.bf16.mxu0 0
    %283 = vmatpush1.bf16.xpose.msra.mxu0 0
    %284 = vmatprep.subr.bf16.mxu0 0
    %285 = vmatpush1.bf16.xpose.msra.mxu0 0
    %286 = vmatprep.subr.bf16.mxu0 0
    %287 = vmatpush1.bf16.xpose.msra.mxu0 0
    %288 = vmatprep.subr.bf16.mxu0 0
    %289 = vmatpush1.bf16.xpose.msra.mxu0 0
    %290 = vmatprep.subr.bf16.mxu0 0
    %291 = vmatpush1.bf16.xpose.msra.mxu0 0
    %292 = vmatprep.subr.bf16.mxu0 0
    %293 = vmatpush1.bf16.xpose.msra.mxu0 0
    %294 = vmatprep.subr.bf16.mxu0 0
    %295 = vmatpush1.bf16.xpose.msra.mxu0 0
    %296 = vmatprep.subr.bf16.mxu0 0
    %297 = vmatpush1.bf16.xpose.msra.mxu0 0
    %298 = vmatprep.subr.bf16.mxu0 0
    %299 = vmatpush1.bf16.xpose.msra.mxu0 0
    %300 = vmatprep.subr.bf16.mxu0 0
    %301 = vmatpush1.bf16.xpose.msra.mxu0 0
    %302 = vmatprep.subr.bf16.mxu0 0
    %303 = vmatpush1.bf16.xpose.msra.mxu0 0
    %304 = vmatprep.subr.bf16.mxu0 0
    %305 = vmatpush1.bf16.xpose.msra.mxu0 0
    %306 = vmatprep.mubr.bf16.mxu0 0
    %307 = vmatmul.mubr.bf16.gmra.mrb[0].mxu0 %v269
    %v308 = vpop.f32.mrb[0].mxu0
    %v309 = vadd.f32 0.0, %v308
    %v310 = vpop.f32.mrb[0].mxu0
    %v311 = vpop.f32.mrb[0].mxu0
    %v312 = vpop.f32.mrb[0].mxu0
    %313 = vdwg.mxu0
    %315 = vrot.lane.b32.xlu0 %v263, 96
    %v316 = vpop.permute.xlu0 %315
    %v318 = vsel %vm267, %v263, 0
    %v321 = vsel %vm267, %v316, 0
    %323 = vmatprep.subr.bf16.mxu0 0
    %324 = vmatpush1.bf16.xpose.msra.mxu0 %v321
    %325 = vmatprep.subr.bf16.mxu0 0
    %326 = vmatpush1.bf16.xpose.msra.mxu0 0
    %327 = vmatprep.subr.bf16.mxu0 0
    %328 = vmatpush1.bf16.xpose.msra.mxu0 0
    %329 = vmatprep.subr.bf16.mxu0 0
    %330 = vmatpush1.bf16.xpose.msra.mxu0 0
    %331 = vmatprep.subr.bf16.mxu0 0
    %332 = vmatpush1.bf16.xpose.msra.mxu0 0
    %333 = vmatprep.subr.bf16.mxu0 0
    %334 = vmatpush1.bf16.xpose.msra.mxu0 0
    %335 = vmatprep.subr.bf16.mxu0 0
    %336 = vmatpush1.bf16.xpose.msra.mxu0 0
    %337 = vmatprep.subr.bf16.mxu0 0
    %338 = vmatpush1.bf16.xpose.msra.mxu0 0
    %339 = vmatprep.subr.bf16.mxu0 0
    %340 = vmatpush1.bf16.xpose.msra.mxu0 0
    %341 = vmatprep.subr.bf16.mxu0 0
    %342 = vmatpush1.bf16.xpose.msra.mxu0 0
    %343 = vmatprep.subr.bf16.mxu0 0
    %344 = vmatpush1.bf16.xpose.msra.mxu0 0
    %345 = vmatprep.subr.bf16.mxu0 0
    %346 = vmatpush1.bf16.xpose.msra.mxu0 0
    %347 = vmatprep.subr.bf16.mxu0 0
    %348 = vmatpush1.bf16.xpose.msra.mxu0 0
    %349 = vmatprep.subr.bf16.mxu0 0
    %350 = vmatpush1.bf16.xpose.msra.mxu0 0
    %351 = vmatprep.subr.bf16.mxu0 0
    %352 = vmatpush1.bf16.xpose.msra.mxu0 0
    %353 = vmatprep.subr.bf16.mxu0 0
    %354 = vmatpush1.bf16.xpose.msra.mxu0 0
    %355 = vmatprep.mubr.bf16.mxu0 0
    %356 = vmatmul.mubr.bf16.gmra.mrb[0].mxu0 %v318
    %v357 = vpop.f32.mrb[0].mxu0
    %v358 = vadd.f32 0.0, %v357
    %v359 = vpop.f32.mrb[0].mxu0
    %v360 = vpop.f32.mrb[0].mxu0
    %v361 = vpop.f32.mrb[0].mxu0
    %362 = vdwg.mxu0
    %v363 = vsel %vm267, %v309, -inf
    %364 = vmax.xlane.f32.xlu0 %v363
    %v365 = vpop.xlane.xlu0 %364
    %v366 = vsel %vm267, %v358, -inf
    %367 = vmax.xlane.f32.xlu0 %v366
    %v368 = vpop.xlane.xlu0 %367
    %v369 = vsub.f32 %v309, %v365
    %v370 = vsub.f32 %v358, %v368
    %v371 = vmul.f32 %v369, 1.442695
    %v372 = vpow.pop %v371
    %v373 = vmul.f32 %v370, 1.442695
    %v374 = vpow.pop %v373
    %v375 = vsel %vm267, %v372, 0.0
    %376 = vadd.xlane.f32.xlu0 %v375
    %v377 = vpop.xlane.xlu0 %376
    %v378 = vsel %vm267, %v374, 0.0
    %379 = vadd.xlane.f32.xlu0 %v378
    %v380 = vpop.xlane.xlu0 %379
    %v381 = vrcp.pop %v377
    %v382 = vmul.f32 %v372, %v381
    %v383 = vrcp.pop %v380
    %v384 = vmul.f32 %v374, %v383
    %v385 = vpack.c.bf16 %v382, %v382
    %v386 = vpack.c.bf16 %v384, %v384
    %387 = vrot.lane.b32.xlu0 %v262, 64
    %v388 = vpop.permute.xlu0 %387
    %v390 = vsel %vm267, %v385, 0
    %vm392 = vcmask 1043456
    %v394 = vsel %vm392, %v388, 0
    %396 = vmatprep.subr.bf16.mxu0 0
    %397 = vmatpush1.bf16.msra.mxu0 %v394
    %398 = vmatprep.subr.bf16.mxu0 0
    %399 = vmatpush1.bf16.msra.mxu0 0
    %400 = vmatprep.subr.bf16.mxu0 0
    %401 = vmatpush1.bf16.msra.mxu0 0
    %402 = vmatprep.subr.bf16.mxu0 0
    %403 = vmatpush1.bf16.msra.mxu0 0
    %404 = vmatprep.subr.bf16.mxu0 0
    %405 = vmatpush1.bf16.msra.mxu0 0
    %406 = vmatprep.subr.bf16.mxu0 0
    %407 = vmatpush1.bf16.msra.mxu0 0
    %408 = vmatprep.subr.bf16.mxu0 0
    %409 = vmatpush1.bf16.msra.mxu0 0
    %410 = vmatprep.subr.bf16.mxu0 0
    %411 = vmatpush1.bf16.msra.mxu0 0
    %412 = vmatprep.subr.bf16.mxu0 0
    %413 = vmatpush1.bf16.msra.mxu0 0
    %414 = vmatprep.subr.bf16.mxu0 0
    %415 = vmatpush1.bf16.msra.mxu0 0
    %416 = vmatprep.subr.bf16.mxu0 0
    %417 = vmatpush1.bf16.msra.mxu0 0
    %418 = vmatprep.subr.bf16.mxu0 0
    %419 = vmatpush1.bf16.msra.mxu0 0
    %420 = vmatprep.subr.bf16.mxu0 0
    %421 = vmatpush1.bf16.msra.mxu0 0
    %422 = vmatprep.subr.bf16.mxu0 0
    %423 = vmatpush1.bf16.msra.mxu0 0
    %424 = vmatprep.subr.bf16.mxu0 0
    %425 = vmatpush1.bf16.msra.mxu0 0
    %426 = vmatprep.subr.bf16.mxu0 0
    %427 = vmatpush1.bf16.msra.mxu0 0
    %428 = vmatprep.mubr.bf16.mxu0 0
    %429 = vmatmul.mubr.bf16.gmra.mrb[0].mxu0 %v390
    %v430 = vpop.f32.mrb[0].mxu0
    %v431 = vadd.f32 0.0, %v430
    %v432 = vpop.f32.mrb[0].mxu0
    %v433 = vpop.f32.mrb[0].mxu0
    %v434 = vpop.f32.mrb[0].mxu0
    %435 = vdwg.mxu0
    %436 = vrot.lane.b32.xlu0 %v263, 64
    %v437 = vpop.permute.xlu0 %436
    %v439 = vsel %vm267, %v386, 0
    %v442 = vsel %vm392, %v437, 0
    %444 = vmatprep.subr.bf16.mxu0 0
    %445 = vmatpush1.bf16.msra.mxu0 %v442
    %446 = vmatprep.subr.bf16.mxu0 0
    %447 = vmatpush1.bf16.msra.mxu0 0
    %448 = vmatprep.subr.bf16.mxu0 0
    %449 = vmatpush1.bf16.msra.mxu0 0
    %450 = vmatprep.subr.bf16.mxu0 0
    %451 = vmatpush1.bf16.msra.mxu0 0
    %452 = vmatprep.subr.bf16.mxu0 0
    %453 = vmatpush1.bf16.msra.mxu0 0
    %454 = vmatprep.subr.bf16.mxu0 0
    %455 = vmatpush1.bf16.msra.mxu0 0
    %456 = vmatprep.subr.bf16.mxu0 0
    %457 = vmatpush1.bf16.msra.mxu0 0
    %458 = vmatprep.subr.bf16.mxu0 0
    %459 = vmatpush1.bf16.msra.mxu0 0
    %460 = vmatprep.subr.bf16.mxu0 0
    %461 = vmatpush1.bf16.msra.mxu0 0
    %462 = vmatprep.subr.bf16.mxu0 0
    %463 = vmatpush1.bf16.msra.mxu0 0
    %464 = vmatprep.subr.bf16.mxu0 0
    %465 = vmatpush1.bf16.msra.mxu0 0
    %466 = vmatprep.subr.bf16.mxu0 0
    %467 = vmatpush1.bf16.msra.mxu0 0
    %468 = vmatprep.subr.bf16.mxu0 0
    %469 = vmatpush1.bf16.msra.mxu0 0
    %470 = vmatprep.subr.bf16.mxu0 0
    %471 = vmatpush1.bf16.msra.mxu0 0
    %472 = vmatprep.subr.bf16.mxu0 0
    %473 = vmatpush1.bf16.msra.mxu0 0
    %474 = vmatprep.subr.bf16.mxu0 0
    %475 = vmatpush1.bf16.msra.mxu0 0
    %476 = vmatprep.mubr.bf16.mxu0 0
    %477 = vmatmul.mubr.bf16.gmra.mrb[0].mxu0 %v439
    %v478 = vpop.f32.mrb[0].mxu0
    %v479 = vadd.f32 0.0, %v478
    %v480 = vpop.f32.mrb[0].mxu0
    %v481 = vpop.f32.mrb[0].mxu0
    %v482 = vpop.f32.mrb[0].mxu0
    %483 = vdwg.mxu0
    %484 = vrot.lane.b32.xlu0 %v262, 120
    %v485 = vpop.permute.xlu0 %484
    %486 = vrot.lane.b32.xlu0 %v262, 88
    %v487 = vpop.permute.xlu0 %486
    %v489 = vsel %vm267, %v485, 0
    %v492 = vsel %vm267, %v487, 0
    %494 = vmatprep.subr.bf16.mxu0 0
    %495 = vmatpush1.bf16.xpose.msra.mxu0 %v492
    %496 = vmatprep.subr.bf16.mxu0 0
    %497 = vmatpush1.bf16.xpose.msra.mxu0 0
    %498 = vmatprep.subr.bf16.mxu0 0
    %499 = vmatpush1.bf16.xpose.msra.mxu0 0
    %500 = vmatprep.subr.bf16.mxu0 0
    %501 = vmatpush1.bf16.xpose.msra.mxu0 0
    %502 = vmatprep.subr.bf16.mxu0 0
    %503 = vmatpush1.bf16.xpose.msra.mxu0 0
    %504 = vmatprep.subr.bf16.mxu0 0
    %505 = vmatpush1.bf16.xpose.msra.mxu0 0
    %506 = vmatprep.subr.bf16.mxu0 0
    %507 = vmatpush1.bf16.xpose.msra.mxu0 0
    %508 = vmatprep.subr.bf16.mxu0 0
    %509 = vmatpush1.bf16.xpose.msra.mxu0 0
    %510 = vmatprep.subr.bf16.mxu0 0
    %511 = vmatpush1.bf16.xpose.msra.mxu0 0
    %512 = vmatprep.subr.bf16.mxu0 0
    %513 = vmatpush1.bf16.xpose.msra.mxu0 0
    %514 = vmatprep.subr.bf16.mxu0 0
    %515 = vmatpush1.bf16.xpose.msra.mxu0 0
    %516 = vmatprep.subr.bf16.mxu0 0
    %517 = vmatpush1.bf16.xpose.msra.mxu0 0
    %518 = vmatprep.subr.bf16.mxu0 0
    %519 = vmatpush1.bf16.xpose.msra.mxu0 0
    %520 = vmatprep.subr.bf16.mxu0 0
    %521 = vmatpush1.bf16.xpose.msra.mxu0 0
    %522 = vmatprep.subr.bf16.mxu0 0
    %523 = vmatpush1.bf16.xpose.msra.mxu0 0
    %524 = vmatprep.subr.bf16.mxu0 0
    %525 = vmatpush1.bf16.xpose.msra.mxu0 0
    %526 = vmatprep.mubr.bf16.mxu0 0
    %527 = vmatmul.mubr.bf16.gmra.mrb[0].mxu0 %v489
    %v528 = vpop.f32.mrb[0].mxu0
    %v529 = vadd.f32 0.0, %v528
    %v530 = vpop.f32.mrb[0].mxu0
    %v531 = vpop.f32.mrb[0].mxu0
    %v532 = vpop.f32.mrb[0].mxu0
    %533 = vdwg.mxu0
    %534 = vrot.lane.b32.xlu0 %v263, 120
    %v535 = vpop.permute.xlu0 %534
    %536 = vrot.lane.b32.xlu0 %v263, 88
    %v537 = vpop.permute.xlu0 %536
    %v539 = vsel %vm267, %v535, 0
    %v542 = vsel %vm267, %v537, 0
    %544 = vmatprep.subr.bf16.mxu0 0
    %545 = vmatpush1.bf16.xpose.msra.mxu0 %v542
    %546 = vmatprep.subr.bf16.mxu0 0
    %547 = vmatpush1.bf16.xpose.msra.mxu0 0
    %548 = vmatprep.subr.bf16.mxu0 0
    %549 = vmatpush1.bf16.xpose.msra.mxu0 0
    %550 = vmatprep.subr.bf16.mxu0 0
    %551 = vmatpush1.bf16.xpose.msra.mxu0 0
    %552 = vmatprep.subr.bf16.mxu0 0
    %553 = vmatpush1.bf16.xpose.msra.mxu0 0
    %554 = vmatprep.subr.bf16.mxu0 0
    %555 = vmatpush1.bf16.xpose.msra.mxu0 0
    %556 = vmatprep.subr.bf16.mxu0 0
    %557 = vmatpush1.bf16.xpose.msra.mxu0 0
    %558 = vmatprep.subr.bf16.mxu0 0
    %559 = vmatpush1.bf16.xpose.msra.mxu0 0
    %560 = vmatprep.subr.bf16.mxu0 0
    %561 = vmatpush1.bf16.xpose.msra.mxu0 0
    %562 = vmatprep.subr.bf16.mxu0 0
    %563 = vmatpush1.bf16.xpose.msra.mxu0 0
    %564 = vmatprep.subr.bf16.mxu0 0
    %565 = vmatpush1.bf16.xpose.msra.mxu0 0
    %566 = vmatprep.subr.bf16.mxu0 0
    %567 = vmatpush1.bf16.xpose.msra.mxu0 0
    %568 = vmatprep.subr.bf16.mxu0 0
    %569 = vmatpush1.bf16.xpose.msra.mxu0 0
    %570 = vmatprep.subr.bf16.mxu0 0
    %571 = vmatpush1.bf16.xpose.msra.mxu0 0
    %572 = vmatprep.subr.bf16.mxu0 0
    %573 = vmatpush1.bf16.xpose.msra.mxu0 0
    %574 = vmatprep.subr.bf16.mxu0 0
    %575 = vmatpush1.bf16.xpose.msra.mxu0 0
    %576 = vmatprep.mubr.bf16.mxu0 0
    %577 = vmatmul.mubr.bf16.gmra.mrb[0].mxu0 %v539
    %v578 = vpop.f32.mrb[0].mxu0
    %v579 = vadd.f32 0.0, %v578
    %v580 = vpop.f32.mrb[0].mxu0
    %v581 = vpop.f32.mrb[0].mxu0
    %v582 = vpop.f32.mrb[0].mxu0
    %583 = vdwg.mxu0
    %v584 = vsel %vm267, %v529, -inf
    %585 = vmax.xlane.f32.xlu0 %v584
    %v586 = vpop.xlane.xlu0 %585
    %v587 = vsel %vm267, %v579, -inf
    %588 = vmax.xlane.f32.xlu0 %v587
    %v589 = vpop.xlane.xlu0 %588
    %v590 = vsub.f32 %v529, %v586
    %v591 = vsub.f32 %v579, %v589
    %v592 = vmul.f32 %v590, 1.442695
    %v593 = vpow.pop %v592
    %v594 = vmul.f32 %v591, 1.442695
    %v595 = vpow.pop %v594
    %v596 = vsel %vm267, %v593, 0.0
    %597 = vadd.xlane.f32.xlu0 %v596
    %v598 = vpop.xlane.xlu0 %597
    %v599 = vsel %vm267, %v595, 0.0
    %600 = vadd.xlane.f32.xlu0 %v599
    %v601 = vpop.xlane.xlu0 %600
    %v602 = vrcp.pop %v598
    %v603 = vmul.f32 %v593, %v602
    %v604 = vrcp.pop %v601
    %v605 = vmul.f32 %v595, %v604
    %v606 = vpack.c.bf16 %v603, %v603
    %v607 = vpack.c.bf16 %v605, %v605
    %608 = vrot.lane.b32.xlu0 %v262, 56
    %v609 = vpop.permute.xlu0 %608
    %v611 = vsel %vm267, %v606, 0
    %v614 = vsel %vm392, %v609, 0
    %616 = vmatprep.subr.bf16.mxu0 0
    %617 = vmatpush1.bf16.msra.mxu0 %v614
    %618 = vmatprep.subr.bf16.mxu0 0
    %619 = vmatpush1.bf16.msra.mxu0 0
    %620 = vmatprep.subr.bf16.mxu0 0
    %621 = vmatpush1.bf16.msra.mxu0 0
    %622 = vmatprep.subr.bf16.mxu0 0
    %623 = vmatpush1.bf16.msra.mxu0 0
    %624 = vmatprep.subr.bf16.mxu0 0
    %625 = vmatpush1.bf16.msra.mxu0 0
    %626 = vmatprep.subr.bf16.mxu0 0
    %627 = vmatpush1.bf16.msra.mxu0 0
    %628 = vmatprep.subr.bf16.mxu0 0
    %629 = vmatpush1.bf16.msra.mxu0 0
    %630 = vmatprep.subr.bf16.mxu0 0
    %631 = vmatpush1.bf16.msra.mxu0 0
    %632 = vmatprep.subr.bf16.mxu0 0
    %633 = vmatpush1.bf16.msra.mxu0 0
    %634 = vmatprep.subr.bf16.mxu0 0
    %635 = vmatpush1.bf16.msra.mxu0 0
    %636 = vmatprep.subr.bf16.mxu0 0
    %637 = vmatpush1.bf16.msra.mxu0 0
    %638 = vmatprep.subr.bf16.mxu0 0
    %639 = vmatpush1.bf16.msra.mxu0 0
    %640 = vmatprep.subr.bf16.mxu0 0
    %641 = vmatpush1.bf16.msra.mxu0 0
    %642 = vmatprep.subr.bf16.mxu0 0
    %643 = vmatpush1.bf16.msra.mxu0 0
    %644 = vmatprep.subr.bf16.mxu0 0
    %645 = vmatpush1.bf16.msra.mxu0 0
    %646 = vmatprep.subr.bf16.mxu0 0
    %647 = vmatpush1.bf16.msra.mxu0 0
    %648 = vmatprep.mubr.bf16.mxu0 0
    %649 = vmatmul.mubr.bf16.gmra.mrb[0].mxu0 %v611
    %v650 = vpop.f32.mrb[0].mxu0
    %v651 = vadd.f32 0.0, %v650
    %v652 = vpop.f32.mrb[0].mxu0
    %v653 = vpop.f32.mrb[0].mxu0
    %v654 = vpop.f32.mrb[0].mxu0
    %655 = vdwg.mxu0
    %656 = vrot.lane.b32.xlu0 %v263, 56
    %v657 = vpop.permute.xlu0 %656
    %v659 = vsel %vm267, %v607, 0
    %v662 = vsel %vm392, %v657, 0
    %664 = vmatprep.subr.bf16.mxu0 0
    %665 = vmatpush1.bf16.msra.mxu0 %v662
    %666 = vmatprep.subr.bf16.mxu0 0
    %667 = vmatpush1.bf16.msra.mxu0 0
    %668 = vmatprep.subr.bf16.mxu0 0
    %669 = vmatpush1.bf16.msra.mxu0 0
    %670 = vmatprep.subr.bf16.mxu0 0
    %671 = vmatpush1.bf16.msra.mxu0 0
    %672 = vmatprep.subr.bf16.mxu0 0
    %673 = vmatpush1.bf16.msra.mxu0 0
    %674 = vmatprep.subr.bf16.mxu0 0
    %675 = vmatpush1.bf16.msra.mxu0 0
    %676 = vmatprep.subr.bf16.mxu0 0
    %677 = vmatpush1.bf16.msra.mxu0 0
    %678 = vmatprep.subr.bf16.mxu0 0
    %679 = vmatpush1.bf16.msra.mxu0 0
    %680 = vmatprep.subr.bf16.mxu0 0
    %681 = vmatpush1.bf16.msra.mxu0 0
    %682 = vmatprep.subr.bf16.mxu0 0
    %683 = vmatpush1.bf16.msra.mxu0 0
    %684 = vmatprep.subr.bf16.mxu0 0
    %685 = vmatpush1.bf16.msra.mxu0 0
    %686 = vmatprep.subr.bf16.mxu0 0
    %687 = vmatpush1.bf16.msra.mxu0 0
    %688 = vmatprep.subr.bf16.mxu0 0
    %689 = vmatpush1.bf16.msra.mxu0 0
    %690 = vmatprep.subr.bf16.mxu0 0
    %691 = vmatpush1.bf16.msra.mxu0 0
    %692 = vmatprep.subr.bf16.mxu0 0
    %693 = vmatpush1.bf16.msra.mxu0 0
    %694 = vmatprep.subr.bf16.mxu0 0
    %695 = vmatpush1.bf16.msra.mxu0 0
    %696 = vmatprep.mubr.bf16.mxu0 0
    %697 = vmatmul.mubr.bf16.gmra.mrb[0].mxu0 %v659
    %v698 = vpop.f32.mrb[0].mxu0
    %v699 = vadd.f32 0.0, %v698
    %v700 = vpop.f32.mrb[0].mxu0
    %v701 = vpop.f32.mrb[0].mxu0
    %v702 = vpop.f32.mrb[0].mxu0
    %703 = vdwg.mxu0
    %704 = vrot.lane.b32.xlu0 %v262, 112
    %v705 = vpop.permute.xlu0 %704
    %706 = vrot.lane.b32.xlu0 %v262, 80
    %v707 = vpop.permute.xlu0 %706
    %v709 = vsel %vm267, %v705, 0
    %v712 = vsel %vm267, %v707, 0
    %714 = vmatprep.subr.bf16.mxu0 0
    %715 = vmatpush1.bf16.xpose.msra.mxu0 %v712
    %716 = vmatprep.subr.bf16.mxu0 0
    %717 = vmatpush1.bf16.xpose.msra.mxu0 0
    %718 = vmatprep.subr.bf16.mxu0 0
    %719 = vmatpush1.bf16.xpose.msra.mxu0 0
    %720 = vmatprep.subr.bf16.mxu0 0
    %721 = vmatpush1.bf16.xpose.msra.mxu0 0
    %722 = vmatprep.subr.bf16.mxu0 0
    %723 = vmatpush1.bf16.xpose.msra.mxu0 0
    %724 = vmatprep.subr.bf16.mxu0 0
    %725 = vmatpush1.bf16.xpose.msra.mxu0 0
    %726 = vmatprep.subr.bf16.mxu0 0
    %727 = vmatpush1.bf16.xpose.msra.mxu0 0
    %728 = vmatprep.subr.bf16.mxu0 0
    %729 = vmatpush1.bf16.xpose.msra.mxu0 0
    %730 = vmatprep.subr.bf16.mxu0 0
    %731 = vmatpush1.bf16.xpose.msra.mxu0 0
    %732 = vmatprep.subr.bf16.mxu0 0
    %733 = vmatpush1.bf16.xpose.msra.mxu0 0
    %734 = vmatprep.subr.bf16.mxu0 0
    %735 = vmatpush1.bf16.xpose.msra.mxu0 0
    %736 = vmatprep.subr.bf16.mxu0 0
    %737 = vmatpush1.bf16.xpose.msra.mxu0 0
    %738 = vmatprep.subr.bf16.mxu0 0
    %739 = vmatpush1.bf16.xpose.msra.mxu0 0
    %740 = vmatprep.subr.bf16.mxu0 0
    %741 = vmatpush1.bf16.xpose.msra.mxu0 0
    %742 = vmatprep.subr.bf16.mxu0 0
    %743 = vmatpush1.bf16.xpose.msra.mxu0 0
    %744 = vmatprep.subr.bf16.mxu0 0
    %745 = vmatpush1.bf16.xpose.msra.mxu0 0
    %746 = vmatprep.mubr.bf16.mxu0 0
    %747 = vmatmul.mubr.bf16.gmra.mrb[0].mxu0 %v709
    %v748 = vpop.f32.mrb[0].mxu0
    %v749 = vadd.f32 0.0, %v748
    %v750 = vpop.f32.mrb[0].mxu0
    %v751 = vpop.f32.mrb[0].mxu0
    %v752 = vpop.f32.mrb[0].mxu0
    %753 = vdwg.mxu0
    %754 = vrot.lane.b32.xlu0 %v263, 112
    %v755 = vpop.permute.xlu0 %754
    %756 = vrot.lane.b32.xlu0 %v263, 80
    %v757 = vpop.permute.xlu0 %756
    %v759 = vsel %vm267, %v755, 0
    %v762 = vsel %vm267, %v757, 0
    %764 = vmatprep.subr.bf16.mxu0 0
    %765 = vmatpush1.bf16.xpose.msra.mxu0 %v762
    %766 = vmatprep.subr.bf16.mxu0 0
    %767 = vmatpush1.bf16.xpose.msra.mxu0 0
    %768 = vmatprep.subr.bf16.mxu0 0
    %769 = vmatpush1.bf16.xpose.msra.mxu0 0
    %770 = vmatprep.subr.bf16.mxu0 0
    %771 = vmatpush1.bf16.xpose.msra.mxu0 0
    %772 = vmatprep.subr.bf16.mxu0 0
    %773 = vmatpush1.bf16.xpose.msra.mxu0 0
    %774 = vmatprep.subr.bf16.mxu0 0
    %775 = vmatpush1.bf16.xpose.msra.mxu0 0
    %776 = vmatprep.subr.bf16.mxu0 0
    %777 = vmatpush1.bf16.xpose.msra.mxu0 0
    %778 = vmatprep.subr.bf16.mxu0 0
    %779 = vmatpush1.bf16.xpose.msra.mxu0 0
    %780 = vmatprep.subr.bf16.mxu0 0
    %781 = vmatpush1.bf16.xpose.msra.mxu0 0
    %782 = vmatprep.subr.bf16.mxu0 0
    %783 = vmatpush1.bf16.xpose.msra.mxu0 0
    %784 = vmatprep.subr.bf16.mxu0 0
    %785 = vmatpush1.bf16.xpose.msra.mxu0 0
    %786 = vmatprep.subr.bf16.mxu0 0
    %787 = vmatpush1.bf16.xpose.msra.mxu0 0
    %788 = vmatprep.subr.bf16.mxu0 0
    %789 = vmatpush1.bf16.xpose.msra.mxu0 0
    %790 = vmatprep.subr.bf16.mxu0 0
    %791 = vmatpush1.bf16.xpose.msra.mxu0 0
    %792 = vmatprep.subr.bf16.mxu0 0
    %793 = vmatpush1.bf16.xpose.msra.mxu0 0
    %794 = vmatprep.subr.bf16.mxu0 0
    %795 = vmatpush1.bf16.xpose.msra.mxu0 0
    %796 = vmatprep.mubr.bf16.mxu0 0
    %797 = vmatmul.mubr.bf16.gmra.mrb[0].mxu0 %v759
    %v798 = vpop.f32.mrb[0].mxu0
    %v799 = vadd.f32 0.0, %v798
    %v800 = vpop.f32.mrb[0].mxu0
    %v801 = vpop.f32.mrb[0].mxu0
    %v802 = vpop.f32.mrb[0].mxu0
    %803 = vdwg.mxu0
    %v804 = vsel %vm267, %v749, -inf
    %805 = vmax.xlane.f32.xlu0 %v804
    %v806 = vpop.xlane.xlu0 %805
    %v807 = vsel %vm267, %v799, -inf
    %808 = vmax.xlane.f32.xlu0 %v807
    %v809 = vpop.xlane.xlu0 %808
    %v810 = vsub.f32 %v749, %v806
    %v811 = vsub.f32 %v799, %v809
    %v812 = vmul.f32 %v810, 1.442695
    %v813 = vpow.pop %v812
    %v814 = vmul.f32 %v811, 1.442695
    %v815 = vpow.pop %v814
    %v816 = vsel %vm267, %v813, 0.0
    %817 = vadd.xlane.f32.xlu0 %v816
    %v818 = vpop.xlane.xlu0 %817
    %v819 = vsel %vm267, %v815, 0.0
    %820 = vadd.xlane.f32.xlu0 %v819
    %v821 = vpop.xlane.xlu0 %820
    %v822 = vrcp.pop %v818
    %v823 = vmul.f32 %v813, %v822
    %v824 = vrcp.pop %v821
    %v825 = vmul.f32 %v815, %v824
    %v826 = vpack.c.bf16 %v823, %v823
    %v827 = vpack.c.bf16 %v825, %v825
    %828 = vrot.lane.b32.xlu0 %v262, 48
    %v829 = vpop.permute.xlu0 %828
    %v831 = vsel %vm267, %v826, 0
    %v834 = vsel %vm392, %v829, 0
    %836 = vmatprep.subr.bf16.mxu0 0
    %837 = vmatpush1.bf16.msra.mxu0 %v834
    %838 = vmatprep.subr.bf16.mxu0 0
    %839 = vmatpush1.bf16.msra.mxu0 0
    %840 = vmatprep.subr.bf16.mxu0 0
    %841 = vmatpush1.bf16.msra.mxu0 0
    %842 = vmatprep.subr.bf16.mxu0 0
    %843 = vmatpush1.bf16.msra.mxu0 0
    %844 = vmatprep.subr.bf16.mxu0 0
    %845 = vmatpush1.bf16.msra.mxu0 0
    %846 = vmatprep.subr.bf16.mxu0 0
    %847 = vmatpush1.bf16.msra.mxu0 0
    %848 = vmatprep.subr.bf16.mxu0 0
    %849 = vmatpush1.bf16.msra.mxu0 0
    %850 = vmatprep.subr.bf16.mxu0 0
    %851 = vmatpush1.bf16.msra.mxu0 0
    %852 = vmatprep.subr.bf16.mxu0 0
    %853 = vmatpush1.bf16.msra.mxu0 0
    %854 = vmatprep.subr.bf16.mxu0 0
    %855 = vmatpush1.bf16.msra.mxu0 0
    %856 = vmatprep.subr.bf16.mxu0 0
    %857 = vmatpush1.bf16.msra.mxu0 0
    %858 = vmatprep.subr.bf16.mxu0 0
    %859 = vmatpush1.bf16.msra.mxu0 0
    %860 = vmatprep.subr.bf16.mxu0 0
    %861 = vmatpush1.bf16.msra.mxu0 0
    %862 = vmatprep.subr.bf16.mxu0 0
    %863 = vmatpush1.bf16.msra.mxu0 0
    %864 = vmatprep.subr.bf16.mxu0 0
    %865 = vmatpush1.bf16.msra.mxu0 0
    %866 = vmatprep.subr.bf16.mxu0 0
    %867 = vmatpush1.bf16.msra.mxu0 0
    %868 = vmatprep.mubr.bf16.mxu0 0
    %869 = vmatmul.mubr.bf16.gmra.mrb[0].mxu0 %v831
    %v870 = vpop.f32.mrb[0].mxu0
    %v871 = vadd.f32 0.0, %v870
    %v872 = vpop.f32.mrb[0].mxu0
    %v873 = vpop.f32.mrb[0].mxu0
    %v874 = vpop.f32.mrb[0].mxu0
    %875 = vdwg.mxu0
    %876 = vrot.lane.b32.xlu0 %v263, 48
    %v877 = vpop.permute.xlu0 %876
    %v879 = vsel %vm267, %v827, 0
    %v882 = vsel %vm392, %v877, 0
    %884 = vmatprep.subr.bf16.mxu0 0
    %885 = vmatpush1.bf16.msra.mxu0 %v882
    %886 = vmatprep.subr.bf16.mxu0 0
    %887 = vmatpush1.bf16.msra.mxu0 0
    %888 = vmatprep.subr.bf16.mxu0 0
    %889 = vmatpush1.bf16.msra.mxu0 0
    %890 = vmatprep.subr.bf16.mxu0 0
    %891 = vmatpush1.bf16.msra.mxu0 0
    %892 = vmatprep.subr.bf16.mxu0 0
    %893 = vmatpush1.bf16.msra.mxu0 0
    %894 = vmatprep.subr.bf16.mxu0 0
    %895 = vmatpush1.bf16.msra.mxu0 0
    %896 = vmatprep.subr.bf16.mxu0 0
    %897 = vmatpush1.bf16.msra.mxu0 0
    %898 = vmatprep.subr.bf16.mxu0 0
    %899 = vmatpush1.bf16.msra.mxu0 0
    %900 = vmatprep.subr.bf16.mxu0 0
    %901 = vmatpush1.bf16.msra.mxu0 0
    %902 = vmatprep.subr.bf16.mxu0 0
    %903 = vmatpush1.bf16.msra.mxu0 0
    %904 = vmatprep.subr.bf16.mxu0 0
    %905 = vmatpush1.bf16.msra.mxu0 0
    %906 = vmatprep.subr.bf16.mxu0 0
    %907 = vmatpush1.bf16.msra.mxu0 0
    %908 = vmatprep.subr.bf16.mxu0 0
    %909 = vmatpush1.bf16.msra.mxu0 0
    %910 = vmatprep.subr.bf16.mxu0 0
    %911 = vmatpush1.bf16.msra.mxu0 0
    %912 = vmatprep.subr.bf16.mxu0 0
    %913 = vmatpush1.bf16.msra.mxu0 0
    %914 = vmatprep.subr.bf16.mxu0 0
    %915 = vmatpush1.bf16.msra.mxu0 0
    %916 = vmatprep.mubr.bf16.mxu0 0
    %917 = vmatmul.mubr.bf16.gmra.mrb[0].mxu0 %v879
    %v918 = vpop.f32.mrb[0].mxu0
    %v919 = vadd.f32 0.0, %v918
    %v920 = vpop.f32.mrb[0].mxu0
    %v921 = vpop.f32.mrb[0].mxu0
    %v922 = vpop.f32.mrb[0].mxu0
    %923 = vdwg.mxu0
    %924 = vrot.lane.b32.xlu0 %v262, 104
    %v925 = vpop.permute.xlu0 %924
    %926 = vrot.lane.b32.xlu0 %v262, 72
    %v927 = vpop.permute.xlu0 %926
    %v929 = vsel %vm267, %v925, 0
    %v932 = vsel %vm267, %v927, 0
    %934 = vmatprep.subr.bf16.mxu0 0
    %935 = vmatpush1.bf16.xpose.msra.mxu0 %v932
    %936 = vmatprep.subr.bf16.mxu0 0
    %937 = vmatpush1.bf16.xpose.msra.mxu0 0
    %938 = vmatprep.subr.bf16.mxu0 0
    %939 = vmatpush1.bf16.xpose.msra.mxu0 0
    %940 = vmatprep.subr.bf16.mxu0 0
    %941 = vmatpush1.bf16.xpose.msra.mxu0 0
    %942 = vmatprep.subr.bf16.mxu0 0
    %943 = vmatpush1.bf16.xpose.msra.mxu0 0
    %944 = vmatprep.subr.bf16.mxu0 0
    %945 = vmatpush1.bf16.xpose.msra.mxu0 0
    %946 = vmatprep.subr.bf16.mxu0 0
    %947 = vmatpush1.bf16.xpose.msra.mxu0 0
    %948 = vmatprep.subr.bf16.mxu0 0
    %949 = vmatpush1.bf16.xpose.msra.mxu0 0
    %950 = vmatprep.subr.bf16.mxu0 0
    %951 = vmatpush1.bf16.xpose.msra.mxu0 0
    %952 = vmatprep.subr.bf16.mxu0 0
    %953 = vmatpush1.bf16.xpose.msra.mxu0 0
    %954 = vmatprep.subr.bf16.mxu0 0
    %955 = vmatpush1.bf16.xpose.msra.mxu0 0
    %956 = vmatprep.subr.bf16.mxu0 0
    %957 = vmatpush1.bf16.xpose.msra.mxu0 0
    %958 = vmatprep.subr.bf16.mxu0 0
    %959 = vmatpush1.bf16.xpose.msra.mxu0 0
    %960 = vmatprep.subr.bf16.mxu0 0
    %961 = vmatpush1.bf16.xpose.msra.mxu0 0
    %962 = vmatprep.subr.bf16.mxu0 0
    %963 = vmatpush1.bf16.xpose.msra.mxu0 0
    %964 = vmatprep.subr.bf16.mxu0 0
    %965 = vmatpush1.bf16.xpose.msra.mxu0 0
    %966 = vmatprep.mubr.bf16.mxu0 0
    %967 = vmatmul.mubr.bf16.gmra.mrb[0].mxu0 %v929
    %v968 = vpop.f32.mrb[0].mxu0
    %v969 = vadd.f32 0.0, %v968
    %v970 = vpop.f32.mrb[0].mxu0
    %v971 = vpop.f32.mrb[0].mxu0
    %v972 = vpop.f32.mrb[0].mxu0
    %973 = vdwg.mxu0
    %974 = vrot.lane.b32.xlu0 %v263, 104
    %v975 = vpop.permute.xlu0 %974
    %976 = vrot.lane.b32.xlu0 %v263, 72
    %v977 = vpop.permute.xlu0 %976
    %v979 = vsel %vm267, %v975, 0
    %v982 = vsel %vm267, %v977, 0
    %984 = vmatprep.subr.bf16.mxu0 0
    %985 = vmatpush1.bf16.xpose.msra.mxu0 %v982
    %986 = vmatprep.subr.bf16.mxu0 0
    %987 = vmatpush1.bf16.xpose.msra.mxu0 0
    %988 = vmatprep.subr.bf16.mxu0 0
    %989 = vmatpush1.bf16.xpose.msra.mxu0 0
    %990 = vmatprep.subr.bf16.mxu0 0
    %991 = vmatpush1.bf16.xpose.msra.mxu0 0
    %992 = vmatprep.subr.bf16.mxu0 0
    %993 = vmatpush1.bf16.xpose.msra.mxu0 0
    %994 = vmatprep.subr.bf16.mxu0 0
    %995 = vmatpush1.bf16.xpose.msra.mxu0 0
    %996 = vmatprep.subr.bf16.mxu0 0
    %997 = vmatpush1.bf16.xpose.msra.mxu0 0
    %998 = vmatprep.subr.bf16.mxu0 0
    %999 = vmatpush1.bf16.xpose.msra.mxu0 0
    %1000 = vmatprep.subr.bf16.mxu0 0
    %1001 = vmatpush1.bf16.xpose.msra.mxu0 0
    %1002 = vmatprep.subr.bf16.mxu0 0
    %1003 = vmatpush1.bf16.xpose.msra.mxu0 0
    %1004 = vmatprep.subr.bf16.mxu0 0
    %1005 = vmatpush1.bf16.xpose.msra.mxu0 0
    %1006 = vmatprep.subr.bf16.mxu0 0
    %1007 = vmatpush1.bf16.xpose.msra.mxu0 0
    %1008 = vmatprep.subr.bf16.mxu0 0
    %1009 = vmatpush1.bf16.xpose.msra.mxu0 0
    %1010 = vmatprep.subr.bf16.mxu0 0
    %1011 = vmatpush1.bf16.xpose.msra.mxu0 0
    %1012 = vmatprep.subr.bf16.mxu0 0
    %1013 = vmatpush1.bf16.xpose.msra.mxu0 0
    %1014 = vmatprep.subr.bf16.mxu0 0
    %1015 = vmatpush1.bf16.xpose.msra.mxu0 0
    %1016 = vmatprep.mubr.bf16.mxu0 0
    %1017 = vmatmul.mubr.bf16.gmra.mrb[0].mxu0 %v979
    %v1018 = vpop.f32.mrb[0].mxu0
    %v1019 = vadd.f32 0.0, %v1018
    %v1020 = vpop.f32.mrb[0].mxu0
    %v1021 = vpop.f32.mrb[0].mxu0
    %v1022 = vpop.f32.mrb[0].mxu0
    %1023 = vdwg.mxu0
    %v1024 = vsel %vm267, %v969, -inf
    %1025 = vmax.xlane.f32.xlu0 %v1024
    %v1026 = vpop.xlane.xlu0 %1025
    %v1027 = vsel %vm267, %v1019, -inf
    %1028 = vmax.xlane.f32.xlu0 %v1027
    %v1029 = vpop.xlane.xlu0 %1028
    %v1030 = vsub.f32 %v969, %v1026
    %v1031 = vsub.f32 %v1019, %v1029
    %v1032 = vmul.f32 %v1030, 1.442695
    %v1033 = vpow.pop %v1032
    %v1034 = vmul.f32 %v1031, 1.442695
    %v1035 = vpow.pop %v1034
    %v1036 = vsel %vm267, %v1033, 0.0
    %1037 = vadd.xlane.f32.xlu0 %v1036
    %v1038 = vpop.xlane.xlu0 %1037
    %v1039 = vsel %vm267, %v1035, 0.0
    %1040 = vadd.xlane.f32.xlu0 %v1039
    %v1041 = vpop.xlane.xlu0 %1040
    %v1042 = vrcp.pop %v1038
    %v1043 = vmul.f32 %v1033, %v1042
    %v1044 = vrcp.pop %v1041
    %v1045 = vmul.f32 %v1035, %v1044
    %v1046 = vpack.c.bf16 %v1043, %v1043
    %v1047 = vpack.c.bf16 %v1045, %v1045
    %1048 = vrot.lane.b32.xlu0 %v262, 40
    %v1049 = vpop.permute.xlu0 %1048
    %v1051 = vsel %vm267, %v1046, 0
    %v1054 = vsel %vm392, %v1049, 0
    %1056 = vmatprep.subr.bf16.mxu0 0
    %1057 = vmatpush1.bf16.msra.mxu0 %v1054
    %1058 = vmatprep.subr.bf16.mxu0 0
    %1059 = vmatpush1.bf16.msra.mxu0 0
    %1060 = vmatprep.subr.bf16.mxu0 0
    %1061 = vmatpush1.bf16.msra.mxu0 0
    %1062 = vmatprep.subr.bf16.mxu0 0
    %1063 = vmatpush1.bf16.msra.mxu0 0
    %1064 = vmatprep.subr.bf16.mxu0 0
    %1065 = vmatpush1.bf16.msra.mxu0 0
    %1066 = vmatprep.subr.bf16.mxu0 0
    %1067 = vmatpush1.bf16.msra.mxu0 0
    %1068 = vmatprep.subr.bf16.mxu0 0
    %1069 = vmatpush1.bf16.msra.mxu0 0
    %1070 = vmatprep.subr.bf16.mxu0 0
    %1071 = vmatpush1.bf16.msra.mxu0 0
    %1072 = vmatprep.subr.bf16.mxu0 0
    %1073 = vmatpush1.bf16.msra.mxu0 0
    %1074 = vmatprep.subr.bf16.mxu0 0
    %1075 = vmatpush1.bf16.msra.mxu0 0
    %1076 = vmatprep.subr.bf16.mxu0 0
    %1077 = vmatpush1.bf16.msra.mxu0 0
    %1078 = vmatprep.subr.bf16.mxu0 0
    %1079 = vmatpush1.bf16.msra.mxu0 0
    %1080 = vmatprep.subr.bf16.mxu0 0
    %1081 = vmatpush1.bf16.msra.mxu0 0
    %1082 = vmatprep.subr.bf16.mxu0 0
    %1083 = vmatpush1.bf16.msra.mxu0 0
    %1084 = vmatprep.subr.bf16.mxu0 0
    %1085 = vmatpush1.bf16.msra.mxu0 0
    %1086 = vmatprep.subr.bf16.mxu0 0
    %1087 = vmatpush1.bf16.msra.mxu0 0
    %1088 = vmatprep.mubr.bf16.mxu0 0
    %1089 = vmatmul.mubr.bf16.gmra.mrb[0].mxu0 %v1051
    %v1090 = vpop.f32.mrb[0].mxu0
    %v1091 = vadd.f32 0.0, %v1090
    %v1092 = vpop.f32.mrb[0].mxu0
    %v1093 = vpop.f32.mrb[0].mxu0
    %v1094 = vpop.f32.mrb[0].mxu0
    %1095 = vdwg.mxu0
    %1096 = vrot.lane.b32.xlu0 %v263, 40
    %v1097 = vpop.permute.xlu0 %1096
    %v1099 = vsel %vm267, %v1047, 0
    %v1102 = vsel %vm392, %v1097, 0
    %1104 = vmatprep.subr.bf16.mxu0 0
    %1105 = vmatpush1.bf16.msra.mxu0 %v1102
    %1106 = vmatprep.subr.bf16.mxu0 0
    %1107 = vmatpush1.bf16.msra.mxu0 0
    %1108 = vmatprep.subr.bf16.mxu0 0
    %1109 = vmatpush1.bf16.msra.mxu0 0
    %1110 = vmatprep.subr.bf16.mxu0 0
    %1111 = vmatpush1.bf16.msra.mxu0 0
    %1112 = vmatprep.subr.bf16.mxu0 0
    %1113 = vmatpush1.bf16.msra.mxu0 0
    %1114 = vmatprep.subr.bf16.mxu0 0
    %1115 = vmatpush1.bf16.msra.mxu0 0
    %1116 = vmatprep.subr.bf16.mxu0 0
    %1117 = vmatpush1.bf16.msra.mxu0 0
    %1118 = vmatprep.subr.bf16.mxu0 0
    %1119 = vmatpush1.bf16.msra.mxu0 0
    %1120 = vmatprep.subr.bf16.mxu0 0
    %1121 = vmatpush1.bf16.msra.mxu0 0
    %1122 = vmatprep.subr.bf16.mxu0 0
    %1123 = vmatpush1.bf16.msra.mxu0 0
    %1124 = vmatprep.subr.bf16.mxu0 0
    %1125 = vmatpush1.bf16.msra.mxu0 0
    %1126 = vmatprep.subr.bf16.mxu0 0
    %1127 = vmatpush1.bf16.msra.mxu0 0
    %1128 = vmatprep.subr.bf16.mxu0 0
    %1129 = vmatpush1.bf16.msra.mxu0 0
    %1130 = vmatprep.subr.bf16.mxu0 0
    %1131 = vmatpush1.bf16.msra.mxu0 0
    %1132 = vmatprep.subr.bf16.mxu0 0
    %1133 = vmatpush1.bf16.msra.mxu0 0
    %1134 = vmatprep.subr.bf16.mxu0 0
    %1135 = vmatpush1.bf16.msra.mxu0 0
    %1136 = vmatprep.mubr.bf16.mxu0 0
    %1137 = vmatmul.mubr.bf16.gmra.mrb[0].mxu0 %v1099
    %v1138 = vpop.f32.mrb[0].mxu0
    %v1139 = vadd.f32 0.0, %v1138
    %v1140 = vpop.f32.mrb[0].mxu0
    %v1141 = vpop.f32.mrb[0].mxu0
    %v1142 = vpop.f32.mrb[0].mxu0
    %1143 = vdwg.mxu0
    %1146 = vrot.lane.b32.xlu0 %v651, 8
    %v1147 = vpop.permute.xlu0 %1146
    %1148 = vrot.lane.b32.xlu0 %v699, 8
    %v1149 = vpop.permute.xlu0 %1148
    %1154 = vrot.lane.b32.xlu0 %v871, 16
    %v1155 = vpop.permute.xlu0 %1154
    %1156 = vrot.lane.b32.xlu0 %v919, 16
    %v1157 = vpop.permute.xlu0 %1156
    %1162 = vrot.lane.b32.xlu0 %v1091, 24
    %v1163 = vpop.permute.xlu0 %1162
    %1164 = vrot.lane.b32.xlu0 %v1139, 24
    %v1165 = vpop.permute.xlu0 %1164
    %v1168 = vsel %vm267, %v431, %v1147
    %v1169 = vsel %vm267, %v479, %v1149
    %vm1170 = vcmask 130048
    %v1171 = vsel %vm1170, %v1168, %v1155
    %v1172 = vsel %vm1170, %v1169, %v1157
    %vm1173 = vcmask 195584
    %v1174 = vsel %vm1173, %v1171, %v1163
    %v1175 = vsel %vm1173, %v1172, %v1165
    %v1176 = vpack.c.bf16 %v1175, %v1174
    %v1177 = vld [vmem:[#allocation2] sm:$0xf]
    %v1178 = vld [vmem:[#allocation2 + $0x4] sm:$0xf]
    %v1179 = vld [vmem:[#allocation2 + $0x8] sm:$0xf]
    %v1180 = vld [vmem:[#allocation2 + $0xc] sm:$0xf]
    %v1181 = vlaneseq
    %v1182 = vshrl.u32 %v1181, 7
    %v1183 = vsub.s32 1, %v1182
    %v1184 = vrot.slane %v195, %v1183
    %v1189 = vunpack.c.l.b16 %v1177
    %v1190 = vunpack.c.l.b16 %v1178
    %v1191 = vunpack.c.l.b16 %v1179
    %v1192 = vunpack.c.l.b16 %v1180
    %v1193 = vpack.c.b16 %v1190, %v1189
    %v1194 = vpack.c.b16 %v1192, %v1191
    %v1198 = vsel %vm217, %v1176, 0
    %1200 = vmatprep.subr.bf16.mxu0 0
    %1201 = vmatpush1.bf16.msra.mxu0 %v1193
    %1202 = vmatprep.subr.bf16.mxu0 0
    %1203 = vmatpush1.bf16.msra.mxu0 %v1194
    %1204 = vmatprep.subr.bf16.mxu0 0
    %1205 = vmatpush1.bf16.msra.mxu0 0
    %1206 = vmatprep.subr.bf16.mxu0 0
    %1207 = vmatpush1.bf16.msra.mxu0 0
    %1208 = vmatprep.subr.bf16.mxu0 0
    %1209 = vmatpush1.bf16.msra.mxu0 0
    %1210 = vmatprep.subr.bf16.mxu0 0
    %1211 = vmatpush1.bf16.msra.mxu0 0
    %1212 = vmatprep.subr.bf16.mxu0 0
    %1213 = vmatpush1.bf16.msra.mxu0 0
    %1214 = vmatprep.subr.bf16.mxu0 0
    %1215 = vmatpush1.bf16.msra.mxu0 0
    %1216 = vmatprep.subr.bf16.mxu0 0
    %1217 = vmatpush1.bf16.msra.mxu0 0
    %1218 = vmatprep.subr.bf16.mxu0 0
    %1219 = vmatpush1.bf16.msra.mxu0 0
    %1220 = vmatprep.subr.bf16.mxu0 0
    %1221 = vmatpush1.bf16.msra.mxu0 0
    %1222 = vmatprep.subr.bf16.mxu0 0
    %1223 = vmatpush1.bf16.msra.mxu0 0
    %1224 = vmatprep.subr.bf16.mxu0 0
    %1225 = vmatpush1.bf16.msra.mxu0 0
    %1226 = vmatprep.subr.bf16.mxu0 0
    %1227 = vmatpush1.bf16.msra.mxu0 0
    %1228 = vmatprep.subr.bf16.mxu0 0
    %1229 = vmatpush1.bf16.msra.mxu0 0
    %1230 = vmatprep.subr.bf16.mxu0 0
    %1231 = vmatpush1.bf16.msra.mxu0 0
    %1232 = vmatprep.mubr.bf16.mxu0 0
    %1233 = vmatmul.mubr.bf16.gmra.mrb[0].mxu0 %v1198
    %v1234 = vpop.f32.mrb[0].mxu0
    %v1235 = vadd.f32 %v1184, %v1234
    %v1236 = vpop.f32.mrb[0].mxu0
    %v1237 = vpop.f32.mrb[0].mxu0
    %v1238 = vadd.f32 %v1184, %v1237
    %v1239 = vpop.f32.mrb[0].mxu0
    %1240 = vdwg.mxu0
    %v1241 = vadd.f32 %v189, %v1235
    %v1242 = vadd.f32 %v192, %v1238
    %v1243 = vsel %vm217, %v1241, 0.0
    %1244 = vadd.xlane.f32.xlu0 %v1243
    %v1245 = vpop.xlane.xlu0 %1244
    %v1246 = vsel %vm217, %v1242, 0.0
    %1247 = vadd.xlane.f32.xlu0 %v1246
    %v1248 = vpop.xlane.xlu0 %1247
    %v1249 = vrcp.pop 32.0
    %v1250 = vmul.f32 %v1245, %v1249
    %v1251 = vmul.f32 %v1248, %v1249
    %v1252 = vsub.f32 %v1241, %v1250
    %v1253 = vsub.f32 %v1242, %v1251
    %v1254 = vmul.f32 %v1252, %v1252
    %v1255 = vmul.f32 %v1253, %v1253
    %v1256 = vsel %vm217, %v1254, 0.0
    %1257 = vadd.xlane.f32.xlu0 %v1256
    %v1258 = vpop.xlane.xlu0 %1257
    %v1259 = vsel %vm217, %v1255, 0.0
    %1260 = vadd.xlane.f32.xlu0 %v1259
    %v1261 = vpop.xlane.xlu0 %1260
    %v1262 = vmul.f32 %v1258, %v1249
    %v1263 = vmul.f32 %v1261, %v1249
    %v1264 = vadd.f32 %v1262, 1e-05
    %v1265 = vadd.f32 %v1263, 1e-05
    %v1266 = vrsqrt.pop %v1264
    %v1267 = vrsqrt.pop %v1265
    %v1268 = vmul.f32 %v1252, %v1266
    %v1269 = vmul.f32 %v1253, %v1267
    %v1270 = vlaneseq
    %v1271 = vshrl.u32 %v1270, 7
    %v1272 = vsub.s32 2, %v1271
    %v1273 = vrot.slane %v195, %v1272
    %v1274 = vmul.f32 %v1268, %v1273
    %v1275 = vmul.f32 %v1269, %v1273
    %v1276 = vlaneseq
    %v1277 = vshrl.u32 %v1276, 7
    %v1278 = vsub.s32 3, %v1277
    %v1279 = vrot.slane %v195, %v1278
    %v1280 = vadd.f32 %v1274, %v1279
    %v1281 = vadd.f32 %v1275, %v1279
    %v1282 = vpack.c.bf16 %v1281, %v1280
    %v1283 = vld [vmem:[#allocation5] sm:$0xf]
    %v1284 = vld [vmem:[#allocation5 + $0x4] sm:$0xf]
    %v1285 = vld [vmem:[#allocation5 + $0x8] sm:$0xf]
    %v1286 = vld [vmem:[#allocation5 + $0xc] sm:$0xf]
    %v1287 = vlaneseq
    %v1288 = vshrl.u32 %v1287, 7
    %v1289 = vsub.s32 4, %v1288
    %v1290 = vrot.slane %v195, %v1289
    %v1295 = vunpack.c.l.b16 %v1283
    %v1296 = vunpack.c.l.b16 %v1284
    %v1297 = vunpack.c.l.b16 %v1285
    %v1298 = vunpack.c.l.b16 %v1286
    %v1299 = vpack.c.b16 %v1296, %v1295
    %v1300 = vpack.c.b16 %v1298, %v1297
    %v1304 = vsel %vm217, %v1282, 0
    %1306 = vmatprep.subr.bf16.mxu0 0
    %1307 = vmatpush1.bf16.msra.mxu0 %v1299
    %1308 = vmatprep.subr.bf16.mxu0 0
    %1309 = vmatpush1.bf16.msra.mxu0 %v1300
    %1310 = vmatprep.subr.bf16.mxu0 0
    %1311 = vmatpush1.bf16.msra.mxu0 0
    %1312 = vmatprep.subr.bf16.mxu0 0
    %1313 = vmatpush1.bf16.msra.mxu0 0
    %1314 = vmatprep.subr.bf16.mxu0 0
    %1315 = vmatpush1.bf16.msra.mxu0 0
    %1316 = vmatprep.subr.bf16.mxu0 0
    %1317 = vmatpush1.bf16.msra.mxu0 0
    %1318 = vmatprep.subr.bf16.mxu0 0
    %1319 = vmatpush1.bf16.msra.mxu0 0
    %1320 = vmatprep.subr.bf16.mxu0 0
    %1321 = vmatpush1.bf16.msra.mxu0 0
    %1322 = vmatprep.subr.bf16.mxu0 0
    %1323 = vmatpush1.bf16.msra.mxu0 0
    %1324 = vmatprep.subr.bf16.mxu0 0
    %1325 = vmatpush1.bf16.msra.mxu0 0
    %1326 = vmatprep.subr.bf16.mxu0 0
    %1327 = vmatpush1.bf16.msra.mxu0 0
    %1328 = vmatprep.subr.bf16.mxu0 0
    %1329 = vmatpush1.bf16.msra.mxu0 0
    %1330 = vmatprep.subr.bf16.mxu0 0
    %1331 = vmatpush1.bf16.msra.mxu0 0
    %1332 = vmatprep.subr.bf16.mxu0 0
    %1333 = vmatpush1.bf16.msra.mxu0 0
    %1334 = vmatprep.subr.bf16.mxu0 0
    %1335 = vmatpush1.bf16.msra.mxu0 0
    %1336 = vmatprep.subr.bf16.mxu0 0
    %1337 = vmatpush1.bf16.msra.mxu0 0
    %1338 = vmatprep.mubr.bf16.mxu0 0
    %1339 = vmatmul.mubr.bf16.gmra.mrb[0].mxu0 %v1304
    %v1340 = vpop.f32.mrb[0].mxu0
    %v1341 = vadd.f32 %v1290, %v1340
    %v1342 = vpop.f32.mrb[0].mxu0
    %v1343 = vpop.f32.mrb[0].mxu0
    %v1344 = vadd.f32 %v1290, %v1343
    %v1345 = vpop.f32.mrb[0].mxu0
    %1346 = vdwg.mxu0
    %v1347 = vmax.f32 %v1341, 0.0
    %v1348 = vmax.f32 %v1344, 0.0
    %v1349 = vpack.c.bf16 %v1348, %v1347
    %v1350 = vld [vmem:[%s5] sm:$0xf]
    %v1351 = vld [vmem:[%s5 + $0x4] sm:$0xf]
    %v1352 = vld [vmem:[%s5 + $0x8] sm:$0xf]
    %v1353 = vld [vmem:[%s5 + $0xc] sm:$0xf]
    %v1354 = vld [vmem:[%s5 + $0x10] sm:$0xf]
    %v1355 = vld [vmem:[%s5 + $0x14] sm:$0xf]
    %v1356 = vld [vmem:[%s5 + $0x18] sm:$0xf]
    %v1357 = vld [vmem:[%s5 + $0x1c] sm:$0xf]
    %v1358 = vlaneseq
    %v1359 = vshrl.u32 %v1358, 7
    %v1360 = vsub.s32 5, %v1359
    %v1361 = vrot.slane %v195, %v1360
    %v1370 = vunpack.c.l.b16 %v1350
    %v1371 = vunpack.c.l.b16 %v1351
    %v1372 = vunpack.c.l.b16 %v1352
    %v1373 = vunpack.c.l.b16 %v1353
    %v1374 = vunpack.c.l.b16 %v1354
    %v1375 = vunpack.c.l.b16 %v1355
    %v1376 = vunpack.c.l.b16 %v1356
    %v1377 = vunpack.c.l.b16 %v1357
    %v1378 = vpack.c.b16 %v1371, %v1370
    %v1379 = vpack.c.b16 %v1373, %v1372
    %v1380 = vpack.c.b16 %v1375, %v1374
    %v1381 = vpack.c.b16 %v1377, %v1376
    %vm1386 = vcmask 523264
    %v1388 = vsel %vm1386, %v1349, 0
    %1390 = vmatprep.subr.bf16.mxu0 0
    %1391 = vmatpush1.bf16.msra.mxu0 %v1378
    %1392 = vmatprep.subr.bf16.mxu0 0
    %1393 = vmatpush1.bf16.msra.mxu0 %v1379
    %1394 = vmatprep.subr.bf16.mxu0 0
    %1395 = vmatpush1.bf16.msra.mxu0 %v1380
    %1396 = vmatprep.subr.bf16.mxu0 0
    %1397 = vmatpush1.bf16.msra.mxu0 %v1381
    %1398 = vmatprep.subr.bf16.mxu0 0
    %1399 = vmatpush1.bf16.msra.mxu0 0
    %1400 = vmatprep.subr.bf16.mxu0 0
    %1401 = vmatpush1.bf16.msra.mxu0 0
    %1402 = vmatprep.subr.bf16.mxu0 0
    %1403 = vmatpush1.bf16.msra.mxu0 0
    %1404 = vmatprep.subr.bf16.mxu0 0
    %1405 = vmatpush1.bf16.msra.mxu0 0
    %1406 = vmatprep.subr.bf16.mxu0 0
    %1407 = vmatpush1.bf16.msra.mxu0 0
    %1408 = vmatprep.subr.bf16.mxu0 0
    %1409 = vmatpush1.bf16.msra.mxu0 0
    %1410 = vmatprep.subr.bf16.mxu0 0
    %1411 = vmatpush1.bf16.msra.mxu0 0
    %1412 = vmatprep.subr.bf16.mxu0 0
    %1413 = vmatpush1.bf16.msra.mxu0 0
    %1414 = vmatprep.subr.bf16.mxu0 0
    %1415 = vmatpush1.bf16.msra.mxu0 0
    %1416 = vmatprep.subr.bf16.mxu0 0
    %1417 = vmatpush1.bf16.msra.mxu0 0
    %1418 = vmatprep.subr.bf16.mxu0 0
    %1419 = vmatpush1.bf16.msra.mxu0 0
    %1420 = vmatprep.subr.bf16.mxu0 0
    %1421 = vmatpush1.bf16.msra.mxu0 0
    %1422 = vmatprep.mubr.bf16.mxu0 0
    %1423 = vmatmul.mubr.bf16.gmra.mrb[0].mxu0 %v1388
    %v1424 = vpop.f32.mrb[0].mxu0
    %v1425 = vadd.f32 %v1361, %v1424
    %v1426 = vpop.f32.mrb[0].mxu0
    %v1427 = vpop.f32.mrb[0].mxu0
    %v1428 = vadd.f32 %v1361, %v1427
    %v1429 = vpop.f32.mrb[0].mxu0
    %1430 = vdwg.mxu0
    %v1431 = vadd.f32 %v1280, %v1425
    %v1432 = vadd.f32 %v1281, %v1428
    %v1433 = vsel %vm217, %v1431, 0.0
    %1434 = vadd.xlane.f32.xlu0 %v1433
    %v1435 = vpop.xlane.xlu0 %1434
    %v1436 = vsel %vm217, %v1432, 0.0
    %1437 = vadd.xlane.f32.xlu0 %v1436
    %v1438 = vpop.xlane.xlu0 %1437
    %v1439 = vmul.f32 %v1435, %v1249
    %v1440 = vmul.f32 %v1438, %v1249
    %v1441 = vsub.f32 %v1431, %v1439
    %v1442 = vsub.f32 %v1432, %v1440
    %v1443 = vmul.f32 %v1441, %v1441
    %v1444 = vmul.f32 %v1442, %v1442
    %v1445 = vsel %vm217, %v1443, 0.0
    %1446 = vadd.xlane.f32.xlu0 %v1445
    %v1447 = vpop.xlane.xlu0 %1446
    %v1448 = vsel %vm217, %v1444, 0.0
    %1449 = vadd.xlane.f32.xlu0 %v1448
    %v1450 = vpop.xlane.xlu0 %1449
    %v1451 = vmul.f32 %v1447, %v1249
    %v1452 = vmul.f32 %v1450, %v1249
    %v1453 = vadd.f32 %v1451, 1e-05
    %v1454 = vadd.f32 %v1452, 1e-05
    %v1455 = vrsqrt.pop %v1453
    %v1456 = vrsqrt.pop %v1454
    %v1457 = vmul.f32 %v1441, %v1455
    %v1458 = vmul.f32 %v1442, %v1456
    %v1459 = vlaneseq
    %v1460 = vshrl.u32 %v1459, 7
    %v1461 = vsub.s32 6, %v1460
    %v1462 = vrot.slane %v195, %v1461
    %v1463 = vmul.f32 %v1457, %v1462
    %v1464 = vmul.f32 %v1458, %v1462
    %v1465 = vlaneseq
    %v1466 = vshrl.u32 %v1465, 7
    %v1467 = vsub.s32 7, %v1466
    %v1468 = vrot.slane %v195, %v1467
    %v1469 = vadd.f32 %v1463, %v1468
    %v1470 = vadd.f32 %v1464, %v1468
    %s1471 = scalar_lea.vmem %s6, 8
    %v1472 = vld [vmem:[%s1471] sm:$0xff]
    %v1473 = vpack.c.bf16 %v1470, %v1469
    %s1474 = scalar_lea.vmem %s2, 16
    %v1475 = vld [vmem:[%s1474] sm:$0xf]
    %v1476 = vld [vmem:[%s1474 + $0x4] sm:$0xf]
    %v1477 = vld [vmem:[%s1474 + $0x8] sm:$0xf]
    %v1478 = vld [vmem:[%s1474 + $0xc] sm:$0xf]
    %v1479 = vlaneseq
    %v1480 = vshrl.u32 %v1479, 7
    %v1481 = vsub.s32 0, %v1480
    %v1482 = vrot.slane %v1472, %v1481
    %v1487 = vunpack.c.l.b16 %v1475
    %v1488 = vunpack.c.l.b16 %v1476
    %v1489 = vunpack.c.l.b16 %v1477
    %v1490 = vunpack.c.l.b16 %v1478
    %v1491 = vpack.c.b16 %v1488, %v1487
    %v1492 = vpack.c.b16 %v1490, %v1489
    %v1496 = vsel %vm217, %v1473, 0
    %1498 = vmatprep.subr.bf16.mxu0 0
    %1499 = vmatpush1.bf16.msra.mxu0 %v1491
    %1500 = vmatprep.subr.bf16.mxu0 0
    %1501 = vmatpush1.bf16.msra.mxu0 %v1492
    %1502 = vmatprep.subr.bf16.mxu0 0
    %1503 = vmatpush1.bf16.msra.mxu0 0
    %1504 = vmatprep.subr.bf16.mxu0 0
    %1505 = vmatpush1.bf16.msra.mxu0 0
    %1506 = vmatprep.subr.bf16.mxu0 0
    %1507 = vmatpush1.bf16.msra.mxu0 0
    %1508 = vmatprep.subr.bf16.mxu0 0
    %1509 = vmatpush1.bf16.msra.mxu0 0
    %1510 = vmatprep.subr.bf16.mxu0 0
    %1511 = vmatpush1.bf16.msra.mxu0 0
    %1512 = vmatprep.subr.bf16.mxu0 0
    %1513 = vmatpush1.bf16.msra.mxu0 0
    %1514 = vmatprep.subr.bf16.mxu0 0
    %1515 = vmatpush1.bf16.msra.mxu0 0
    %1516 = vmatprep.subr.bf16.mxu0 0
    %1517 = vmatpush1.bf16.msra.mxu0 0
    %1518 = vmatprep.subr.bf16.mxu0 0
    %1519 = vmatpush1.bf16.msra.mxu0 0
    %1520 = vmatprep.subr.bf16.mxu0 0
    %1521 = vmatpush1.bf16.msra.mxu0 0
    %1522 = vmatprep.subr.bf16.mxu0 0
    %1523 = vmatpush1.bf16.msra.mxu0 0
    %1524 = vmatprep.subr.bf16.mxu0 0
    %1525 = vmatpush1.bf16.msra.mxu0 0
    %1526 = vmatprep.subr.bf16.mxu0 0
    %1527 = vmatpush1.bf16.msra.mxu0 0
    %1528 = vmatprep.subr.bf16.mxu0 0
    %1529 = vmatpush1.bf16.msra.mxu0 0
    %1530 = vmatprep.mubr.bf16.mxu0 0
    %1531 = vmatmul.mubr.bf16.gmra.mrb[0].mxu0 %v1496
    %v1532 = vpop.f32.mrb[0].mxu0
    %v1533 = vadd.f32 %v1482, %v1532
    %v1534 = vpop.f32.mrb[0].mxu0
    %v1535 = vpop.f32.mrb[0].mxu0
    %v1536 = vadd.f32 %v1482, %v1535
    %v1537 = vpop.f32.mrb[0].mxu0
    %1538 = vdwg.mxu0
    %v1539 = vpack.c.bf16 %v1533, %v1533
    %v1540 = vpack.c.bf16 %v1536, %v1536
    %1542 = vrot.lane.b32.xlu0 %v1539, 96
    %v1543 = vpop.permute.xlu0 %1542
    %v1545 = vsel %vm267, %v1539, 0
    %v1548 = vsel %vm267, %v1543, 0
    %1550 = vmatprep.subr.bf16.mxu0 0
    %1551 = vmatpush1.bf16.xpose.msra.mxu0 %v1548
    %1552 = vmatprep.subr.bf16.mxu0 0
    %1553 = vmatpush1.bf16.xpose.msra.mxu0 0
    %1554 = vmatprep.subr.bf16.mxu0 0
    %1555 = vmatpush1.bf16.xpose.msra.mxu0 0
    %1556 = vmatprep.subr.bf16.mxu0 0
    %1557 = vmatpush1.bf16.xpose.msra.mxu0 0
    %1558 = vmatprep.subr.bf16.mxu0 0
    %1559 = vmatpush1.bf16.xpose.msra.mxu0 0
    %1560 = vmatprep.subr.bf16.mxu0 0
    %1561 = vmatpush1.bf16.xpose.msra.mxu0 0
    %1562 = vmatprep.subr.bf16.mxu0 0
    %1563 = vmatpush1.bf16.xpose.msra.mxu0 0
    %1564 = vmatprep.subr.bf16.mxu0 0
    %1565 = vmatpush1.bf16.xpose.msra.mxu0 0
    %1566 = vmatprep.subr.bf16.mxu0 0
    %1567 = vmatpush1.bf16.xpose.msra.mxu0 0
    %1568 = vmatprep.subr.bf16.mxu0 0
    %1569 = vmatpush1.bf16.xpose.msra.mxu0 0
    %1570 = vmatprep.subr.bf16.mxu0 0
    %1571 = vmatpush1.bf16.xpose.msra.mxu0 0
    %1572 = vmatprep.subr.bf16.mxu0 0
    %1573 = vmatpush1.bf16.xpose.msra.mxu0 0
    %1574 = vmatprep.subr.bf16.mxu0 0
    %1575 = vmatpush1.bf16.xpose.msra.mxu0 0
    %1576 = vmatprep.subr.bf16.mxu0 0
    %1577 = vmatpush1.bf16.xpose.msra.mxu0 0
    %1578 = vmatprep.subr.bf16.mxu0 0
    %1579 = vmatpush1.bf16.xpose.msra.mxu0 0
    %1580 = vmatprep.subr.bf16.mxu0 0
    %1581 = vmatpush1.bf16.xpose.msra.mxu0 0
    %1582 = vmatprep.mubr.bf16.mxu0 0
    %1583 = vmatmul.mubr.bf16.gmra.mrb[0].mxu0 %v1545
    %v1584 = vpop.f32.mrb[0].mxu0
    %v1585 = vadd.f32 0.0, %v1584
    %v1586 = vpop.f32.mrb[0].mxu0
    %v1587 = vpop.f32.mrb[0].mxu0
    %v1588 = vpop.f32.mrb[0].mxu0
    %1589 = vdwg.mxu0
    %1591 = vrot.lane.b32.xlu0 %v1540, 96
    %v1592 = vpop.permute.xlu0 %1591
    %v1594 = vsel %vm267, %v1540, 0
    %v1597 = vsel %vm267, %v1592, 0
    %1599 = vmatprep.subr.bf16.mxu0 0
    %1600 = vmatpush1.bf16.xpose.msra.mxu0 %v1597
    %1601 = vmatprep.subr.bf16.mxu0 0
    %1602 = vmatpush1.bf16.xpose.msra.mxu0 0
    %1603 = vmatprep.subr.bf16.mxu0 0
    %1604 = vmatpush1.bf16.xpose.msra.mxu0 0
    %1605 = vmatprep.subr.bf16.mxu0 0
    %1606 = vmatpush1.bf16.xpose.msra.mxu0 0
    %1607 = vmatprep.subr.bf16.mxu0 0
    %1608 = vmatpush1.bf16.xpose.msra.mxu0 0
    %1609 = vmatprep.subr.bf16.mxu0 0
    %1610 = vmatpush1.bf16.xpose.msra.mxu0 0
    %1611 = vmatprep.subr.bf16.mxu0 0
    %1612 = vmatpush1.bf16.xpose.msra.mxu0 0
    %1613 = vmatprep.subr.bf16.mxu0 0
    %1614 = vmatpush1.bf16.xpose.msra.mxu0 0
    %1615 = vmatprep.subr.bf16.mxu0 0
    %1616 = vmatpush1.bf16.xpose.msra.mxu0 0
    %1617 = vmatprep.subr.bf16.mxu0 0
    %1618 = vmatpush1.bf16.xpose.msra.mxu0 0
    %1619 = vmatprep.subr.bf16.mxu0 0
    %1620 = vmatpush1.bf16.xpose.msra.mxu0 0
    %1621 = vmatprep.subr.bf16.mxu0 0
    %1622 = vmatpush1.bf16.xpose.msra.mxu0 0
    %1623 = vmatprep.subr.bf16.mxu0 0
    %1624 = vmatpush1.bf16.xpose.msra.mxu0 0
    %1625 = vmatprep.subr.bf16.mxu0 0
    %1626 = vmatpush1.bf16.xpose.msra.mxu0 0
    %1627 = vmatprep.subr.bf16.mxu0 0
    %1628 = vmatpush1.bf16.xpose.msra.mxu0 0
    %1629 = vmatprep.subr.bf16.mxu0 0
    %1630 = vmatpush1.bf16.xpose.msra.mxu0 0
    %1631 = vmatprep.mubr.bf16.mxu0 0
    %1632 = vmatmul.mubr.bf16.gmra.mrb[0].mxu0 %v1594
    %v1633 = vpop.f32.mrb[0].mxu0
    %v1634 = vadd.f32 0.0, %v1633
    %v1635 = vpop.f32.mrb[0].mxu0
    %v1636 = vpop.f32.mrb[0].mxu0
    %v1637 = vpop.f32.mrb[0].mxu0
    %1638 = vdwg.mxu0
    %v1639 = vsel %vm267, %v1585, -inf
    %1640 = vmax.xlane.f32.xlu0 %v1639
    %v1641 = vpop.xlane.xlu0 %1640
    %v1642 = vsel %vm267, %v1634, -inf
    %1643 = vmax.xlane.f32.xlu0 %v1642
    %v1644 = vpop.xlane.xlu0 %1643
    %v1645 = vsub.f32 %v1585, %v1641
    %v1646 = vsub.f32 %v1634, %v1644
    %v1647 = vmul.f32 %v1645, 1.442695
    %v1648 = vpow.pop %v1647
    %v1649 = vmul.f32 %v1646, 1.442695
    %v1650 = vpow.pop %v1649
    %v1651 = vsel %vm267, %v1648, 0.0
    %1652 = vadd.xlane.f32.xlu0 %v1651
    %v1653 = vpop.xlane.xlu0 %1652
    %v1654 = vsel %vm267, %v1650, 0.0
    %1655 = vadd.xlane.f32.xlu0 %v1654
    %v1656 = vpop.xlane.xlu0 %1655
    %v1657 = vrcp.pop %v1653
    %v1658 = vmul.f32 %v1648, %v1657
    %v1659 = vrcp.pop %v1656
    %v1660 = vmul.f32 %v1650, %v1659
    %v1661 = vpack.c.bf16 %v1658, %v1658
    %v1662 = vpack.c.bf16 %v1660, %v1660
    %1663 = vrot.lane.b32.xlu0 %v1539, 64
    %v1664 = vpop.permute.xlu0 %1663
    %v1666 = vsel %vm267, %v1661, 0
    %v1669 = vsel %vm392, %v1664, 0
    %1671 = vmatprep.subr.bf16.mxu0 0
    %1672 = vmatpush1.bf16.msra.mxu0 %v1669
    %1673 = vmatprep.subr.bf16.mxu0 0
    %1674 = vmatpush1.bf16.msra.mxu0 0
    %1675 = vmatprep.subr.bf16.mxu0 0
    %1676 = vmatpush1.bf16.msra.mxu0 0
    %1677 = vmatprep.subr.bf16.mxu0 0
    %1678 = vmatpush1.bf16.msra.mxu0 0
    %1679 = vmatprep.subr.bf16.mxu0 0
    %1680 = vmatpush1.bf16.msra.mxu0 0
    %1681 = vmatprep.subr.bf16.mxu0 0
    %1682 = vmatpush1.bf16.msra.mxu0 0
    %1683 = vmatprep.subr.bf16.mxu0 0
    %1684 = vmatpush1.bf16.msra.mxu0 0
    %1685 = vmatprep.subr.bf16.mxu0 0
    %1686 = vmatpush1.bf16.msra.mxu0 0
    %1687 = vmatprep.subr.bf16.mxu0 0
    %1688 = vmatpush1.bf16.msra.mxu0 0
    %1689 = vmatprep.subr.bf16.mxu0 0
    %1690 = vmatpush1.bf16.msra.mxu0 0
    %1691 = vmatprep.subr.bf16.mxu0 0
    %1692 = vmatpush1.bf16.msra.mxu0 0
    %1693 = vmatprep.subr.bf16.mxu0 0
    %1694 = vmatpush1.bf16.msra.mxu0 0
    %1695 = vmatprep.subr.bf16.mxu0 0
    %1696 = vmatpush1.bf16.msra.mxu0 0
    %1697 = vmatprep.subr.bf16.mxu0 0
    %1698 = vmatpush1.bf16.msra.mxu0 0
    %1699 = vmatprep.subr.bf16.mxu0 0
    %1700 = vmatpush1.bf16.msra.mxu0 0
    %1701 = vmatprep.subr.bf16.mxu0 0
    %1702 = vmatpush1.bf16.msra.mxu0 0
    %1703 = vmatprep.mubr.bf16.mxu0 0
    %1704 = vmatmul.mubr.bf16.gmra.mrb[0].mxu0 %v1666
    %v1705 = vpop.f32.mrb[0].mxu0
    %v1706 = vadd.f32 0.0, %v1705
    %v1707 = vpop.f32.mrb[0].mxu0
    %v1708 = vpop.f32.mrb[0].mxu0
    %v1709 = vpop.f32.mrb[0].mxu0
    %1710 = vdwg.mxu0
    %1711 = vrot.lane.b32.xlu0 %v1540, 64
    %v1712 = vpop.permute.xlu0 %1711
    %v1714 = vsel %vm267, %v1662, 0
    %v1717 = vsel %vm392, %v1712, 0
    %1719 = vmatprep.subr.bf16.mxu0 0
    %1720 = vmatpush1.bf16.msra.mxu0 %v1717
    %1721 = vmatprep.subr.bf16.mxu0 0
    %1722 = vmatpush1.bf16.msra.mxu0 0
    %1723 = vmatprep.subr.bf16.mxu0 0
    %1724 = vmatpush1.bf16.msra.mxu0 0
    %1725 = vmatprep.subr.bf16.mxu0 0
    %1726 = vmatpush1.bf16.msra.mxu0 0
    %1727 = vmatprep.subr.bf16.mxu0 0
    %1728 = vmatpush1.bf16.msra.mxu0 0
    %1729 = vmatprep.subr.bf16.mxu0 0
    %1730 = vmatpush1.bf16.msra.mxu0 0
    %1731 = vmatprep.subr.bf16.mxu0 0
    %1732 = vmatpush1.bf16.msra.mxu0 0
    %1733 = vmatprep.subr.bf16.mxu0 0
    %1734 = vmatpush1.bf16.msra.mxu0 0
    %1735 = vmatprep.subr.bf16.mxu0 0
    %1736 = vmatpush1.bf16.msra.mxu0 0
    %1737 = vmatprep.subr.bf16.mxu0 0
    %1738 = vmatpush1.bf16.msra.mxu0 0
    %1739 = vmatprep.subr.bf16.mxu0 0
    %1740 = vmatpush1.bf16.msra.mxu0 0
    %1741 = vmatprep.subr.bf16.mxu0 0
    %1742 = vmatpush1.bf16.msra.mxu0 0
    %1743 = vmatprep.subr.bf16.mxu0 0
    %1744 = vmatpush1.bf16.msra.mxu0 0
    %1745 = vmatprep.subr.bf16.mxu0 0
    %1746 = vmatpush1.bf16.msra.mxu0 0
    %1747 = vmatprep.subr.bf16.mxu0 0
    %1748 = vmatpush1.bf16.msra.mxu0 0
    %1749 = vmatprep.subr.bf16.mxu0 0
    %1750 = vmatpush1.bf16.msra.mxu0 0
    %1751 = vmatprep.mubr.bf16.mxu0 0
    %1752 = vmatmul.mubr.bf16.gmra.mrb[0].mxu0 %v1714
    %v1753 = vpop.f32.mrb[0].mxu0
    %v1754 = vadd.f32 0.0, %v1753
    %v1755 = vpop.f32.mrb[0].mxu0
    %v1756 = vpop.f32.mrb[0].mxu0
    %v1757 = vpop.f32.mrb[0].mxu0
    %1758 = vdwg.mxu0
    %1759 = vrot.lane.b32.xlu0 %v1539, 120
    %v1760 = vpop.permute.xlu0 %1759
    %1761 = vrot.lane.b32.xlu0 %v1539, 88
    %v1762 = vpop.permute.xlu0 %1761
    %v1764 = vsel %vm267, %v1760, 0
    %v1767 = vsel %vm267, %v1762, 0
    %1769 = vmatprep.subr.bf16.mxu0 0
    %1770 = vmatpush1.bf16.xpose.msra.mxu0 %v1767
    %1771 = vmatprep.subr.bf16.mxu0 0
    %1772 = vmatpush1.bf16.xpose.msra.mxu0 0
    %1773 = vmatprep.subr.bf16.mxu0 0
    %1774 = vmatpush1.bf16.xpose.msra.mxu0 0
    %1775 = vmatprep.subr.bf16.mxu0 0
    %1776 = vmatpush1.bf16.xpose.msra.mxu0 0
    %1777 = vmatprep.subr.bf16.mxu0 0
    %1778 = vmatpush1.bf16.xpose.msra.mxu0 0
    %1779 = vmatprep.subr.bf16.mxu0 0
    %1780 = vmatpush1.bf16.xpose.msra.mxu0 0
    %1781 = vmatprep.subr.bf16.mxu0 0
    %1782 = vmatpush1.bf16.xpose.msra.mxu0 0
    %1783 = vmatprep.subr.bf16.mxu0 0
    %1784 = vmatpush1.bf16.xpose.msra.mxu0 0
    %1785 = vmatprep.subr.bf16.mxu0 0
    %1786 = vmatpush1.bf16.xpose.msra.mxu0 0
    %1787 = vmatprep.subr.bf16.mxu0 0
    %1788 = vmatpush1.bf16.xpose.msra.mxu0 0
    %1789 = vmatprep.subr.bf16.mxu0 0
    %1790 = vmatpush1.bf16.xpose.msra.mxu0 0
    %1791 = vmatprep.subr.bf16.mxu0 0
    %1792 = vmatpush1.bf16.xpose.msra.mxu0 0
    %1793 = vmatprep.subr.bf16.mxu0 0
    %1794 = vmatpush1.bf16.xpose.msra.mxu0 0
    %1795 = vmatprep.subr.bf16.mxu0 0
    %1796 = vmatpush1.bf16.xpose.msra.mxu0 0
    %1797 = vmatprep.subr.bf16.mxu0 0
    %1798 = vmatpush1.bf16.xpose.msra.mxu0 0
    %1799 = vmatprep.subr.bf16.mxu0 0
    %1800 = vmatpush1.bf16.xpose.msra.mxu0 0
    %1801 = vmatprep.mubr.bf16.mxu0 0
    %1802 = vmatmul.mubr.bf16.gmra.mrb[0].mxu0 %v1764
    %v1803 = vpop.f32.mrb[0].mxu0
    %v1804 = vadd.f32 0.0, %v1803
    %v1805 = vpop.f32.mrb[0].mxu0
    %v1806 = vpop.f32.mrb[0].mxu0
    %v1807 = vpop.f32.mrb[0].mxu0
    %1808 = vdwg.mxu0
    %1809 = vrot.lane.b32.xlu0 %v1540, 120
    %v1810 = vpop.permute.xlu0 %1809
    %1811 = vrot.lane.b32.xlu0 %v1540, 88
    %v1812 = vpop.permute.xlu0 %1811
    %v1814 = vsel %vm267, %v1810, 0
    %v1817 = vsel %vm267, %v1812, 0
    %1819 = vmatprep.subr.bf16.mxu0 0
    %1820 = vmatpush1.bf16.xpose.msra.mxu0 %v1817
    %1821 = vmatprep.subr.bf16.mxu0 0
    %1822 = vmatpush1.bf16.xpose.msra.mxu0 0
    %1823 = vmatprep.subr.bf16.mxu0 0
    %1824 = vmatpush1.bf16.xpose.msra.mxu0 0
    %1825 = vmatprep.subr.bf16.mxu0 0
    %1826 = vmatpush1.bf16.xpose.msra.mxu0 0
    %1827 = vmatprep.subr.bf16.mxu0 0
    %1828 = vmatpush1.bf16.xpose.msra.mxu0 0
    %1829 = vmatprep.subr.bf16.mxu0 0
    %1830 = vmatpush1.bf16.xpose.msra.mxu0 0
    %1831 = vmatprep.subr.bf16.mxu0 0
    %1832 = vmatpush1.bf16.xpose.msra.mxu0 0
    %1833 = vmatprep.subr.bf16.mxu0 0
    %1834 = vmatpush1.bf16.xpose.msra.mxu0 0
    %1835 = vmatprep.subr.bf16.mxu0 0
    %1836 = vmatpush1.bf16.xpose.msra.mxu0 0
    %1837 = vmatprep.subr.bf16.mxu0 0
    %1838 = vmatpush1.bf16.xpose.msra.mxu0 0
    %1839 = vmatprep.subr.bf16.mxu0 0
    %1840 = vmatpush1.bf16.xpose.msra.mxu0 0
    %1841 = vmatprep.subr.bf16.mxu0 0
    %1842 = vmatpush1.bf16.xpose.msra.mxu0 0
    %1843 = vmatprep.subr.bf16.mxu0 0
    %1844 = vmatpush1.bf16.xpose.msra.mxu0 0
    %1845 = vmatprep.subr.bf16.mxu0 0
    %1846 = vmatpush1.bf16.xpose.msra.mxu0 0
    %1847 = vmatprep.subr.bf16.mxu0 0
    %1848 = vmatpush1.bf16.xpose.msra.mxu0 0
    %1849 = vmatprep.subr.bf16.mxu0 0
    %1850 = vmatpush1.bf16.xpose.msra.mxu0 0
    %1851 = vmatprep.mubr.bf16.mxu0 0
    %1852 = vmatmul.mubr.bf16.gmra.mrb[0].mxu0 %v1814
    %v1853 = vpop.f32.mrb[0].mxu0
    %v1854 = vadd.f32 0.0, %v1853
    %v1855 = vpop.f32.mrb[0].mxu0
    %v1856 = vpop.f32.mrb[0].mxu0
    %v1857 = vpop.f32.mrb[0].mxu0
    %1858 = vdwg.mxu0
    %v1859 = vsel %vm267, %v1804, -inf
    %1860 = vmax.xlane.f32.xlu0 %v1859
    %v1861 = vpop.xlane.xlu0 %1860
    %v1862 = vsel %vm267, %v1854, -inf
    %1863 = vmax.xlane.f32.xlu0 %v1862
    %v1864 = vpop.xlane.xlu0 %1863
    %v1865 = vsub.f32 %v1804, %v1861
    %v1866 = vsub.f32 %v1854, %v1864
    %v1867 = vmul.f32 %v1865, 1.442695
    %v1868 = vpow.pop %v1867
    %v1869 = vmul.f32 %v1866, 1.442695
    %v1870 = vpow.pop %v1869
    %v1871 = vsel %vm267, %v1868, 0.0
    %1872 = vadd.xlane.f32.xlu0 %v1871
    %v1873 = vpop.xlane.xlu0 %1872
    %v1874 = vsel %vm267, %v1870, 0.0
    %1875 = vadd.xlane.f32.xlu0 %v1874
    %v1876 = vpop.xlane.xlu0 %1875
    %v1877 = vrcp.pop %v1873
    %v1878 = vmul.f32 %v1868, %v1877
    %v1879 = vrcp.pop %v1876
    %v1880 = vmul.f32 %v1870, %v1879
    %v1881 = vpack.c.bf16 %v1878, %v1878
    %v1882 = vpack.c.bf16 %v1880, %v1880
    %1883 = vrot.lane.b32.xlu0 %v1539, 56
    %v1884 = vpop.permute.xlu0 %1883
    %v1886 = vsel %vm267, %v1881, 0
    %v1889 = vsel %vm392, %v1884, 0
    %1891 = vmatprep.subr.bf16.mxu0 0
    %1892 = vmatpush1.bf16.msra.mxu0 %v1889
    %1893 = vmatprep.subr.bf16.mxu0 0
    %1894 = vmatpush1.bf16.msra.mxu0 0
    %1895 = vmatprep.subr.bf16.mxu0 0
    %1896 = vmatpush1.bf16.msra.mxu0 0
    %1897 = vmatprep.subr.bf16.mxu0 0
    %1898 = vmatpush1.bf16.msra.mxu0 0
    %1899 = vmatprep.subr.bf16.mxu0 0
    %1900 = vmatpush1.bf16.msra.mxu0 0
    %1901 = vmatprep.subr.bf16.mxu0 0
    %1902 = vmatpush1.bf16.msra.mxu0 0
    %1903 = vmatprep.subr.bf16.mxu0 0
    %1904 = vmatpush1.bf16.msra.mxu0 0
    %1905 = vmatprep.subr.bf16.mxu0 0
    %1906 = vmatpush1.bf16.msra.mxu0 0
    %1907 = vmatprep.subr.bf16.mxu0 0
    %1908 = vmatpush1.bf16.msra.mxu0 0
    %1909 = vmatprep.subr.bf16.mxu0 0
    %1910 = vmatpush1.bf16.msra.mxu0 0
    %1911 = vmatprep.subr.bf16.mxu0 0
    %1912 = vmatpush1.bf16.msra.mxu0 0
    %1913 = vmatprep.subr.bf16.mxu0 0
    %1914 = vmatpush1.bf16.msra.mxu0 0
    %1915 = vmatprep.subr.bf16.mxu0 0
    %1916 = vmatpush1.bf16.msra.mxu0 0
    %1917 = vmatprep.subr.bf16.mxu0 0
    %1918 = vmatpush1.bf16.msra.mxu0 0
    %1919 = vmatprep.subr.bf16.mxu0 0
    %1920 = vmatpush1.bf16.msra.mxu0 0
    %1921 = vmatprep.subr.bf16.mxu0 0
    %1922 = vmatpush1.bf16.msra.mxu0 0
    %1923 = vmatprep.mubr.bf16.mxu0 0
    %1924 = vmatmul.mubr.bf16.gmra.mrb[0].mxu0 %v1886
    %v1925 = vpop.f32.mrb[0].mxu0
    %v1926 = vadd.f32 0.0, %v1925
    %v1927 = vpop.f32.mrb[0].mxu0
    %v1928 = vpop.f32.mrb[0].mxu0
    %v1929 = vpop.f32.mrb[0].mxu0
    %1930 = vdwg.mxu0
    %1931 = vrot.lane.b32.xlu0 %v1540, 56
    %v1932 = vpop.permute.xlu0 %1931
    %v1934 = vsel %vm267, %v1882, 0
    %v1937 = vsel %vm392, %v1932, 0
    %1939 = vmatprep.subr.bf16.mxu0 0
    %1940 = vmatpush1.bf16.msra.mxu0 %v1937
    %1941 = vmatprep.subr.bf16.mxu0 0
    %1942 = vmatpush1.bf16.msra.mxu0 0
    %1943 = vmatprep.subr.bf16.mxu0 0
    %1944 = vmatpush1.bf16.msra.mxu0 0
    %1945 = vmatprep.subr.bf16.mxu0 0
    %1946 = vmatpush1.bf16.msra.mxu0 0
    %1947 = vmatprep.subr.bf16.mxu0 0
    %1948 = vmatpush1.bf16.msra.mxu0 0
    %1949 = vmatprep.subr.bf16.mxu0 0
    %1950 = vmatpush1.bf16.msra.mxu0 0
    %1951 = vmatprep.subr.bf16.mxu0 0
    %1952 = vmatpush1.bf16.msra.mxu0 0
    %1953 = vmatprep.subr.bf16.mxu0 0
    %1954 = vmatpush1.bf16.msra.mxu0 0
    %1955 = vmatprep.subr.bf16.mxu0 0
    %1956 = vmatpush1.bf16.msra.mxu0 0
    %1957 = vmatprep.subr.bf16.mxu0 0
    %1958 = vmatpush1.bf16.msra.mxu0 0
    %1959 = vmatprep.subr.bf16.mxu0 0
    %1960 = vmatpush1.bf16.msra.mxu0 0
    %1961 = vmatprep.subr.bf16.mxu0 0
    %1962 = vmatpush1.bf16.msra.mxu0 0
    %1963 = vmatprep.subr.bf16.mxu0 0
    %1964 = vmatpush1.bf16.msra.mxu0 0
    %1965 = vmatprep.subr.bf16.mxu0 0
    %1966 = vmatpush1.bf16.msra.mxu0 0
    %1967 = vmatprep.subr.bf16.mxu0 0
    %1968 = vmatpush1.bf16.msra.mxu0 0
    %1969 = vmatprep.subr.bf16.mxu0 0
    %1970 = vmatpush1.bf16.msra.mxu0 0
    %1971 = vmatprep.mubr.bf16.mxu0 0
    %1972 = vmatmul.mubr.bf16.gmra.mrb[0].mxu0 %v1934
    %v1973 = vpop.f32.mrb[0].mxu0
    %v1974 = vadd.f32 0.0, %v1973
    %v1975 = vpop.f32.mrb[0].mxu0
    %v1976 = vpop.f32.mrb[0].mxu0
    %v1977 = vpop.f32.mrb[0].mxu0
    %1978 = vdwg.mxu0
    %1979 = vrot.lane.b32.xlu0 %v1539, 112
    %v1980 = vpop.permute.xlu0 %1979
    %1981 = vrot.lane.b32.xlu0 %v1539, 80
    %v1982 = vpop.permute.xlu0 %1981
    %v1984 = vsel %vm267, %v1980, 0
    %v1987 = vsel %vm267, %v1982, 0
    %1989 = vmatprep.subr.bf16.mxu0 0
    %1990 = vmatpush1.bf16.xpose.msra.mxu0 %v1987
    %1991 = vmatprep.subr.bf16.mxu0 0
    %1992 = vmatpush1.bf16.xpose.msra.mxu0 0
    %1993 = vmatprep.subr.bf16.mxu0 0
    %1994 = vmatpush1.bf16.xpose.msra.mxu0 0
    %1995 = vmatprep.subr.bf16.mxu0 0
    %1996 = vmatpush1.bf16.xpose.msra.mxu0 0
    %1997 = vmatprep.subr.bf16.mxu0 0
    %1998 = vmatpush1.bf16.xpose.msra.mxu0 0
    %1999 = vmatprep.subr.bf16.mxu0 0
    %2000 = vmatpush1.bf16.xpose.msra.mxu0 0
    %2001 = vmatprep.subr.bf16.mxu0 0
    %2002 = vmatpush1.bf16.xpose.msra.mxu0 0
    %2003 = vmatprep.subr.bf16.mxu0 0
    %2004 = vmatpush1.bf16.xpose.msra.mxu0 0
    %2005 = vmatprep.subr.bf16.mxu0 0
    %2006 = vmatpush1.bf16.xpose.msra.mxu0 0
    %2007 = vmatprep.subr.bf16.mxu0 0
    %2008 = vmatpush1.bf16.xpose.msra.mxu0 0
    %2009 = vmatprep.subr.bf16.mxu0 0
    %2010 = vmatpush1.bf16.xpose.msra.mxu0 0
    %2011 = vmatprep.subr.bf16.mxu0 0
    %2012 = vmatpush1.bf16.xpose.msra.mxu0 0
    %2013 = vmatprep.subr.bf16.mxu0 0
    %2014 = vmatpush1.bf16.xpose.msra.mxu0 0
    %2015 = vmatprep.subr.bf16.mxu0 0
    %2016 = vmatpush1.bf16.xpose.msra.mxu0 0
    %2017 = vmatprep.subr.bf16.mxu0 0
    %2018 = vmatpush1.bf16.xpose.msra.mxu0 0
    %2019 = vmatprep.subr.bf16.mxu0 0
    %2020 = vmatpush1.bf16.xpose.msra.mxu0 0
    %2021 = vmatprep.mubr.bf16.mxu0 0
    %2022 = vmatmul.mubr.bf16.gmra.mrb[0].mxu0 %v1984
    %v2023 = vpop.f32.mrb[0].mxu0
    %v2024 = vadd.f32 0.0, %v2023
    %v2025 = vpop.f32.mrb[0].mxu0
    %v2026 = vpop.f32.mrb[0].mxu0
    %v2027 = vpop.f32.mrb[0].mxu0
    %2028 = vdwg.mxu0
    %2029 = vrot.lane.b32.xlu0 %v1540, 112
    %v2030 = vpop.permute.xlu0 %2029
    %2031 = vrot.lane.b32.xlu0 %v1540, 80
    %v2032 = vpop.permute.xlu0 %2031
    %v2034 = vsel %vm267, %v2030, 0
    %v2037 = vsel %vm267, %v2032, 0
    %2039 = vmatprep.subr.bf16.mxu0 0
    %2040 = vmatpush1.bf16.xpose.msra.mxu0 %v2037
    %2041 = vmatprep.subr.bf16.mxu0 0
    %2042 = vmatpush1.bf16.xpose.msra.mxu0 0
    %2043 = vmatprep.subr.bf16.mxu0 0
    %2044 = vmatpush1.bf16.xpose.msra.mxu0 0
    %2045 = vmatprep.subr.bf16.mxu0 0
    %2046 = vmatpush1.bf16.xpose.msra.mxu0 0
    %2047 = vmatprep.subr.bf16.mxu0 0
    %2048 = vmatpush1.bf16.xpose.msra.mxu0 0
    %2049 = vmatprep.subr.bf16.mxu0 0
    %2050 = vmatpush1.bf16.xpose.msra.mxu0 0
    %2051 = vmatprep.subr.bf16.mxu0 0
    %2052 = vmatpush1.bf16.xpose.msra.mxu0 0
    %2053 = vmatprep.subr.bf16.mxu0 0
    %2054 = vmatpush1.bf16.xpose.msra.mxu0 0
    %2055 = vmatprep.subr.bf16.mxu0 0
    %2056 = vmatpush1.bf16.xpose.msra.mxu0 0
    %2057 = vmatprep.subr.bf16.mxu0 0
    %2058 = vmatpush1.bf16.xpose.msra.mxu0 0
    %2059 = vmatprep.subr.bf16.mxu0 0
    %2060 = vmatpush1.bf16.xpose.msra.mxu0 0
    %2061 = vmatprep.subr.bf16.mxu0 0
    %2062 = vmatpush1.bf16.xpose.msra.mxu0 0
    %2063 = vmatprep.subr.bf16.mxu0 0
    %2064 = vmatpush1.bf16.xpose.msra.mxu0 0
    %2065 = vmatprep.subr.bf16.mxu0 0
    %2066 = vmatpush1.bf16.xpose.msra.mxu0 0
    %2067 = vmatprep.subr.bf16.mxu0 0
    %2068 = vmatpush1.bf16.xpose.msra.mxu0 0
    %2069 = vmatprep.subr.bf16.mxu0 0
    %2070 = vmatpush1.bf16.xpose.msra.mxu0 0
    %2071 = vmatprep.mubr.bf16.mxu0 0
    %2072 = vmatmul.mubr.bf16.gmra.mrb[0].mxu0 %v2034
    %v2073 = vpop.f32.mrb[0].mxu0
    %v2074 = vadd.f32 0.0, %v2073
    %v2075 = vpop.f32.mrb[0].mxu0
    %v2076 = vpop.f32.mrb[0].mxu0
    %v2077 = vpop.f32.mrb[0].mxu0
    %2078 = vdwg.mxu0
    %v2079 = vsel %vm267, %v2024, -inf
    %2080 = vmax.xlane.f32.xlu0 %v2079
    %v2081 = vpop.xlane.xlu0 %2080
    %v2082 = vsel %vm267, %v2074, -inf
    %2083 = vmax.xlane.f32.xlu0 %v2082
    %v2084 = vpop.xlane.xlu0 %2083
    %v2085 = vsub.f32 %v2024, %v2081
    %v2086 = vsub.f32 %v2074, %v2084
    %v2087 = vmul.f32 %v2085, 1.442695
    %v2088 = vpow.pop %v2087
    %v2089 = vmul.f32 %v2086, 1.442695
    %v2090 = vpow.pop %v2089
    %v2091 = vsel %vm267, %v2088, 0.0
    %2092 = vadd.xlane.f32.xlu0 %v2091
    %v2093 = vpop.xlane.xlu0 %2092
    %v2094 = vsel %vm267, %v2090, 0.0
    %2095 = vadd.xlane.f32.xlu0 %v2094
    %v2096 = vpop.xlane.xlu0 %2095
    %v2097 = vrcp.pop %v2093
    %v2098 = vmul.f32 %v2088, %v2097
    %v2099 = vrcp.pop %v2096
    %v2100 = vmul.f32 %v2090, %v2099
    %v2101 = vpack.c.bf16 %v2098, %v2098
    %v2102 = vpack.c.bf16 %v2100, %v2100
    %2103 = vrot.lane.b32.xlu0 %v1539, 48
    %v2104 = vpop.permute.xlu0 %2103
    %v2106 = vsel %vm267, %v2101, 0
    %v2109 = vsel %vm392, %v2104, 0
    %2111 = vmatprep.subr.bf16.mxu0 0
    %2112 = vmatpush1.bf16.msra.mxu0 %v2109
    %2113 = vmatprep.subr.bf16.mxu0 0
    %2114 = vmatpush1.bf16.msra.mxu0 0
    %2115 = vmatprep.subr.bf16.mxu0 0
    %2116 = vmatpush1.bf16.msra.mxu0 0
    %2117 = vmatprep.subr.bf16.mxu0 0
    %2118 = vmatpush1.bf16.msra.mxu0 0
    %2119 = vmatprep.subr.bf16.mxu0 0
    %2120 = vmatpush1.bf16.msra.mxu0 0
    %2121 = vmatprep.subr.bf16.mxu0 0
    %2122 = vmatpush1.bf16.msra.mxu0 0
    %2123 = vmatprep.subr.bf16.mxu0 0
    %2124 = vmatpush1.bf16.msra.mxu0 0
    %2125 = vmatprep.subr.bf16.mxu0 0
    %2126 = vmatpush1.bf16.msra.mxu0 0
    %2127 = vmatprep.subr.bf16.mxu0 0
    %2128 = vmatpush1.bf16.msra.mxu0 0
    %2129 = vmatprep.subr.bf16.mxu0 0
    %2130 = vmatpush1.bf16.msra.mxu0 0
    %2131 = vmatprep.subr.bf16.mxu0 0
    %2132 = vmatpush1.bf16.msra.mxu0 0
    %2133 = vmatprep.subr.bf16.mxu0 0
    %2134 = vmatpush1.bf16.msra.mxu0 0
    %2135 = vmatprep.subr.bf16.mxu0 0
    %2136 = vmatpush1.bf16.msra.mxu0 0
    %2137 = vmatprep.subr.bf16.mxu0 0
    %2138 = vmatpush1.bf16.msra.mxu0 0
    %2139 = vmatprep.subr.bf16.mxu0 0
    %2140 = vmatpush1.bf16.msra.mxu0 0
    %2141 = vmatprep.subr.bf16.mxu0 0
    %2142 = vmatpush1.bf16.msra.mxu0 0
    %2143 = vmatprep.mubr.bf16.mxu0 0
    %2144 = vmatmul.mubr.bf16.gmra.mrb[0].mxu0 %v2106
    %v2145 = vpop.f32.mrb[0].mxu0
    %v2146 = vadd.f32 0.0, %v2145
    %v2147 = vpop.f32.mrb[0].mxu0
    %v2148 = vpop.f32.mrb[0].mxu0
    %v2149 = vpop.f32.mrb[0].mxu0
    %2150 = vdwg.mxu0
    %2151 = vrot.lane.b32.xlu0 %v1540, 48
    %v2152 = vpop.permute.xlu0 %2151
    %v2154 = vsel %vm267, %v2102, 0
    %v2157 = vsel %vm392, %v2152, 0
    %2159 = vmatprep.subr.bf16.mxu0 0
    %2160 = vmatpush1.bf16.msra.mxu0 %v2157
    %2161 = vmatprep.subr.bf16.mxu0 0
    %2162 = vmatpush1.bf16.msra.mxu0 0
    %2163 = vmatprep.subr.bf16.mxu0 0
    %2164 = vmatpush1.bf16.msra.mxu0 0
    %2165 = vmatprep.subr.bf16.mxu0 0
    %2166 = vmatpush1.bf16.msra.mxu0 0
    %2167 = vmatprep.subr.bf16.mxu0 0
    %2168 = vmatpush1.bf16.msra.mxu0 0
    %2169 = vmatprep.subr.bf16.mxu0 0
    %2170 = vmatpush1.bf16.msra.mxu0 0
    %2171 = vmatprep.subr.bf16.mxu0 0
    %2172 = vmatpush1.bf16.msra.mxu0 0
    %2173 = vmatprep.subr.bf16.mxu0 0
    %2174 = vmatpush1.bf16.msra.mxu0 0
    %2175 = vmatprep.subr.bf16.mxu0 0
    %2176 = vmatpush1.bf16.msra.mxu0 0
    %2177 = vmatprep.subr.bf16.mxu0 0
    %2178 = vmatpush1.bf16.msra.mxu0 0
    %2179 = vmatprep.subr.bf16.mxu0 0
    %2180 = vmatpush1.bf16.msra.mxu0 0
    %2181 = vmatprep.subr.bf16.mxu0 0
    %2182 = vmatpush1.bf16.msra.mxu0 0
    %2183 = vmatprep.subr.bf16.mxu0 0
    %2184 = vmatpush1.bf16.msra.mxu0 0
    %2185 = vmatprep.subr.bf16.mxu0 0
    %2186 = vmatpush1.bf16.msra.mxu0 0
    %2187 = vmatprep.subr.bf16.mxu0 0
    %2188 = vmatpush1.bf16.msra.mxu0 0
    %2189 = vmatprep.subr.bf16.mxu0 0
    %2190 = vmatpush1.bf16.msra.mxu0 0
    %2191 = vmatprep.mubr.bf16.mxu0 0
    %2192 = vmatmul.mubr.bf16.gmra.mrb[0].mxu0 %v2154
    %v2193 = vpop.f32.mrb[0].mxu0
    %v2194 = vadd.f32 0.0, %v2193
    %v2195 = vpop.f32.mrb[0].mxu0
    %v2196 = vpop.f32.mrb[0].mxu0
    %v2197 = vpop.f32.mrb[0].mxu0
    %2198 = vdwg.mxu0
    %2199 = vrot.lane.b32.xlu0 %v1539, 104
    %v2200 = vpop.permute.xlu0 %2199
    %2201 = vrot.lane.b32.xlu0 %v1539, 72
    %v2202 = vpop.permute.xlu0 %2201
    %v2204 = vsel %vm267, %v2200, 0
    %v2207 = vsel %vm267, %v2202, 0
    %2209 = vmatprep.subr.bf16.mxu0 0
    %2210 = vmatpush1.bf16.xpose.msra.mxu0 %v2207
    %2211 = vmatprep.subr.bf16.mxu0 0
    %2212 = vmatpush1.bf16.xpose.msra.mxu0 0
    %2213 = vmatprep.subr.bf16.mxu0 0
    %2214 = vmatpush1.bf16.xpose.msra.mxu0 0
    %2215 = vmatprep.subr.bf16.mxu0 0
    %2216 = vmatpush1.bf16.xpose.msra.mxu0 0
    %2217 = vmatprep.subr.bf16.mxu0 0
    %2218 = vmatpush1.bf16.xpose.msra.mxu0 0
    %2219 = vmatprep.subr.bf16.mxu0 0
    %2220 = vmatpush1.bf16.xpose.msra.mxu0 0
    %2221 = vmatprep.subr.bf16.mxu0 0
    %2222 = vmatpush1.bf16.xpose.msra.mxu0 0
    %2223 = vmatprep.subr.bf16.mxu0 0
    %2224 = vmatpush1.bf16.xpose.msra.mxu0 0
    %2225 = vmatprep.subr.bf16.mxu0 0
    %2226 = vmatpush1.bf16.xpose.msra.mxu0 0
    %2227 = vmatprep.subr.bf16.mxu0 0
    %2228 = vmatpush1.bf16.xpose.msra.mxu0 0
    %2229 = vmatprep.subr.bf16.mxu0 0
    %2230 = vmatpush1.bf16.xpose.msra.mxu0 0
    %2231 = vmatprep.subr.bf16.mxu0 0
    %2232 = vmatpush1.bf16.xpose.msra.mxu0 0
    %2233 = vmatprep.subr.bf16.mxu0 0
    %2234 = vmatpush1.bf16.xpose.msra.mxu0 0
    %2235 = vmatprep.subr.bf16.mxu0 0
    %2236 = vmatpush1.bf16.xpose.msra.mxu0 0
    %2237 = vmatprep.subr.bf16.mxu0 0
    %2238 = vmatpush1.bf16.xpose.msra.mxu0 0
    %2239 = vmatprep.subr.bf16.mxu0 0
    %2240 = vmatpush1.bf16.xpose.msra.mxu0 0
    %2241 = vmatprep.mubr.bf16.mxu0 0
    %2242 = vmatmul.mubr.bf16.gmra.mrb[0].mxu0 %v2204
    %v2243 = vpop.f32.mrb[0].mxu0
    %v2244 = vadd.f32 0.0, %v2243
    %v2245 = vpop.f32.mrb[0].mxu0
    %v2246 = vpop.f32.mrb[0].mxu0
    %v2247 = vpop.f32.mrb[0].mxu0
    %2248 = vdwg.mxu0
    %2249 = vrot.lane.b32.xlu0 %v1540, 104
    %v2250 = vpop.permute.xlu0 %2249
    %2251 = vrot.lane.b32.xlu0 %v1540, 72
    %v2252 = vpop.permute.xlu0 %2251
    %v2254 = vsel %vm267, %v2250, 0
    %v2257 = vsel %vm267, %v2252, 0
    %2259 = vmatprep.subr.bf16.mxu0 0
    %2260 = vmatpush1.bf16.xpose.msra.mxu0 %v2257
    %2261 = vmatprep.subr.bf16.mxu0 0
    %2262 = vmatpush1.bf16.xpose.msra.mxu0 0
    %2263 = vmatprep.subr.bf16.mxu0 0
    %2264 = vmatpush1.bf16.xpose.msra.mxu0 0
    %2265 = vmatprep.subr.bf16.mxu0 0
    %2266 = vmatpush1.bf16.xpose.msra.mxu0 0
    %2267 = vmatprep.subr.bf16.mxu0 0
    %2268 = vmatpush1.bf16.xpose.msra.mxu0 0
    %2269 = vmatprep.subr.bf16.mxu0 0
    %2270 = vmatpush1.bf16.xpose.msra.mxu0 0
    %2271 = vmatprep.subr.bf16.mxu0 0
    %2272 = vmatpush1.bf16.xpose.msra.mxu0 0
    %2273 = vmatprep.subr.bf16.mxu0 0
    %2274 = vmatpush1.bf16.xpose.msra.mxu0 0
    %2275 = vmatprep.subr.bf16.mxu0 0
    %2276 = vmatpush1.bf16.xpose.msra.mxu0 0
    %2277 = vmatprep.subr.bf16.mxu0 0
    %2278 = vmatpush1.bf16.xpose.msra.mxu0 0
    %2279 = vmatprep.subr.bf16.mxu0 0
    %2280 = vmatpush1.bf16.xpose.msra.mxu0 0
    %2281 = vmatprep.subr.bf16.mxu0 0
    %2282 = vmatpush1.bf16.xpose.msra.mxu0 0
    %2283 = vmatprep.subr.bf16.mxu0 0
    %2284 = vmatpush1.bf16.xpose.msra.mxu0 0
    %2285 = vmatprep.subr.bf16.mxu0 0
    %2286 = vmatpush1.bf16.xpose.msra.mxu0 0
    %2287 = vmatprep.subr.bf16.mxu0 0
    %2288 = vmatpush1.bf16.xpose.msra.mxu0 0
    %2289 = vmatprep.subr.bf16.mxu0 0
    %2290 = vmatpush1.bf16.xpose.msra.mxu0 0
    %2291 = vmatprep.mubr.bf16.mxu0 0
    %2292 = vmatmul.mubr.bf16.gmra.mrb[0].mxu0 %v2254
    %v2293 = vpop.f32.mrb[0].mxu0
    %v2294 = vadd.f32 0.0, %v2293
    %v2295 = vpop.f32.mrb[0].mxu0
    %v2296 = vpop.f32.mrb[0].mxu0
    %v2297 = vpop.f32.mrb[0].mxu0
    %2298 = vdwg.mxu0
    %v2299 = vsel %vm267, %v2244, -inf
    %2300 = vmax.xlane.f32.xlu0 %v2299
    %v2301 = vpop.xlane.xlu0 %2300
    %v2302 = vsel %vm267, %v2294, -inf
    %2303 = vmax.xlane.f32.xlu0 %v2302
    %v2304 = vpop.xlane.xlu0 %2303
    %v2305 = vsub.f32 %v2244, %v2301
    %v2306 = vsub.f32 %v2294, %v2304
    %v2307 = vmul.f32 %v2305, 1.442695
    %v2308 = vpow.pop %v2307
    %v2309 = vmul.f32 %v2306, 1.442695
    %v2310 = vpow.pop %v2309
    %v2311 = vsel %vm267, %v2308, 0.0
    %2312 = vadd.xlane.f32.xlu0 %v2311
    %v2313 = vpop.xlane.xlu0 %2312
    %v2314 = vsel %vm267, %v2310, 0.0
    %2315 = vadd.xlane.f32.xlu0 %v2314
    %v2316 = vpop.xlane.xlu0 %2315
    %v2317 = vrcp.pop %v2313
    %v2318 = vmul.f32 %v2308, %v2317
    %v2319 = vrcp.pop %v2316
    %v2320 = vmul.f32 %v2310, %v2319
    %v2321 = vpack.c.bf16 %v2318, %v2318
    %v2322 = vpack.c.bf16 %v2320, %v2320
    %2323 = vrot.lane.b32.xlu0 %v1539, 40
    %v2324 = vpop.permute.xlu0 %2323
    %v2326 = vsel %vm267, %v2321, 0
    %v2329 = vsel %vm392, %v2324, 0
    %2331 = vmatprep.subr.bf16.mxu0 0
    %2332 = vmatpush1.bf16.msra.mxu0 %v2329
    %2333 = vmatprep.subr.bf16.mxu0 0
    %2334 = vmatpush1.bf16.msra.mxu0 0
    %2335 = vmatprep.subr.bf16.mxu0 0
    %2336 = vmatpush1.bf16.msra.mxu0 0
    %2337 = vmatprep.subr.bf16.mxu0 0
    %2338 = vmatpush1.bf16.msra.mxu0 0
    %2339 = vmatprep.subr.bf16.mxu0 0
    %2340 = vmatpush1.bf16.msra.mxu0 0
    %2341 = vmatprep.subr.bf16.mxu0 0
    %2342 = vmatpush1.bf16.msra.mxu0 0
    %2343 = vmatprep.subr.bf16.mxu0 0
    %2344 = vmatpush1.bf16.msra.mxu0 0
    %2345 = vmatprep.subr.bf16.mxu0 0
    %2346 = vmatpush1.bf16.msra.mxu0 0
    %2347 = vmatprep.subr.bf16.mxu0 0
    %2348 = vmatpush1.bf16.msra.mxu0 0
    %2349 = vmatprep.subr.bf16.mxu0 0
    %2350 = vmatpush1.bf16.msra.mxu0 0
    %2351 = vmatprep.subr.bf16.mxu0 0
    %2352 = vmatpush1.bf16.msra.mxu0 0
    %2353 = vmatprep.subr.bf16.mxu0 0
    %2354 = vmatpush1.bf16.msra.mxu0 0
    %2355 = vmatprep.subr.bf16.mxu0 0
    %2356 = vmatpush1.bf16.msra.mxu0 0
    %2357 = vmatprep.subr.bf16.mxu0 0
    %2358 = vmatpush1.bf16.msra.mxu0 0
    %2359 = vmatprep.subr.bf16.mxu0 0
    %2360 = vmatpush1.bf16.msra.mxu0 0
    %2361 = vmatprep.subr.bf16.mxu0 0
    %2362 = vmatpush1.bf16.msra.mxu0 0
    %2363 = vmatprep.mubr.bf16.mxu0 0
    %2364 = vmatmul.mubr.bf16.gmra.mrb[0].mxu0 %v2326
    %v2365 = vpop.f32.mrb[0].mxu0
    %v2366 = vadd.f32 0.0, %v2365
    %v2367 = vpop.f32.mrb[0].mxu0
    %v2368 = vpop.f32.mrb[0].mxu0
    %v2369 = vpop.f32.mrb[0].mxu0
    %2370 = vdwg.mxu0
    %2371 = vrot.lane.b32.xlu0 %v1540, 40
    %v2372 = vpop.permute.xlu0 %2371
    %v2374 = vsel %vm267, %v2322, 0
    %v2377 = vsel %vm392, %v2372, 0
    %2379 = vmatprep.subr.bf16.mxu0 0
    %2380 = vmatpush1.bf16.msra.mxu0 %v2377
    %2381 = vmatprep.subr.bf16.mxu0 0
    %2382 = vmatpush1.bf16.msra.mxu0 0
    %2383 = vmatprep.subr.bf16.mxu0 0
    %2384 = vmatpush1.bf16.msra.mxu0 0
    %2385 = vmatprep.subr.bf16.mxu0 0
    %2386 = vmatpush1.bf16.msra.mxu0 0
    %2387 = vmatprep.subr.bf16.mxu0 0
    %2388 = vmatpush1.bf16.msra.mxu0 0
    %2389 = vmatprep.subr.bf16.mxu0 0
    %2390 = vmatpush1.bf16.msra.mxu0 0
    %2391 = vmatprep.subr.bf16.mxu0 0
    %2392 = vmatpush1.bf16.msra.mxu0 0
    %2393 = vmatprep.subr.bf16.mxu0 0
    %2394 = vmatpush1.bf16.msra.mxu0 0
    %2395 = vmatprep.subr.bf16.mxu0 0
    %2396 = vmatpush1.bf16.msra.mxu0 0
    %2397 = vmatprep.subr.bf16.mxu0 0
    %2398 = vmatpush1.bf16.msra.mxu0 0
    %2399 = vmatprep.subr.bf16.mxu0 0
    %2400 = vmatpush1.bf16.msra.mxu0 0
    %2401 = vmatprep.subr.bf16.mxu0 0
    %2402 = vmatpush1.bf16.msra.mxu0 0
    %2403 = vmatprep.subr.bf16.mxu0 0
    %2404 = vmatpush1.bf16.msra.mxu0 0
    %2405 = vmatprep.subr.bf16.mxu0 0
    %2406 = vmatpush1.bf16.msra.mxu0 0
    %2407 = vmatprep.subr.bf16.mxu0 0
    %2408 = vmatpush1.bf16.msra.mxu0 0
    %2409 = vmatprep.subr.bf16.mxu0 0
    %2410 = vmatpush1.bf16.msra.mxu0 0
    %2411 = vmatprep.mubr.bf16.mxu0 0
    %2412 = vmatmul.mubr.bf16.gmra.mrb[0].mxu0 %v2374
    %v2413 = vpop.f32.mrb[0].mxu0
    %v2414 = vadd.f32 0.0, %v2413
    %v2415 = vpop.f32.mrb[0].mxu0
    %v2416 = vpop.f32.mrb[0].mxu0
    %v2417 = vpop.f32.mrb[0].mxu0
    %2418 = vdwg.mxu0
    %2421 = vrot.lane.b32.xlu0 %v1926, 8
    %v2422 = vpop.permute.xlu0 %2421
    %2423 = vrot.lane.b32.xlu0 %v1974, 8
    %v2424 = vpop.permute.xlu0 %2423
    %2429 = vrot.lane.b32.xlu0 %v2146, 16
    %v2430 = vpop.permute.xlu0 %2429
    %2431 = vrot.lane.b32.xlu0 %v2194, 16
    %v2432 = vpop.permute.xlu0 %2431
    %2437 = vrot.lane.b32.xlu0 %v2366, 24
    %v2438 = vpop.permute.xlu0 %2437
    %2439 = vrot.lane.b32.xlu0 %v2414, 24
    %v2440 = vpop.permute.xlu0 %2439
    %v2443 = vsel %vm267, %v1706, %v2422
    %v2444 = vsel %vm267, %v1754, %v2424
    %v2445 = vsel %vm1170, %v2443, %v2430
    %v2446 = vsel %vm1170, %v2444, %v2432
    %v2447 = vsel %vm1173, %v2445, %v2438
    %v2448 = vsel %vm1173, %v2446, %v2440
    %v2449 = vpack.c.bf16 %v2448, %v2447
    %s2450 = scalar_lea.vmem [#allocation2], 16
    %v2451 = vld [vmem:[%s2450] sm:$0xf]
    %v2452 = vld [vmem:[%s2450 + $0x4] sm:$0xf]
    %v2453 = vld [vmem:[%s2450 + $0x8] sm:$0xf]
    %v2454 = vld [vmem:[%s2450 + $0xc] sm:$0xf]
    %v2455 = vlaneseq
    %v2456 = vshrl.u32 %v2455, 7
    %v2457 = vsub.s32 1, %v2456
    %v2458 = vrot.slane %v1472, %v2457
    %v2463 = vunpack.c.l.b16 %v2451
    %v2464 = vunpack.c.l.b16 %v2452
    %v2465 = vunpack.c.l.b16 %v2453
    %v2466 = vunpack.c.l.b16 %v2454
    %v2467 = vpack.c.b16 %v2464, %v2463
    %v2468 = vpack.c.b16 %v2466, %v2465
    %v2472 = vsel %vm217, %v2449, 0
    %2474 = vmatprep.subr.bf16.mxu0 0
    %2475 = vmatpush1.bf16.msra.mxu0 %v2467
    %2476 = vmatprep.subr.bf16.mxu0 0
    %2477 = vmatpush1.bf16.msra.mxu0 %v2468
    %2478 = vmatprep.subr.bf16.mxu0 0
    %2479 = vmatpush1.bf16.msra.mxu0 0
    %2480 = vmatprep.subr.bf16.mxu0 0
    %2481 = vmatpush1.bf16.msra.mxu0 0
    %2482 = vmatprep.subr.bf16.mxu0 0
    %2483 = vmatpush1.bf16.msra.mxu0 0
    %2484 = vmatprep.subr.bf16.mxu0 0
    %2485 = vmatpush1.bf16.msra.mxu0 0
    %2486 = vmatprep.subr.bf16.mxu0 0
    %2487 = vmatpush1.bf16.msra.mxu0 0
    %2488 = vmatprep.subr.bf16.mxu0 0
    %2489 = vmatpush1.bf16.msra.mxu0 0
    %2490 = vmatprep.subr.bf16.mxu0 0
    %2491 = vmatpush1.bf16.msra.mxu0 0
    %2492 = vmatprep.subr.bf16.mxu0 0
    %2493 = vmatpush1.bf16.msra.mxu0 0
    %2494 = vmatprep.subr.bf16.mxu0 0
    %2495 = vmatpush1.bf16.msra.mxu0 0
    %2496 = vmatprep.subr.bf16.mxu0 0
    %2497 = vmatpush1.bf16.msra.mxu0 0
    %2498 = vmatprep.subr.bf16.mxu0 0
    %2499 = vmatpush1.bf16.msra.mxu0 0
    %2500 = vmatprep.subr.bf16.mxu0 0
    %2501 = vmatpush1.bf16.msra.mxu0 0
    %2502 = vmatprep.subr.bf16.mxu0 0
    %2503 = vmatpush1.bf16.msra.mxu0 0
    %2504 = vmatprep.subr.bf16.mxu0 0
    %2505 = vmatpush1.bf16.msra.mxu0 0
    %2506 = vmatprep.mubr.bf16.mxu0 0
    %2507 = vmatmul.mubr.bf16.gmra.mrb[0].mxu0 %v2472
    %v2508 = vpop.f32.mrb[0].mxu0
    %v2509 = vadd.f32 %v2458, %v2508
    %v2510 = vpop.f32.mrb[0].mxu0
    %v2511 = vpop.f32.mrb[0].mxu0
    %v2512 = vadd.f32 %v2458, %v2511
    %v2513 = vpop.f32.mrb[0].mxu0
    %2514 = vdwg.mxu0
    %v2515 = vadd.f32 %v1469, %v2509
    %v2516 = vadd.f32 %v1470, %v2512
    %v2517 = vsel %vm217, %v2515, 0.0
    %2518 = vadd.xlane.f32.xlu0 %v2517
    %v2519 = vpop.xlane.xlu0 %2518
    %v2520 = vsel %vm217, %v2516, 0.0
    %2521 = vadd.xlane.f32.xlu0 %v2520
    %v2522 = vpop.xlane.xlu0 %2521
    %v2523 = vmul.f32 %v2519, %v1249
    %v2524 = vmul.f32 %v2522, %v1249
    %v2525 = vsub.f32 %v2515, %v2523
    %v2526 = vsub.f32 %v2516, %v2524
    %v2527 = vmul.f32 %v2525, %v2525
    %v2528 = vmul.f32 %v2526, %v2526
    %v2529 = vsel %vm217, %v2527, 0.0
    %2530 = vadd.xlane.f32.xlu0 %v2529
    %v2531 = vpop.xlane.xlu0 %2530
    %v2532 = vsel %vm217, %v2528, 0.0
    %2533 = vadd.xlane.f32.xlu0 %v2532
    %v2534 = vpop.xlane.xlu0 %2533
    %v2535 = vmul.f32 %v2531, %v1249
    %v2536 = vmul.f32 %v2534, %v1249
    %v2537 = vadd.f32 %v2535, 1e-05
    %v2538 = vadd.f32 %v2536, 1e-05
    %v2539 = vrsqrt.pop %v2537
    %v2540 = vrsqrt.pop %v2538
    %v2541 = vmul.f32 %v2525, %v2539
    %v2542 = vmul.f32 %v2526, %v2540
    %v2543 = vlaneseq
    %v2544 = vshrl.u32 %v2543, 7
    %v2545 = vsub.s32 2, %v2544
    %v2546 = vrot.slane %v1472, %v2545
    %v2547 = vmul.f32 %v2541, %v2546
    %v2548 = vmul.f32 %v2542, %v2546
    %v2549 = vlaneseq
    %v2550 = vshrl.u32 %v2549, 7
    %v2551 = vsub.s32 3, %v2550
    %v2552 = vrot.slane %v1472, %v2551
    %v2553 = vadd.f32 %v2547, %v2552
    %v2554 = vadd.f32 %v2548, %v2552
    %v2555 = vpack.c.bf16 %v2554, %v2553
    %s2556 = scalar_lea.vmem [#allocation5], 16
    %v2557 = vld [vmem:[%s2556] sm:$0xf]
    %v2558 = vld [vmem:[%s2556 + $0x4] sm:$0xf]
    %v2559 = vld [vmem:[%s2556 + $0x8] sm:$0xf]
    %v2560 = vld [vmem:[%s2556 + $0xc] sm:$0xf]
    %v2561 = vlaneseq
    %v2562 = vshrl.u32 %v2561, 7
    %v2563 = vsub.s32 4, %v2562
    %v2564 = vrot.slane %v1472, %v2563
    %v2569 = vunpack.c.l.b16 %v2557
    %v2570 = vunpack.c.l.b16 %v2558
    %v2571 = vunpack.c.l.b16 %v2559
    %v2572 = vunpack.c.l.b16 %v2560
    %v2573 = vpack.c.b16 %v2570, %v2569
    %v2574 = vpack.c.b16 %v2572, %v2571
    %v2578 = vsel %vm217, %v2555, 0
    %2580 = vmatprep.subr.bf16.mxu0 0
    %2581 = vmatpush1.bf16.msra.mxu0 %v2573
    %2582 = vmatprep.subr.bf16.mxu0 0
    %2583 = vmatpush1.bf16.msra.mxu0 %v2574
    %2584 = vmatprep.subr.bf16.mxu0 0
    %2585 = vmatpush1.bf16.msra.mxu0 0
    %2586 = vmatprep.subr.bf16.mxu0 0
    %2587 = vmatpush1.bf16.msra.mxu0 0
    %2588 = vmatprep.subr.bf16.mxu0 0
    %2589 = vmatpush1.bf16.msra.mxu0 0
    %2590 = vmatprep.subr.bf16.mxu0 0
    %2591 = vmatpush1.bf16.msra.mxu0 0
    %2592 = vmatprep.subr.bf16.mxu0 0
    %2593 = vmatpush1.bf16.msra.mxu0 0
    %2594 = vmatprep.subr.bf16.mxu0 0
    %2595 = vmatpush1.bf16.msra.mxu0 0
    %2596 = vmatprep.subr.bf16.mxu0 0
    %2597 = vmatpush1.bf16.msra.mxu0 0
    %2598 = vmatprep.subr.bf16.mxu0 0
    %2599 = vmatpush1.bf16.msra.mxu0 0
    %2600 = vmatprep.subr.bf16.mxu0 0
    %2601 = vmatpush1.bf16.msra.mxu0 0
    %2602 = vmatprep.subr.bf16.mxu0 0
    %2603 = vmatpush1.bf16.msra.mxu0 0
    %2604 = vmatprep.subr.bf16.mxu0 0
    %2605 = vmatpush1.bf16.msra.mxu0 0
    %2606 = vmatprep.subr.bf16.mxu0 0
    %2607 = vmatpush1.bf16.msra.mxu0 0
    %2608 = vmatprep.subr.bf16.mxu0 0
    %2609 = vmatpush1.bf16.msra.mxu0 0
    %2610 = vmatprep.subr.bf16.mxu0 0
    %2611 = vmatpush1.bf16.msra.mxu0 0
    %2612 = vmatprep.mubr.bf16.mxu0 0
    %2613 = vmatmul.mubr.bf16.gmra.mrb[0].mxu0 %v2578
    %v2614 = vpop.f32.mrb[0].mxu0
    %v2615 = vadd.f32 %v2564, %v2614
    %v2616 = vpop.f32.mrb[0].mxu0
    %v2617 = vpop.f32.mrb[0].mxu0
    %v2618 = vadd.f32 %v2564, %v2617
    %v2619 = vpop.f32.mrb[0].mxu0
    %2620 = vdwg.mxu0
    %v2621 = vmax.f32 %v2615, 0.0
    %v2622 = vmax.f32 %v2618, 0.0
    %v2623 = vpack.c.bf16 %v2622, %v2621
    %s2624 = scalar_lea.vmem %s5, 32
    %v2625 = vld [vmem:[%s2624] sm:$0xf]
    %v2626 = vld [vmem:[%s2624 + $0x4] sm:$0xf]
    %v2627 = vld [vmem:[%s2624 + $0x8] sm:$0xf]
    %v2628 = vld [vmem:[%s2624 + $0xc] sm:$0xf]
    %v2629 = vld [vmem:[%s2624 + $0x10] sm:$0xf]
    %v2630 = vld [vmem:[%s2624 + $0x14] sm:$0xf]
    %v2631 = vld [vmem:[%s2624 + $0x18] sm:$0xf]
    %v2632 = vld [vmem:[%s2624 + $0x1c] sm:$0xf]
    %v2633 = vlaneseq
    %v2634 = vshrl.u32 %v2633, 7
    %v2635 = vsub.s32 5, %v2634
    %v2636 = vrot.slane %v1472, %v2635
    %v2645 = vunpack.c.l.b16 %v2625
    %v2646 = vunpack.c.l.b16 %v2626
    %v2647 = vunpack.c.l.b16 %v2627
    %v2648 = vunpack.c.l.b16 %v2628
    %v2649 = vunpack.c.l.b16 %v2629
    %v2650 = vunpack.c.l.b16 %v2630
    %v2651 = vunpack.c.l.b16 %v2631
    %v2652 = vunpack.c.l.b16 %v2632
    %v2653 = vpack.c.b16 %v2646, %v2645
    %v2654 = vpack.c.b16 %v2648, %v2647
    %v2655 = vpack.c.b16 %v2650, %v2649
    %v2656 = vpack.c.b16 %v2652, %v2651
    %v2662 = vsel %vm1386, %v2623, 0
    %2664 = vmatprep.subr.bf16.mxu0 0
    %2665 = vmatpush1.bf16.msra.mxu0 %v2653
    %2666 = vmatprep.subr.bf16.mxu0 0
    %2667 = vmatpush1.bf16.msra.mxu0 %v2654
    %2668 = vmatprep.subr.bf16.mxu0 0
    %2669 = vmatpush1.bf16.msra.mxu0 %v2655
    %2670 = vmatprep.subr.bf16.mxu0 0
    %2671 = vmatpush1.bf16.msra.mxu0 %v2656
    %2672 = vmatprep.subr.bf16.mxu0 0
    %2673 = vmatpush1.bf16.msra.mxu0 0
    %2674 = vmatprep.subr.bf16.mxu0 0
    %2675 = vmatpush1.bf16.msra.mxu0 0
    %2676 = vmatprep.subr.bf16.mxu0 0
    %2677 = vmatpush1.bf16.msra.mxu0 0
    %2678 = vmatprep.subr.bf16.mxu0 0
    %2679 = vmatpush1.bf16.msra.mxu0 0
    %2680 = vmatprep.subr.bf16.mxu0 0
    %2681 = vmatpush1.bf16.msra.mxu0 0
    %2682 = vmatprep.subr.bf16.mxu0 0
    %2683 = vmatpush1.bf16.msra.mxu0 0
    %2684 = vmatprep.subr.bf16.mxu0 0
    %2685 = vmatpush1.bf16.msra.mxu0 0
    %2686 = vmatprep.subr.bf16.mxu0 0
    %2687 = vmatpush1.bf16.msra.mxu0 0
    %2688 = vmatprep.subr.bf16.mxu0 0
    %2689 = vmatpush1.bf16.msra.mxu0 0
    %2690 = vmatprep.subr.bf16.mxu0 0
    %2691 = vmatpush1.bf16.msra.mxu0 0
    %2692 = vmatprep.subr.bf16.mxu0 0
    %2693 = vmatpush1.bf16.msra.mxu0 0
    %2694 = vmatprep.subr.bf16.mxu0 0
    %2695 = vmatpush1.bf16.msra.mxu0 0
    %2696 = vmatprep.mubr.bf16.mxu0 0
    %2697 = vmatmul.mubr.bf16.gmra.mrb[0].mxu0 %v2662
    %v2698 = vpop.f32.mrb[0].mxu0
    %v2699 = vadd.f32 %v2636, %v2698
    %v2700 = vpop.f32.mrb[0].mxu0
    %v2701 = vpop.f32.mrb[0].mxu0
    %v2702 = vadd.f32 %v2636, %v2701
    %v2703 = vpop.f32.mrb[0].mxu0
    %2704 = vdwg.mxu0
    %v2705 = vadd.f32 %v2553, %v2699
    %v2706 = vadd.f32 %v2554, %v2702
    %v2707 = vsel %vm217, %v2705, 0.0
    %2708 = vadd.xlane.f32.xlu0 %v2707
    %v2709 = vpop.xlane.xlu0 %2708
    %v2710 = vsel %vm217, %v2706, 0.0
    %2711 = vadd.xlane.f32.xlu0 %v2710
    %v2712 = vpop.xlane.xlu0 %2711
    %v2713 = vmul.f32 %v2709, %v1249
    %v2714 = vmul.f32 %v2712, %v1249
    %v2715 = vsub.f32 %v2705, %v2713
    %v2716 = vsub.f32 %v2706, %v2714
    %v2717 = vmul.f32 %v2715, %v2715
    %v2718 = vmul.f32 %v2716, %v2716
    %v2719 = vsel %vm217, %v2717, 0.0
    %2720 = vadd.xlane.f32.xlu0 %v2719
    %v2721 = vpop.xlane.xlu0 %2720
    %v2722 = vsel %vm217, %v2718, 0.0
    %2723 = vadd.xlane.f32.xlu0 %v2722
    %v2724 = vpop.xlane.xlu0 %2723
    %v2725 = vmul.f32 %v2721, %v1249
    %v2726 = vmul.f32 %v2724, %v1249
    %v2727 = vadd.f32 %v2725, 1e-05
    %v2728 = vadd.f32 %v2726, 1e-05
    %v2729 = vrsqrt.pop %v2727
    %v2730 = vrsqrt.pop %v2728
    %v2731 = vmul.f32 %v2715, %v2729
    %v2732 = vmul.f32 %v2716, %v2730
    %v2733 = vlaneseq
    %v2734 = vshrl.u32 %v2733, 7
    %v2735 = vsub.s32 6, %v2734
    %v2736 = vrot.slane %v1472, %v2735
    %v2737 = vmul.f32 %v2731, %v2736
    %v2738 = vmul.f32 %v2732, %v2736
    %v2739 = vlaneseq
    %v2740 = vshrl.u32 %v2739, 7
    %v2741 = vsub.s32 7, %v2740
    %v2742 = vrot.slane %v1472, %v2741
    %v2743 = vadd.f32 %v2737, %v2742
    %v2744 = vadd.f32 %v2738, %v2742
    %v2745 = vld [vmem:[%s8] sm:$0xff]
    %v2746 = vsel %vm217, %v2743, 0.0
    %2747 = vadd.xlane.f32.xlu0 %v2746
    %v2748 = vpop.xlane.xlu0 %2747
    %v2749 = vsel %vm217, %v2744, 0.0
    %2750 = vadd.xlane.f32.xlu0 %v2749
    %v2751 = vpop.xlane.xlu0 %2750
    %v2752 = vmul.f32 %v2748, %v1249
    %v2753 = vmul.f32 %v2751, %v1249
    %v2754 = vsub.f32 %v2743, %v2752
    %v2755 = vsub.f32 %v2744, %v2753
    %v2756 = vmul.f32 %v2754, %v2754
    %v2757 = vmul.f32 %v2755, %v2755
    %v2758 = vsel %vm217, %v2756, 0.0
    %2759 = vadd.xlane.f32.xlu0 %v2758
    %v2760 = vpop.xlane.xlu0 %2759
    %v2761 = vsel %vm217, %v2757, 0.0
    %2762 = vadd.xlane.f32.xlu0 %v2761
    %v2763 = vpop.xlane.xlu0 %2762
    %v2764 = vmul.f32 %v2760, %v1249
    %v2765 = vmul.f32 %v2763, %v1249
    %v2766 = vadd.f32 %v2764, 1e-05
    %v2767 = vadd.f32 %v2765, 1e-05
    %v2768 = vrsqrt.pop %v2766
    %v2769 = vrsqrt.pop %v2767
    %v2770 = vmul.f32 %v2754, %v2768
    %v2771 = vmul.f32 %v2755, %v2769
    %v2772 = vlaneseq
    %v2773 = vshrl.u32 %v2772, 7
    %v2774 = vsub.s32 0, %v2773
    %v2775 = vrot.slane %v2745, %v2774
    %v2776 = vmul.f32 %v2770, %v2775
    %v2777 = vmul.f32 %v2771, %v2775
    %v2778 = vlaneseq
    %v2779 = vshrl.u32 %v2778, 7
    %v2780 = vsub.s32 1, %v2779
    %v2781 = vrot.slane %v2745, %v2780
    %v2782 = vadd.f32 %v2776, %v2781
    %v2783 = vadd.f32 %v2777, %v2781
    %v2784 = vpack.c.bf16 %v2783, %v2782
    %v2785 = vld [vmem:[#allocation7] sm:$0xf]
    %v2786 = vld [vmem:[#allocation7 + $0x4] sm:$0xf]
    %v2787 = vld [vmem:[#allocation7 + $0x8] sm:$0xf]
    %v2788 = vld [vmem:[#allocation7 + $0xc] sm:$0xf]
    %v2789 = vlaneseq
    %v2790 = vshrl.u32 %v2789, 7
    %v2791 = vsub.s32 2, %v2790
    %v2792 = vrot.slane %v2745, %v2791
    %v2797 = vunpack.c.l.b16 %v2785
    %v2798 = vunpack.c.l.b16 %v2786
    %v2799 = vunpack.c.l.b16 %v2787
    %v2800 = vunpack.c.l.b16 %v2788
    %v2801 = vpack.c.b16 %v2798, %v2797
    %v2802 = vpack.c.b16 %v2800, %v2799
    %v2806 = vsel %vm217, %v2784, 0
    %2808 = vmatprep.subr.bf16.mxu0 0
    %2809 = vmatpush1.bf16.msra.mxu0 %v2801
    %2810 = vmatprep.subr.bf16.mxu0 0
    %2811 = vmatpush1.bf16.msra.mxu0 %v2802
    %2812 = vmatprep.subr.bf16.mxu0 0
    %2813 = vmatpush1.bf16.msra.mxu0 0
    %2814 = vmatprep.subr.bf16.mxu0 0
    %2815 = vmatpush1.bf16.msra.mxu0 0
    %2816 = vmatprep.subr.bf16.mxu0 0
    %2817 = vmatpush1.bf16.msra.mxu0 0
    %2818 = vmatprep.subr.bf16.mxu0 0
    %2819 = vmatpush1.bf16.msra.mxu0 0
    %2820 = vmatprep.subr.bf16.mxu0 0
    %2821 = vmatpush1.bf16.msra.mxu0 0
    %2822 = vmatprep.subr.bf16.mxu0 0
    %2823 = vmatpush1.bf16.msra.mxu0 0
    %2824 = vmatprep.subr.bf16.mxu0 0
    %2825 = vmatpush1.bf16.msra.mxu0 0
    %2826 = vmatprep.subr.bf16.mxu0 0
    %2827 = vmatpush1.bf16.msra.mxu0 0
    %2828 = vmatprep.subr.bf16.mxu0 0
    %2829 = vmatpush1.bf16.msra.mxu0 0
    %2830 = vmatprep.subr.bf16.mxu0 0
    %2831 = vmatpush1.bf16.msra.mxu0 0
    %2832 = vmatprep.subr.bf16.mxu0 0
    %2833 = vmatpush1.bf16.msra.mxu0 0
    %2834 = vmatprep.subr.bf16.mxu0 0
    %2835 = vmatpush1.bf16.msra.mxu0 0
    %2836 = vmatprep.subr.bf16.mxu0 0
    %2837 = vmatpush1.bf16.msra.mxu0 0
    %2838 = vmatprep.subr.bf16.mxu0 0
    %2839 = vmatpush1.bf16.msra.mxu0 0
    %2840 = vmatprep.mubr.bf16.mxu0 0
    %2841 = vmatmul.mubr.bf16.gmra.mrb[0].mxu0 %v2806
    %v2842 = vpop.f32.mrb[0].mxu0
    %v2843 = vadd.f32 %v2792, %v2842
    %v2844 = vpop.f32.mrb[0].mxu0
    %v2845 = vpop.f32.mrb[0].mxu0
    %v2846 = vadd.f32 %v2792, %v2845
    %v2847 = vpop.f32.mrb[0].mxu0
    %2848 = vdwg.mxu0
    %2849 = vst [vmem:[#allocation8] sm:$0xff] %v2843
    %2850 = vst [vmem:[#allocation8 + $0x8] sm:$0xff] %v2846
    // Predicated region
    $region50: #{_lambda_.1} parent=1 // pred_check
      _
    $region51: #{_lambda_.1} parent=1 // pred_check_branch
      %2852 = sbr.rel (0) target = $region53
    $region52: #{_lambda_.1} parent=1 // pred_region
      %s2854 = ssub.s32 256, 256
      %2855 = vsyncadd [#allocation4], %s2854
      %s2856 = sshll.u32 [#allocation8], 4
      %s2857 = int_to_ptr.vmem [resolvable:$true] %s2856
      %2862 = dma.vmem_to_hbm [thread:$0]  %s2857, 256, %s9, [#allocation4], 128, 128, 8
    $region53: #{_lambda_.1} parent=1 // pred_fallthru
      _
    // Predicated region
    $region54: #{_lambda_.1} parent=1 // pred_check
      _
    $region55: #{_lambda_.1} parent=1 // pred_check_branch
      %2864 = sbr.rel (0) target = $region57
    $region56: #{_lambda_.1} parent=1 // pred_region
      %2865 = dma.done [#allocation4], 256
    $region57: #{_lambda_.1} parent=1 // pred_fallthru
      _
    %2866 = vsyncpa [#allocation3], 1
    %2867 = vsyncpa [#allocation6], 1
    %2868 = vsyncpa [#allocation4], 1

</llo_original>
